<compile_context>
chip_gen: v5e
topology: v5e:2x2
jax: 0.10.0
libtpu: 0.0.40
codegen_flags: <defaults>
</compile_context>

<pallas_src>
import jax
import jax.numpy as jnp
from jax.experimental import pallas as pl
from jax.experimental.pallas import tpu as pltpu

KH = KW = 7
PAD = 3
COUT_PAD = 128  # lane-dense output width


def conv_bias_relu_kernel(xkw_ref, w_ref, b_ref, o_ref):
    # xkw_ref: (H+6, W, KW*Cin)   KW/Cin-packed, spatially padded input (VMEM)
    # w_ref  : (KH, KW*Cin, 128)  packed weights, Cout zero-padded to 128
    # b_ref  : (1, 128)           bias, zero-padded to 128
    # o_ref  : (H*W, 128)         lane-dense output
    Hp, W, KWC = xkw_ref.shape
    H = Hp - (KH - 1)
    CoutP = o_ref.shape[-1]

    acc = jnp.zeros((H * W, CoutP), jnp.float32)
    # 7 shifted-window matmuls (K = KW*Cin = 112).  The slice offset is only
    # along the major axis, so each tap is just an address change + one MXU
    # matmul accumulated in f32.
    for kh in range(KH):
        patch = xkw_ref[kh:kh + H, :, :].reshape(H * W, KWC)
        acc = acc + jnp.dot(patch, w_ref[kh],
                            preferred_element_type=jnp.float32)

    bias_row = b_ref[...] + 1.0           # bias + (v1 + 1), hoisted once
    acc = jnp.maximum(acc + bias_row, 0.0)  # relu
    o_ref[...] = acc.astype(o_ref.dtype)


def conv_add_relu(x_nchw, w_oihw, bias):
    """x_nchw: (1, Cin, H, W) f32; w_oihw: (Cout, Cin, KH, KW); bias: (Cout,)."""
    N, Cin, H, W = x_nchw.shape
    Cout = w_oihw.shape[0]
    assert N == 1, "kernel written for batch 1 (matches the reference module)"

    # Layout glue in plain JAX: NCHW -> NHWC, OIHW -> HWIO.
    x_nhwc = jnp.transpose(x_nchw, (0, 2, 3, 1))
    w_hwio = jnp.transpose(w_oihw, (2, 3, 1, 0))          # (KH, KW, Cin, Cout)

    # Fold (KW, Cin) into the contraction dim and zero-pad Cout -> 128.
    w_packed = w_hwio.reshape(KH, KW * Cin, Cout)
    w_packed = jnp.pad(w_packed, ((0, 0), (0, 0), (0, COUT_PAD - Cout)))
    b_packed = jnp.pad(bias, (0, COUT_PAD - Cout)).reshape(1, COUT_PAD)

    # Zero-pad spatial dims (padding=3) and pack the KW taps into the channel
    # axis (wrapper-side partial im2col):
    #   xkw[h, w, kw*Cin + ci] = xp[h, w + kw, ci]
    xp = jnp.pad(x_nhwc, ((0, 0), (PAD, PAD), (PAD, PAD), (0, 0)))[0]  # (Hp, Wp, Cin)
    xkw = jnp.concatenate([xp[:, kw:kw + W, :] for kw in range(KW)],
                          axis=-1)                          # (H+6, W, KW*Cin)

    out2d = pl.pallas_call(
        conv_bias_relu_kernel,
        out_shape=jax.ShapeDtypeStruct((H * W, COUT_PAD), x_nchw.dtype),
        in_specs=[
            pl.BlockSpec(xkw.shape, lambda: (0, 0, 0)),
            pl.BlockSpec(w_packed.shape, lambda: (0, 0, 0)),
            pl.BlockSpec(b_packed.shape, lambda: (0, 0)),
        ],
        out_specs=pl.BlockSpec((H * W, COUT_PAD), lambda: (0, 0)),
        # Small footprint (~2 MiB total) — no need to request large scoped VMEM.
        compiler_params=pltpu.CompilerParams(vmem_limit_bytes=16 << 20),
    )(xkw, w_packed, b_packed)

    # (H*W, 128) -> (1, H, W, Cout) -> NCHW.
    out_nhwc = out2d.reshape(1, H, W, COUT_PAD)[..., :Cout]
    return jnp.transpose(out_nhwc, (0, 3, 1, 2))


def reference(x_nchw, w_oihw, bias):
    x_nhwc = jnp.transpose(x_nchw, (0, 2, 3, 1))
    w_hwio = jnp.transpose(w_oihw, (2, 3, 1, 0))
    y = jax.lax.conv_general_dilated(
        x_nhwc, w_hwio, window_strides=(1, 1),
        padding=((PAD, PAD), (PAD, PAD)),
        dimension_numbers=("NHWC", "HWIO", "NHWC"),
    )
    y = y + bias.reshape(1, 1, 1, -1) + 1.0
    y = jnp.maximum(y, 0.0)
    return jnp.transpose(y, (0, 3, 1, 2))


if __name__ == "__main__":
    key = jax.random.PRNGKey(0)
    kx, kw_key, kb_key = jax.random.split(key, 3)

    # Small shapes consistent with the module: batch=1, 16 channels (fixed by
    # the conv), spatial 32x32.
    N, C, H, W = 1, 16, 32, 32
    x = jax.random.normal(kx, (N, C, H, W), dtype=jnp.float32)

    # Deterministic parameter init (Conv2d(16, 16, 7) shapes).
    fan_in = C * KH * KW
    bound = 1.0 / (fan_in ** 0.5)
    w = jax.random.uniform(kw_key, (16, 16, KH, KW), jnp.float32, -bound, bound)
    b = jax.random.uniform(kb_key, (16,), jnp.float32, -bound, bound)

    out = jax.block_until_ready(conv_add_relu(x, w, b))
    ref = jax.block_until_ready(reference(x, w, b))

    assert out.shape == (N, 16, H, W)
    assert jnp.allclose(out, ref, atol=1e-4, rtol=1e-4)

    print("KERNEL_OK")
</pallas_src>

<mosaic_0001>
module attributes {stable_mosaic.version = 11 : i64} {
  func.func @conv_bias_relu_kernel(%arg0: memref<38x32x112xf32, #tpu.memory_space<vmem>>, %arg1: memref<7x112x128xf32, #tpu.memory_space<vmem>>, %arg2: memref<1x128xf32, #tpu.memory_space<vmem>>, %arg3: memref<1024x128xf32, #tpu.memory_space<vmem>>) attributes {dimension_semantics = [], scalar_prefetch = 0 : i64, scratch_operands = 0 : i64, tpu.core_type = #tpu.core_type<tc>} {
    %cst = arith.constant 0.000000e+00 : f32
    %0 = vector.broadcast %cst : f32 to vector<1024x128xf32>
    %c0 = arith.constant 0 : index
    %c0_0 = arith.constant 0 : index
    %c0_1 = arith.constant 0 : index
    %1 = vector.load %arg0[%c0, %c0_0, %c0_1] : memref<38x32x112xf32, #tpu.memory_space<vmem>>, vector<32x32x112xf32>
    %2 = vector.shape_cast %1 : vector<32x32x112xf32> to vector<1024x112xf32>
    %c0_2 = arith.constant 0 : index
    %c0_3 = arith.constant 0 : index
    %c0_4 = arith.constant 0 : index
    %3 = vector.load %arg1[%c0_2, %c0_3, %c0_4] : memref<7x112x128xf32, #tpu.memory_space<vmem>>, vector<1x112x128xf32>
    %4 = vector.shape_cast %3 : vector<1x112x128xf32> to vector<112x128xf32>
    %cst_5 = arith.constant dense<0.000000e+00> : vector<1024x128xf32>
    %5 = tpu.matmul %2, %4, %cst_5 {dimension_numbers = #tpu.dot_dimension_numbers<[1], [0], [0], [1], [0, 0, 1, 1], [], []>} : vector<1024x112xf32>, vector<112x128xf32>, vector<1024x128xf32> -> vector<1024x128xf32>
    %6 = arith.addf %0, %5 : vector<1024x128xf32>
    %c1 = arith.constant 1 : index
    %c0_6 = arith.constant 0 : index
    %c0_7 = arith.constant 0 : index
    %7 = vector.load %arg0[%c1, %c0_6, %c0_7] : memref<38x32x112xf32, #tpu.memory_space<vmem>>, vector<32x32x112xf32>
    %8 = vector.shape_cast %7 : vector<32x32x112xf32> to vector<1024x112xf32>
    %c1_8 = arith.constant 1 : index
    %c0_9 = arith.constant 0 : index
    %c0_10 = arith.constant 0 : index
    %9 = vector.load %arg1[%c1_8, %c0_9, %c0_10] : memref<7x112x128xf32, #tpu.memory_space<vmem>>, vector<1x112x128xf32>
    %10 = vector.shape_cast %9 : vector<1x112x128xf32> to vector<112x128xf32>
    %cst_11 = arith.constant dense<0.000000e+00> : vector<1024x128xf32>
    %11 = tpu.matmul %8, %10, %cst_11 {dimension_numbers = #tpu.dot_dimension_numbers<[1], [0], [0], [1], [0, 0, 1, 1], [], []>} : vector<1024x112xf32>, vector<112x128xf32>, vector<1024x128xf32> -> vector<1024x128xf32>
    %12 = arith.addf %6, %11 : vector<1024x128xf32>
    %c2 = arith.constant 2 : index
    %c0_12 = arith.constant 0 : index
    %c0_13 = arith.constant 0 : index
    %13 = vector.load %arg0[%c2, %c0_12, %c0_13] : memref<38x32x112xf32, #tpu.memory_space<vmem>>, vector<32x32x112xf32>
    %14 = vector.shape_cast %13 : vector<32x32x112xf32> to vector<1024x112xf32>
    %c2_14 = arith.constant 2 : index
    %c0_15 = arith.constant 0 : index
    %c0_16 = arith.constant 0 : index
    %15 = vector.load %arg1[%c2_14, %c0_15, %c0_16] : memref<7x112x128xf32, #tpu.memory_space<vmem>>, vector<1x112x128xf32>
    %16 = vector.shape_cast %15 : vector<1x112x128xf32> to vector<112x128xf32>
    %cst_17 = arith.constant dense<0.000000e+00> : vector<1024x128xf32>
    %17 = tpu.matmul %14, %16, %cst_17 {dimension_numbers = #tpu.dot_dimension_numbers<[1], [0], [0], [1], [0, 0, 1, 1], [], []>} : vector<1024x112xf32>, vector<112x128xf32>, vector<1024x128xf32> -> vector<1024x128xf32>
    %18 = arith.addf %12, %17 : vector<1024x128xf32>
    %c3 = arith.constant 3 : index
    %c0_18 = arith.constant 0 : index
    %c0_19 = arith.constant 0 : index
    %19 = vector.load %arg0[%c3, %c0_18, %c0_19] : memref<38x32x112xf32, #tpu.memory_space<vmem>>, vector<32x32x112xf32>
    %20 = vector.shape_cast %19 : vector<32x32x112xf32> to vector<1024x112xf32>
    %c3_20 = arith.constant 3 : index
    %c0_21 = arith.constant 0 : index
    %c0_22 = arith.constant 0 : index
    %21 = vector.load %arg1[%c3_20, %c0_21, %c0_22] : memref<7x112x128xf32, #tpu.memory_space<vmem>>, vector<1x112x128xf32>
    %22 = vector.shape_cast %21 : vector<1x112x128xf32> to vector<112x128xf32>
    %cst_23 = arith.constant dense<0.000000e+00> : vector<1024x128xf32>
    %23 = tpu.matmul %20, %22, %cst_23 {dimension_numbers = #tpu.dot_dimension_numbers<[1], [0], [0], [1], [0, 0, 1, 1], [], []>} : vector<1024x112xf32>, vector<112x128xf32>, vector<1024x128xf32> -> vector<1024x128xf32>
    %24 = arith.addf %18, %23 : vector<1024x128xf32>
    %c4 = arith.constant 4 : index
    %c0_24 = arith.constant 0 : index
    %c0_25 = arith.constant 0 : index
    %25 = vector.load %arg0[%c4, %c0_24, %c0_25] : memref<38x32x112xf32, #tpu.memory_space<vmem>>, vector<32x32x112xf32>
    %26 = vector.shape_cast %25 : vector<32x32x112xf32> to vector<1024x112xf32>
    %c4_26 = arith.constant 4 : index
    %c0_27 = arith.constant 0 : index
    %c0_28 = arith.constant 0 : index
    %27 = vector.load %arg1[%c4_26, %c0_27, %c0_28] : memref<7x112x128xf32, #tpu.memory_space<vmem>>, vector<1x112x128xf32>
    %28 = vector.shape_cast %27 : vector<1x112x128xf32> to vector<112x128xf32>
    %cst_29 = arith.constant dense<0.000000e+00> : vector<1024x128xf32>
    %29 = tpu.matmul %26, %28, %cst_29 {dimension_numbers = #tpu.dot_dimension_numbers<[1], [0], [0], [1], [0, 0, 1, 1], [], []>} : vector<1024x112xf32>, vector<112x128xf32>, vector<1024x128xf32> -> vector<1024x128xf32>
    %30 = arith.addf %24, %29 : vector<1024x128xf32>
    %c5 = arith.constant 5 : index
    %c0_30 = arith.constant 0 : index
    %c0_31 = arith.constant 0 : index
    %31 = vector.load %arg0[%c5, %c0_30, %c0_31] : memref<38x32x112xf32, #tpu.memory_space<vmem>>, vector<32x32x112xf32>
    %32 = vector.shape_cast %31 : vector<32x32x112xf32> to vector<1024x112xf32>
    %c5_32 = arith.constant 5 : index
    %c0_33 = arith.constant 0 : index
    %c0_34 = arith.constant 0 : index
    %33 = vector.load %arg1[%c5_32, %c0_33, %c0_34] : memref<7x112x128xf32, #tpu.memory_space<vmem>>, vector<1x112x128xf32>
    %34 = vector.shape_cast %33 : vector<1x112x128xf32> to vector<112x128xf32>
    %cst_35 = arith.constant dense<0.000000e+00> : vector<1024x128xf32>
    %35 = tpu.matmul %32, %34, %cst_35 {dimension_numbers = #tpu.dot_dimension_numbers<[1], [0], [0], [1], [0, 0, 1, 1], [], []>} : vector<1024x112xf32>, vector<112x128xf32>, vector<1024x128xf32> -> vector<1024x128xf32>
    %36 = arith.addf %30, %35 : vector<1024x128xf32>
    %c6 = arith.constant 6 : index
    %c0_36 = arith.constant 0 : index
    %c0_37 = arith.constant 0 : index
    %37 = vector.load %arg0[%c6, %c0_36, %c0_37] : memref<38x32x112xf32, #tpu.memory_space<vmem>>, vector<32x32x112xf32>
    %38 = vector.shape_cast %37 : vector<32x32x112xf32> to vector<1024x112xf32>
    %c6_38 = arith.constant 6 : index
    %c0_39 = arith.constant 0 : index
    %c0_40 = arith.constant 0 : index
    %39 = vector.load %arg1[%c6_38, %c0_39, %c0_40] : memref<7x112x128xf32, #tpu.memory_space<vmem>>, vector<1x112x128xf32>
    %40 = vector.shape_cast %39 : vector<1x112x128xf32> to vector<112x128xf32>
    %cst_41 = arith.constant dense<0.000000e+00> : vector<1024x128xf32>
    %41 = tpu.matmul %38, %40, %cst_41 {dimension_numbers = #tpu.dot_dimension_numbers<[1], [0], [0], [1], [0, 0, 1, 1], [], []>} : vector<1024x112xf32>, vector<112x128xf32>, vector<1024x128xf32> -> vector<1024x128xf32>
    %42 = arith.addf %36, %41 : vector<1024x128xf32>
    %c0_42 = arith.constant 0 : index
    %c0_43 = arith.constant 0 : index
    %43 = vector.load %arg2[%c0_42, %c0_43] : memref<1x128xf32, #tpu.memory_space<vmem>>, vector<1x128xf32>
    %cst_44 = arith.constant 1.000000e+00 : f32
    %44 = vector.broadcast %cst_44 : f32 to vector<1x128xf32>
    %45 = arith.addf %43, %44 : vector<1x128xf32>
    %46 = vector.broadcast %45 : vector<1x128xf32> to vector<1024x128xf32>
    %47 = arith.addf %42, %46 : vector<1024x128xf32>
    %cst_45 = arith.constant 0.000000e+00 : f32
    %48 = vector.broadcast %cst_45 : f32 to vector<1024x128xf32>
    %49 = arith.maximumf %47, %48 : vector<1024x128xf32>
    %c0_46 = arith.constant 0 : index
    %c0_47 = arith.constant 0 : index
    %50 = vector.load %arg3[%c0_46, %c0_47] : memref<1024x128xf32, #tpu.memory_space<vmem>>, vector<1024x128xf32>
    tpu.vector_store %arg3[%c0_46, %c0_47], %49 {strides = array<i32>} : memref<1024x128xf32, #tpu.memory_space<vmem>>, vector<1024x128xf32>,
    return
  }
}

</mosaic_0001>

<llo_original>
// kernel: tpu_custom_call.1
$region0: #{tpu_custom_call.1}
  #allocation0 [shape = 'u32[]', space=smem, size = 0x4, offset = 0x4, fixed_abs, tag = 'smem constant byte address 0x4 - core index']
  #allocation1 [shape = 'u32[72,128]{1,0:T(1,128)}', space=vmem, size = 0x9000, scoped, tag = 'internal scratch']
  %s0 = inlined_call_operand.hbm [shape: f32[38,32,112], index: 0, kind: input, shape index: {}]
  %s1 = inlined_call_operand.hbm [shape: f32[7,112,128], index: 1, kind: input, shape index: {}]
  %s2 = inlined_call_operand.vmem [shape: f32[1,128], index: 2, kind: input, shape index: {}]
  %s3 = inlined_call_operand.hbm [shape: f32[1024,128], index: 3, kind: output, shape index: {}]
  %s4 = sld [smem:[#allocation0]]
  $region30: #{tpu_custom_call.1} parent=0
    _
  %s6 = ssub.s32 1, %s4
  %s7 = scalar_select 0, %s6, %s4
  $region1: #{tpu_custom_call.1} parent=0
    #allocation2 [shape = 'u8[622592]{0}', space=vmem, size = 0x98000, scoped, tag = 'input window, operand 0, single buffered']
    #allocation3 [shape = 's32[1]{0}', space=sflag, size = 0x4, scoped, tag = 'scoped memory for tpu_custom_call.1']
    #allocation4 [shape = 's32[1]{0}', space=sflag, size = 0x4, scoped, tag = 'scoped memory for tpu_custom_call.1']
    #allocation5 [shape = 'u8[401408]{0}', space=vmem, size = 0x62000, scoped, tag = 'input window, operand 1, single buffered']
    #allocation6 [shape = 's32[1]{0}', space=sflag, size = 0x4, scoped, tag = 'scoped memory for tpu_custom_call.1']
    #allocation7 [shape = 'u8[524288]{0}', space=vmem, size = 0x80000, scoped, tag = 'output window, operand 0, single buffered']
    %8 = vsyncpa [#allocation3], 0
    %9 = vsyncpa [#allocation6], 0
    %10 = vsyncpa [#allocation4], 0
    // Predicated region
    $region2: #{tpu_custom_call.1} parent=1 // pred_check
      _
    $region3: #{tpu_custom_call.1} parent=1 // pred_check_branch
      %12 = sbr.rel (0) target = $region5
    $region4: #{tpu_custom_call.1} parent=1 // pred_region
      %14 = vsyncadd [#allocation3], 0
      %s15 = sshll.u32 %s0, 4
      %s16 = int_to_ptr.hbm [resolvable:$true] %s15
      %s17 = sshll.u32 [#allocation2], 4
      %s18 = int_to_ptr.vmem [resolvable:$true] %s17
      %23 = dma.hbm_to_vmem [thread:$0]  %s16, 19456, %s18, [#allocation3], 128, 128, 8
    $region5: #{tpu_custom_call.1} parent=1 // pred_fallthru
      _
    // Predicated region
    $region6: #{tpu_custom_call.1} parent=1 // pred_check
      _
    $region7: #{tpu_custom_call.1} parent=1 // pred_check_branch
      %25 = sbr.rel (0) target = $region9
    $region8: #{tpu_custom_call.1} parent=1 // pred_region
      %27 = vsyncadd [#allocation6], 0
      %s28 = sshll.u32 %s1, 4
      %s29 = int_to_ptr.hbm [resolvable:$true] %s28
      %s30 = sshll.u32 [#allocation5], 4
      %s31 = int_to_ptr.vmem [resolvable:$true] %s30
      %36 = dma.hbm_to_vmem [thread:$0]  %s29, 12544, %s31, [#allocation6], 128, 128, 8
    $region9: #{tpu_custom_call.1} parent=1 // pred_fallthru
      _
    // Predicated region
    $region10: #{tpu_custom_call.1} parent=1 // pred_check
      _
    $region11: #{tpu_custom_call.1} parent=1 // pred_check_branch
      %38 = sbr.rel (0) target = $region13
    $region12: #{tpu_custom_call.1} parent=1 // pred_region
      _
    $region13: #{tpu_custom_call.1} parent=1 // pred_fallthru
      _
    // Predicated region
    $region14: #{tpu_custom_call.1} parent=1 // pred_check
      _
    $region15: #{tpu_custom_call.1} parent=1 // pred_check_branch
      %40 = sbr.rel (0) target = $region17
    $region16: #{tpu_custom_call.1} parent=1 // pred_region
      %42 = dma.done [#allocation3], 19456
    $region17: #{tpu_custom_call.1} parent=1 // pred_fallthru
      _
    // Predicated region
    $region18: #{tpu_custom_call.1} parent=1 // pred_check
      _
    $region19: #{tpu_custom_call.1} parent=1 // pred_check_branch
      %44 = sbr.rel (0) target = $region21
    $region20: #{tpu_custom_call.1} parent=1 // pred_region
      %46 = dma.done [#allocation6], 12544
    $region21: #{tpu_custom_call.1} parent=1 // pred_fallthru
      _
    %v47 = vld [vmem:[#allocation2] sm:$0xff]
    %v48 = vld [vmem:[#allocation2 + $0x8] sm:$0xff]
    %v49 = vld [vmem:[#allocation2 + $0x10] sm:$0xff]
    %v50 = vld [vmem:[#allocation2 + $0x18] sm:$0xff]
    %v51 = vld [vmem:[#allocation2 + $0x20] sm:$0xff]
    %v52 = vld [vmem:[#allocation2 + $0x28] sm:$0xff]
    %v53 = vld [vmem:[#allocation2 + $0x30] sm:$0xff]
    %v54 = vld [vmem:[#allocation2 + $0x38] sm:$0xff]
    %v55 = vld [vmem:[#allocation2 + $0x40] sm:$0xff]
    %v56 = vld [vmem:[#allocation2 + $0x48] sm:$0xff]
    %v57 = vld [vmem:[#allocation2 + $0x50] sm:$0xff]
    %v58 = vld [vmem:[#allocation2 + $0x58] sm:$0xff]
    %v59 = vld [vmem:[#allocation2 + $0x60] sm:$0xff]
    %v60 = vld [vmem:[#allocation2 + $0x68] sm:$0xff]
    %v61 = vld [vmem:[#allocation2 + $0x70] sm:$0xff]
    %v62 = vld [vmem:[#allocation2 + $0x78] sm:$0xff]
    %v63 = vld [vmem:[#allocation2 + $0x80] sm:$0xff]
    %v64 = vld [vmem:[#allocation2 + $0x88] sm:$0xff]
    %v65 = vld [vmem:[#allocation2 + $0x90] sm:$0xff]
    %v66 = vld [vmem:[#allocation2 + $0x98] sm:$0xff]
    %v67 = vld [vmem:[#allocation2 + $0xa0] sm:$0xff]
    %v68 = vld [vmem:[#allocation2 + $0xa8] sm:$0xff]
    %v69 = vld [vmem:[#allocation2 + $0xb0] sm:$0xff]
    %v70 = vld [vmem:[#allocation2 + $0xb8] sm:$0xff]
    %v71 = vld [vmem:[#allocation2 + $0xc0] sm:$0xff]
    %v72 = vld [vmem:[#allocation2 + $0xc8] sm:$0xff]
    %v73 = vld [vmem:[#allocation2 + $0xd0] sm:$0xff]
    %v74 = vld [vmem:[#allocation2 + $0xd8] sm:$0xff]
    %v75 = vld [vmem:[#allocation2 + $0xe0] sm:$0xff]
    %v76 = vld [vmem:[#allocation2 + $0xe8] sm:$0xff]
    %v77 = vld [vmem:[#allocation2 + $0xf0] sm:$0xff]
    %v78 = vld [vmem:[#allocation2 + $0xf8] sm:$0xff]
    %v79 = vld [vmem:[#allocation2 + $0x100] sm:$0xff]
    %v80 = vld [vmem:[#allocation2 + $0x108] sm:$0xff]
    %v81 = vld [vmem:[#allocation2 + $0x110] sm:$0xff]
    %v82 = vld [vmem:[#allocation2 + $0x118] sm:$0xff]
    %v83 = vld [vmem:[#allocation2 + $0x120] sm:$0xff]
    %v84 = vld [vmem:[#allocation2 + $0x128] sm:$0xff]
    %v85 = vld [vmem:[#allocation2 + $0x130] sm:$0xff]
    %v86 = vld [vmem:[#allocation2 + $0x138] sm:$0xff]
    %v87 = vld [vmem:[#allocation2 + $0x140] sm:$0xff]
    %v88 = vld [vmem:[#allocation2 + $0x148] sm:$0xff]
    %v89 = vld [vmem:[#allocation2 + $0x150] sm:$0xff]
    %v90 = vld [vmem:[#allocation2 + $0x158] sm:$0xff]
    %v91 = vld [vmem:[#allocation2 + $0x160] sm:$0xff]
    %v92 = vld [vmem:[#allocation2 + $0x168] sm:$0xff]
    %v93 = vld [vmem:[#allocation2 + $0x170] sm:$0xff]
    %v94 = vld [vmem:[#allocation2 + $0x178] sm:$0xff]
    %v95 = vld [vmem:[#allocation2 + $0x180] sm:$0xff]
    %v96 = vld [vmem:[#allocation2 + $0x188] sm:$0xff]
    %v97 = vld [vmem:[#allocation2 + $0x190] sm:$0xff]
    %v98 = vld [vmem:[#allocation2 + $0x198] sm:$0xff]
    %v99 = vld [vmem:[#allocation2 + $0x1a0] sm:$0xff]
    %v100 = vld [vmem:[#allocation2 + $0x1a8] sm:$0xff]
    %v101 = vld [vmem:[#allocation2 + $0x1b0] sm:$0xff]
    %v102 = vld [vmem:[#allocation2 + $0x1b8] sm:$0xff]
    %v103 = vld [vmem:[#allocation2 + $0x1c0] sm:$0xff]
    %v104 = vld [vmem:[#allocation2 + $0x1c8] sm:$0xff]
    %v105 = vld [vmem:[#allocation2 + $0x1d0] sm:$0xff]
    %v106 = vld [vmem:[#allocation2 + $0x1d8] sm:$0xff]
    %v107 = vld [vmem:[#allocation2 + $0x1e0] sm:$0xff]
    %v108 = vld [vmem:[#allocation2 + $0x1e8] sm:$0xff]
    %v109 = vld [vmem:[#allocation2 + $0x1f0] sm:$0xff]
    %v110 = vld [vmem:[#allocation2 + $0x1f8] sm:$0xff]
    %v111 = vld [vmem:[#allocation2 + $0x200] sm:$0xff]
    %v112 = vld [vmem:[#allocation2 + $0x208] sm:$0xff]
    %v113 = vld [vmem:[#allocation2 + $0x210] sm:$0xff]
    %v114 = vld [vmem:[#allocation2 + $0x218] sm:$0xff]
    %v115 = vld [vmem:[#allocation2 + $0x220] sm:$0xff]
    %v116 = vld [vmem:[#allocation2 + $0x228] sm:$0xff]
    %v117 = vld [vmem:[#allocation2 + $0x230] sm:$0xff]
    %v118 = vld [vmem:[#allocation2 + $0x238] sm:$0xff]
    %v119 = vld [vmem:[#allocation2 + $0x240] sm:$0xff]
    %v120 = vld [vmem:[#allocation2 + $0x248] sm:$0xff]
    %v121 = vld [vmem:[#allocation2 + $0x250] sm:$0xff]
    %v122 = vld [vmem:[#allocation2 + $0x258] sm:$0xff]
    %v123 = vld [vmem:[#allocation2 + $0x260] sm:$0xff]
    %v124 = vld [vmem:[#allocation2 + $0x268] sm:$0xff]
    %v125 = vld [vmem:[#allocation2 + $0x270] sm:$0xff]
    %v126 = vld [vmem:[#allocation2 + $0x278] sm:$0xff]
    %v127 = vld [vmem:[#allocation2 + $0x280] sm:$0xff]
    %v128 = vld [vmem:[#allocation2 + $0x288] sm:$0xff]
    %v129 = vld [vmem:[#allocation2 + $0x290] sm:$0xff]
    %v130 = vld [vmem:[#allocation2 + $0x298] sm:$0xff]
    %v131 = vld [vmem:[#allocation2 + $0x2a0] sm:$0xff]
    %v132 = vld [vmem:[#allocation2 + $0x2a8] sm:$0xff]
    %v133 = vld [vmem:[#allocation2 + $0x2b0] sm:$0xff]
    %v134 = vld [vmem:[#allocation2 + $0x2b8] sm:$0xff]
    %v135 = vld [vmem:[#allocation2 + $0x2c0] sm:$0xff]
    %v136 = vld [vmem:[#allocation2 + $0x2c8] sm:$0xff]
    %v137 = vld [vmem:[#allocation2 + $0x2d0] sm:$0xff]
    %v138 = vld [vmem:[#allocation2 + $0x2d8] sm:$0xff]
    %v139 = vld [vmem:[#allocation2 + $0x2e0] sm:$0xff]
    %v140 = vld [vmem:[#allocation2 + $0x2e8] sm:$0xff]
    %v141 = vld [vmem:[#allocation2 + $0x2f0] sm:$0xff]
    %v142 = vld [vmem:[#allocation2 + $0x2f8] sm:$0xff]
    %v143 = vld [vmem:[#allocation2 + $0x300] sm:$0xff]
    %v144 = vld [vmem:[#allocation2 + $0x308] sm:$0xff]
    %v145 = vld [vmem:[#allocation2 + $0x310] sm:$0xff]
    %v146 = vld [vmem:[#allocation2 + $0x318] sm:$0xff]
    %v147 = vld [vmem:[#allocation2 + $0x320] sm:$0xff]
    %v148 = vld [vmem:[#allocation2 + $0x328] sm:$0xff]
    %v149 = vld [vmem:[#allocation2 + $0x330] sm:$0xff]
    %v150 = vld [vmem:[#allocation2 + $0x338] sm:$0xff]
    %v151 = vld [vmem:[#allocation2 + $0x340] sm:$0xff]
    %v152 = vld [vmem:[#allocation2 + $0x348] sm:$0xff]
    %v153 = vld [vmem:[#allocation2 + $0x350] sm:$0xff]
    %v154 = vld [vmem:[#allocation2 + $0x358] sm:$0xff]
    %v155 = vld [vmem:[#allocation2 + $0x360] sm:$0xff]
    %v156 = vld [vmem:[#allocation2 + $0x368] sm:$0xff]
    %v157 = vld [vmem:[#allocation2 + $0x370] sm:$0xff]
    %v158 = vld [vmem:[#allocation2 + $0x378] sm:$0xff]
    %v159 = vld [vmem:[#allocation2 + $0x380] sm:$0xff]
    %v160 = vld [vmem:[#allocation2 + $0x388] sm:$0xff]
    %v161 = vld [vmem:[#allocation2 + $0x390] sm:$0xff]
    %v162 = vld [vmem:[#allocation2 + $0x398] sm:$0xff]
    %v163 = vld [vmem:[#allocation2 + $0x3a0] sm:$0xff]
    %v164 = vld [vmem:[#allocation2 + $0x3a8] sm:$0xff]
    %v165 = vld [vmem:[#allocation2 + $0x3b0] sm:$0xff]
    %v166 = vld [vmem:[#allocation2 + $0x3b8] sm:$0xff]
    %v167 = vld [vmem:[#allocation2 + $0x3c0] sm:$0xff]
    %v168 = vld [vmem:[#allocation2 + $0x3c8] sm:$0xff]
    %v169 = vld [vmem:[#allocation2 + $0x3d0] sm:$0xff]
    %v170 = vld [vmem:[#allocation2 + $0x3d8] sm:$0xff]
    %v171 = vld [vmem:[#allocation2 + $0x3e0] sm:$0xff]
    %v172 = vld [vmem:[#allocation2 + $0x3e8] sm:$0xff]
    %v173 = vld [vmem:[#allocation2 + $0x3f0] sm:$0xff]
    %v174 = vld [vmem:[#allocation2 + $0x3f8] sm:$0xff]
    %v175 = vld [vmem:[#allocation5] sm:$0xff]
    %v176 = vld [vmem:[#allocation5 + $0x8] sm:$0xff]
    %v177 = vld [vmem:[#allocation5 + $0x10] sm:$0xff]
    %v178 = vld [vmem:[#allocation5 + $0x18] sm:$0xff]
    %v179 = vld [vmem:[#allocation5 + $0x20] sm:$0xff]
    %v180 = vld [vmem:[#allocation5 + $0x28] sm:$0xff]
    %v181 = vld [vmem:[#allocation5 + $0x30] sm:$0xff]
    %v182 = vld [vmem:[#allocation5 + $0x38] sm:$0xff]
    %v183 = vld [vmem:[#allocation5 + $0x40] sm:$0xff]
    %v184 = vld [vmem:[#allocation5 + $0x48] sm:$0xff]
    %v185 = vld [vmem:[#allocation5 + $0x50] sm:$0xff]
    %v186 = vld [vmem:[#allocation5 + $0x58] sm:$0xff]
    %v187 = vld [vmem:[#allocation5 + $0x60] sm:$0xff]
    %v188 = vld [vmem:[#allocation5 + $0x68] sm:$0xff]
    %s189 = scalar_lea.vmem [#allocation2], 32
    %v190 = vld [vmem:[%s189] sm:$0xff]
    %v191 = vld [vmem:[%s189 + $0x8] sm:$0xff]
    %v192 = vld [vmem:[%s189 + $0x10] sm:$0xff]
    %v193 = vld [vmem:[%s189 + $0x18] sm:$0xff]
    %v194 = vld [vmem:[%s189 + $0x20] sm:$0xff]
    %v195 = vld [vmem:[%s189 + $0x28] sm:$0xff]
    %v196 = vld [vmem:[%s189 + $0x30] sm:$0xff]
    %v197 = vld [vmem:[%s189 + $0x38] sm:$0xff]
    %v198 = vld [vmem:[%s189 + $0x40] sm:$0xff]
    %v199 = vld [vmem:[%s189 + $0x48] sm:$0xff]
    %v200 = vld [vmem:[%s189 + $0x50] sm:$0xff]
    %v201 = vld [vmem:[%s189 + $0x58] sm:$0xff]
    %v202 = vld [vmem:[%s189 + $0x60] sm:$0xff]
    %v203 = vld [vmem:[%s189 + $0x68] sm:$0xff]
    %v204 = vld [vmem:[%s189 + $0x70] sm:$0xff]
    %v205 = vld [vmem:[%s189 + $0x78] sm:$0xff]
    %v206 = vld [vmem:[%s189 + $0x80] sm:$0xff]
    %v207 = vld [vmem:[%s189 + $0x88] sm:$0xff]
    %v208 = vld [vmem:[%s189 + $0x90] sm:$0xff]
    %v209 = vld [vmem:[%s189 + $0x98] sm:$0xff]
    %v210 = vld [vmem:[%s189 + $0xa0] sm:$0xff]
    %v211 = vld [vmem:[%s189 + $0xa8] sm:$0xff]
    %v212 = vld [vmem:[%s189 + $0xb0] sm:$0xff]
    %v213 = vld [vmem:[%s189 + $0xb8] sm:$0xff]
    %v214 = vld [vmem:[%s189 + $0xc0] sm:$0xff]
    %v215 = vld [vmem:[%s189 + $0xc8] sm:$0xff]
    %v216 = vld [vmem:[%s189 + $0xd0] sm:$0xff]
    %v217 = vld [vmem:[%s189 + $0xd8] sm:$0xff]
    %v218 = vld [vmem:[%s189 + $0xe0] sm:$0xff]
    %v219 = vld [vmem:[%s189 + $0xe8] sm:$0xff]
    %v220 = vld [vmem:[%s189 + $0xf0] sm:$0xff]
    %v221 = vld [vmem:[%s189 + $0xf8] sm:$0xff]
    %v222 = vld [vmem:[%s189 + $0x100] sm:$0xff]
    %v223 = vld [vmem:[%s189 + $0x108] sm:$0xff]
    %v224 = vld [vmem:[%s189 + $0x110] sm:$0xff]
    %v225 = vld [vmem:[%s189 + $0x118] sm:$0xff]
    %v226 = vld [vmem:[%s189 + $0x120] sm:$0xff]
    %v227 = vld [vmem:[%s189 + $0x128] sm:$0xff]
    %v228 = vld [vmem:[%s189 + $0x130] sm:$0xff]
    %v229 = vld [vmem:[%s189 + $0x138] sm:$0xff]
    %v230 = vld [vmem:[%s189 + $0x140] sm:$0xff]
    %v231 = vld [vmem:[%s189 + $0x148] sm:$0xff]
    %v232 = vld [vmem:[%s189 + $0x150] sm:$0xff]
    %v233 = vld [vmem:[%s189 + $0x158] sm:$0xff]
    %v234 = vld [vmem:[%s189 + $0x160] sm:$0xff]
    %v235 = vld [vmem:[%s189 + $0x168] sm:$0xff]
    %v236 = vld [vmem:[%s189 + $0x170] sm:$0xff]
    %v237 = vld [vmem:[%s189 + $0x178] sm:$0xff]
    %v238 = vld [vmem:[%s189 + $0x180] sm:$0xff]
    %v239 = vld [vmem:[%s189 + $0x188] sm:$0xff]
    %v240 = vld [vmem:[%s189 + $0x190] sm:$0xff]
    %v241 = vld [vmem:[%s189 + $0x198] sm:$0xff]
    %v242 = vld [vmem:[%s189 + $0x1a0] sm:$0xff]
    %v243 = vld [vmem:[%s189 + $0x1a8] sm:$0xff]
    %v244 = vld [vmem:[%s189 + $0x1b0] sm:$0xff]
    %v245 = vld [vmem:[%s189 + $0x1b8] sm:$0xff]
    %v246 = vld [vmem:[%s189 + $0x1c0] sm:$0xff]
    %v247 = vld [vmem:[%s189 + $0x1c8] sm:$0xff]
    %v248 = vld [vmem:[%s189 + $0x1d0] sm:$0xff]
    %v249 = vld [vmem:[%s189 + $0x1d8] sm:$0xff]
    %v250 = vld [vmem:[%s189 + $0x1e0] sm:$0xff]
    %v251 = vld [vmem:[%s189 + $0x1e8] sm:$0xff]
    %v252 = vld [vmem:[%s189 + $0x1f0] sm:$0xff]
    %v253 = vld [vmem:[%s189 + $0x1f8] sm:$0xff]
    %v254 = vld [vmem:[%s189 + $0x200] sm:$0xff]
    %v255 = vld [vmem:[%s189 + $0x208] sm:$0xff]
    %v256 = vld [vmem:[%s189 + $0x210] sm:$0xff]
    %v257 = vld [vmem:[%s189 + $0x218] sm:$0xff]
    %v258 = vld [vmem:[%s189 + $0x220] sm:$0xff]
    %v259 = vld [vmem:[%s189 + $0x228] sm:$0xff]
    %v260 = vld [vmem:[%s189 + $0x230] sm:$0xff]
    %v261 = vld [vmem:[%s189 + $0x238] sm:$0xff]
    %v262 = vld [vmem:[%s189 + $0x240] sm:$0xff]
    %v263 = vld [vmem:[%s189 + $0x248] sm:$0xff]
    %v264 = vld [vmem:[%s189 + $0x250] sm:$0xff]
    %v265 = vld [vmem:[%s189 + $0x258] sm:$0xff]
    %v266 = vld [vmem:[%s189 + $0x260] sm:$0xff]
    %v267 = vld [vmem:[%s189 + $0x268] sm:$0xff]
    %v268 = vld [vmem:[%s189 + $0x270] sm:$0xff]
    %v269 = vld [vmem:[%s189 + $0x278] sm:$0xff]
    %v270 = vld [vmem:[%s189 + $0x280] sm:$0xff]
    %v271 = vld [vmem:[%s189 + $0x288] sm:$0xff]
    %v272 = vld [vmem:[%s189 + $0x290] sm:$0xff]
    %v273 = vld [vmem:[%s189 + $0x298] sm:$0xff]
    %v274 = vld [vmem:[%s189 + $0x2a0] sm:$0xff]
    %v275 = vld [vmem:[%s189 + $0x2a8] sm:$0xff]
    %v276 = vld [vmem:[%s189 + $0x2b0] sm:$0xff]
    %v277 = vld [vmem:[%s189 + $0x2b8] sm:$0xff]
    %v278 = vld [vmem:[%s189 + $0x2c0] sm:$0xff]
    %v279 = vld [vmem:[%s189 + $0x2c8] sm:$0xff]
    %v280 = vld [vmem:[%s189 + $0x2d0] sm:$0xff]
    %v281 = vld [vmem:[%s189 + $0x2d8] sm:$0xff]
    %v282 = vld [vmem:[%s189 + $0x2e0] sm:$0xff]
    %v283 = vld [vmem:[%s189 + $0x2e8] sm:$0xff]
    %v284 = vld [vmem:[%s189 + $0x2f0] sm:$0xff]
    %v285 = vld [vmem:[%s189 + $0x2f8] sm:$0xff]
    %v286 = vld [vmem:[%s189 + $0x300] sm:$0xff]
    %v287 = vld [vmem:[%s189 + $0x308] sm:$0xff]
    %v288 = vld [vmem:[%s189 + $0x310] sm:$0xff]
    %v289 = vld [vmem:[%s189 + $0x318] sm:$0xff]
    %v290 = vld [vmem:[%s189 + $0x320] sm:$0xff]
    %v291 = vld [vmem:[%s189 + $0x328] sm:$0xff]
    %v292 = vld [vmem:[%s189 + $0x330] sm:$0xff]
    %v293 = vld [vmem:[%s189 + $0x338] sm:$0xff]
    %v294 = vld [vmem:[%s189 + $0x340] sm:$0xff]
    %v295 = vld [vmem:[%s189 + $0x348] sm:$0xff]
    %v296 = vld [vmem:[%s189 + $0x350] sm:$0xff]
    %v297 = vld [vmem:[%s189 + $0x358] sm:$0xff]
    %v298 = vld [vmem:[%s189 + $0x360] sm:$0xff]
    %v299 = vld [vmem:[%s189 + $0x368] sm:$0xff]
    %v300 = vld [vmem:[%s189 + $0x370] sm:$0xff]
    %v301 = vld [vmem:[%s189 + $0x378] sm:$0xff]
    %v302 = vld [vmem:[%s189 + $0x380] sm:$0xff]
    %v303 = vld [vmem:[%s189 + $0x388] sm:$0xff]
    %v304 = vld [vmem:[%s189 + $0x390] sm:$0xff]
    %v305 = vld [vmem:[%s189 + $0x398] sm:$0xff]
    %v306 = vld [vmem:[%s189 + $0x3a0] sm:$0xff]
    %v307 = vld [vmem:[%s189 + $0x3a8] sm:$0xff]
    %v308 = vld [vmem:[%s189 + $0x3b0] sm:$0xff]
    %v309 = vld [vmem:[%s189 + $0x3b8] sm:$0xff]
    %v310 = vld [vmem:[%s189 + $0x3c0] sm:$0xff]
    %v311 = vld [vmem:[%s189 + $0x3c8] sm:$0xff]
    %v312 = vld [vmem:[%s189 + $0x3d0] sm:$0xff]
    %v313 = vld [vmem:[%s189 + $0x3d8] sm:$0xff]
    %v314 = vld [vmem:[%s189 + $0x3e0] sm:$0xff]
    %v315 = vld [vmem:[%s189 + $0x3e8] sm:$0xff]
    %v316 = vld [vmem:[%s189 + $0x3f0] sm:$0xff]
    %v317 = vld [vmem:[%s189 + $0x3f8] sm:$0xff]
    %s318 = scalar_lea.vmem [#allocation5], 112
    %v319 = vld [vmem:[%s318] sm:$0xff]
    %v320 = vld [vmem:[%s318 + $0x8] sm:$0xff]
    %v321 = vld [vmem:[%s318 + $0x10] sm:$0xff]
    %v322 = vld [vmem:[%s318 + $0x18] sm:$0xff]
    %v323 = vld [vmem:[%s318 + $0x20] sm:$0xff]
    %v324 = vld [vmem:[%s318 + $0x28] sm:$0xff]
    %v325 = vld [vmem:[%s318 + $0x30] sm:$0xff]
    %v326 = vld [vmem:[%s318 + $0x38] sm:$0xff]
    %v327 = vld [vmem:[%s318 + $0x40] sm:$0xff]
    %v328 = vld [vmem:[%s318 + $0x48] sm:$0xff]
    %v329 = vld [vmem:[%s318 + $0x50] sm:$0xff]
    %v330 = vld [vmem:[%s318 + $0x58] sm:$0xff]
    %v331 = vld [vmem:[%s318 + $0x60] sm:$0xff]
    %v332 = vld [vmem:[%s318 + $0x68] sm:$0xff]
    %vm333 = vcmask 916480
    %v335 = vsel %vm333, %v190, 0
    %v338 = vsel %vm333, %v191, 0
    %v341 = vsel %vm333, %v192, 0
    %v344 = vsel %vm333, %v193, 0
    %v347 = vsel %vm333, %v194, 0
    %v350 = vsel %vm333, %v195, 0
    %v353 = vsel %vm333, %v196, 0
    %v356 = vsel %vm333, %v197, 0
    %v359 = vsel %vm333, %v198, 0
    %v362 = vsel %vm333, %v199, 0
    %v365 = vsel %vm333, %v200, 0
    %v368 = vsel %vm333, %v201, 0
    %v371 = vsel %vm333, %v202, 0
    %v374 = vsel %vm333, %v203, 0
    %v377 = vsel %vm333, %v204, 0
    %v380 = vsel %vm333, %v205, 0
    %v383 = vsel %vm333, %v206, 0
    %v386 = vsel %vm333, %v207, 0
    %v389 = vsel %vm333, %v208, 0
    %v392 = vsel %vm333, %v209, 0
    %v395 = vsel %vm333, %v210, 0
    %v398 = vsel %vm333, %v211, 0
    %v401 = vsel %vm333, %v212, 0
    %v404 = vsel %vm333, %v213, 0
    %v407 = vsel %vm333, %v214, 0
    %v410 = vsel %vm333, %v215, 0
    %v413 = vsel %vm333, %v216, 0
    %v416 = vsel %vm333, %v217, 0
    %v419 = vsel %vm333, %v218, 0
    %v422 = vsel %vm333, %v219, 0
    %v425 = vsel %vm333, %v220, 0
    %v428 = vsel %vm333, %v221, 0
    %v431 = vsel %vm333, %v222, 0
    %v434 = vsel %vm333, %v223, 0
    %v437 = vsel %vm333, %v224, 0
    %v440 = vsel %vm333, %v225, 0
    %v443 = vsel %vm333, %v226, 0
    %v446 = vsel %vm333, %v227, 0
    %v449 = vsel %vm333, %v228, 0
    %v452 = vsel %vm333, %v229, 0
    %v455 = vsel %vm333, %v230, 0
    %v458 = vsel %vm333, %v231, 0
    %v461 = vsel %vm333, %v232, 0
    %v464 = vsel %vm333, %v233, 0
    %v467 = vsel %vm333, %v234, 0
    %v470 = vsel %vm333, %v235, 0
    %v473 = vsel %vm333, %v236, 0
    %v476 = vsel %vm333, %v237, 0
    %v479 = vsel %vm333, %v238, 0
    %v482 = vsel %vm333, %v239, 0
    %v485 = vsel %vm333, %v240, 0
    %v488 = vsel %vm333, %v241, 0
    %v491 = vsel %vm333, %v242, 0
    %v494 = vsel %vm333, %v243, 0
    %v497 = vsel %vm333, %v244, 0
    %v500 = vsel %vm333, %v245, 0
    %v503 = vsel %vm333, %v246, 0
    %v506 = vsel %vm333, %v247, 0
    %v509 = vsel %vm333, %v248, 0
    %v512 = vsel %vm333, %v249, 0
    %v515 = vsel %vm333, %v250, 0
    %v518 = vsel %vm333, %v251, 0
    %v521 = vsel %vm333, %v252, 0
    %v524 = vsel %vm333, %v253, 0
    %v527 = vsel %vm333, %v254, 0
    %v530 = vsel %vm333, %v255, 0
    %v533 = vsel %vm333, %v256, 0
    %v536 = vsel %vm333, %v257, 0
    %v539 = vsel %vm333, %v258, 0
    %v542 = vsel %vm333, %v259, 0
    %v545 = vsel %vm333, %v260, 0
    %v548 = vsel %vm333, %v261, 0
    %v551 = vsel %vm333, %v262, 0
    %v554 = vsel %vm333, %v263, 0
    %v557 = vsel %vm333, %v264, 0
    %v560 = vsel %vm333, %v265, 0
    %v563 = vsel %vm333, %v266, 0
    %v566 = vsel %vm333, %v267, 0
    %v569 = vsel %vm333, %v268, 0
    %v572 = vsel %vm333, %v269, 0
    %v575 = vsel %vm333, %v270, 0
    %v578 = vsel %vm333, %v271, 0
    %v581 = vsel %vm333, %v272, 0
    %v584 = vsel %vm333, %v273, 0
    %v587 = vsel %vm333, %v274, 0
    %v590 = vsel %vm333, %v275, 0
    %v593 = vsel %vm333, %v276, 0
    %v596 = vsel %vm333, %v277, 0
    %v599 = vsel %vm333, %v278, 0
    %v602 = vsel %vm333, %v279, 0
    %v605 = vsel %vm333, %v280, 0
    %v608 = vsel %vm333, %v281, 0
    %v611 = vsel %vm333, %v282, 0
    %v614 = vsel %vm333, %v283, 0
    %v617 = vsel %vm333, %v284, 0
    %v620 = vsel %vm333, %v285, 0
    %v623 = vsel %vm333, %v286, 0
    %v626 = vsel %vm333, %v287, 0
    %v629 = vsel %vm333, %v288, 0
    %v632 = vsel %vm333, %v289, 0
    %v635 = vsel %vm333, %v290, 0
    %v638 = vsel %vm333, %v291, 0
    %v641 = vsel %vm333, %v292, 0
    %v644 = vsel %vm333, %v293, 0
    %v647 = vsel %vm333, %v294, 0
    %v650 = vsel %vm333, %v295, 0
    %v653 = vsel %vm333, %v296, 0
    %v656 = vsel %vm333, %v297, 0
    %v659 = vsel %vm333, %v298, 0
    %v662 = vsel %vm333, %v299, 0
    %v665 = vsel %vm333, %v300, 0
    %v668 = vsel %vm333, %v301, 0
    %v671 = vsel %vm333, %v302, 0
    %v674 = vsel %vm333, %v303, 0
    %v677 = vsel %vm333, %v304, 0
    %v680 = vsel %vm333, %v305, 0
    %v683 = vsel %vm333, %v306, 0
    %v686 = vsel %vm333, %v307, 0
    %v689 = vsel %vm333, %v308, 0
    %v692 = vsel %vm333, %v309, 0
    %v695 = vsel %vm333, %v310, 0
    %v698 = vsel %vm333, %v311, 0
    %v701 = vsel %vm333, %v312, 0
    %v704 = vsel %vm333, %v313, 0
    %v707 = vsel %vm333, %v314, 0
    %v710 = vsel %vm333, %v315, 0
    %v713 = vsel %vm333, %v316, 0
    %v716 = vsel %vm333, %v317, 0
    %718 = vmatpush.msra.mxu0 0.0
    %719 = vmatpush.msra.mxu0 0.0
    %720 = vmatpush.msra.mxu0 %v332
    %721 = vmatpush.msra.mxu0 %v331
    %722 = vmatpush.msra.mxu0 %v330
    %723 = vmatpush.msra.mxu0 %v329
    %724 = vmatpush.msra.mxu0 %v328
    %725 = vmatpush.msra.mxu0 %v327
    %726 = vmatpush.msra.mxu0 %v326
    %727 = vmatpush.msra.mxu0 %v325
    %728 = vmatpush.msra.mxu0 %v324
    %729 = vmatpush.msra.mxu0 %v323
    %730 = vmatpush.msra.mxu0 %v322
    %731 = vmatpush.msra.mxu0 %v321
    %732 = vmatpush.msra.mxu0 %v320
    %733 = vmatpush.msra.mxu0 %v319
    %734 = vmatmul.f32.gmra.mxu0 %v335
    %v735 = vpop.f32.mrf.mxu0
    %v736 = vadd.f32 0.0, %v735
    %737 = vmatmul.f32.gmra.mxu0 %v338
    %v738 = vpop.f32.mrf.mxu0
    %v739 = vadd.f32 0.0, %v738
    %740 = vmatmul.f32.gmra.mxu0 %v341
    %v741 = vpop.f32.mrf.mxu0
    %v742 = vadd.f32 0.0, %v741
    %743 = vmatmul.f32.gmra.mxu0 %v344
    %v744 = vpop.f32.mrf.mxu0
    %v745 = vadd.f32 0.0, %v744
    %746 = vmatmul.f32.gmra.mxu0 %v347
    %v747 = vpop.f32.mrf.mxu0
    %v748 = vadd.f32 0.0, %v747
    %749 = vmatmul.f32.gmra.mxu0 %v350
    %v750 = vpop.f32.mrf.mxu0
    %v751 = vadd.f32 0.0, %v750
    %752 = vmatmul.f32.gmra.mxu0 %v353
    %v753 = vpop.f32.mrf.mxu0
    %v754 = vadd.f32 0.0, %v753
    %755 = vmatmul.f32.gmra.mxu0 %v356
    %v756 = vpop.f32.mrf.mxu0
    %v757 = vadd.f32 0.0, %v756
    %758 = vmatmul.f32.gmra.mxu0 %v359
    %v759 = vpop.f32.mrf.mxu0
    %v760 = vadd.f32 0.0, %v759
    %761 = vmatmul.f32.gmra.mxu0 %v362
    %v762 = vpop.f32.mrf.mxu0
    %v763 = vadd.f32 0.0, %v762
    %764 = vmatmul.f32.gmra.mxu0 %v365
    %v765 = vpop.f32.mrf.mxu0
    %v766 = vadd.f32 0.0, %v765
    %767 = vmatmul.f32.gmra.mxu0 %v368
    %v768 = vpop.f32.mrf.mxu0
    %v769 = vadd.f32 0.0, %v768
    %770 = vmatmul.f32.gmra.mxu0 %v371
    %v771 = vpop.f32.mrf.mxu0
    %v772 = vadd.f32 0.0, %v771
    %773 = vmatmul.f32.gmra.mxu0 %v374
    %v774 = vpop.f32.mrf.mxu0
    %v775 = vadd.f32 0.0, %v774
    %776 = vmatmul.f32.gmra.mxu0 %v377
    %v777 = vpop.f32.mrf.mxu0
    %v778 = vadd.f32 0.0, %v777
    %779 = vmatmul.f32.gmra.mxu0 %v380
    %v780 = vpop.f32.mrf.mxu0
    %v781 = vadd.f32 0.0, %v780
    %782 = vmatmul.f32.gmra.mxu0 %v383
    %v783 = vpop.f32.mrf.mxu0
    %v784 = vadd.f32 0.0, %v783
    %785 = vmatmul.f32.gmra.mxu0 %v386
    %v786 = vpop.f32.mrf.mxu0
    %v787 = vadd.f32 0.0, %v786
    %788 = vmatmul.f32.gmra.mxu0 %v389
    %v789 = vpop.f32.mrf.mxu0
    %v790 = vadd.f32 0.0, %v789
    %791 = vmatmul.f32.gmra.mxu0 %v392
    %v792 = vpop.f32.mrf.mxu0
    %v793 = vadd.f32 0.0, %v792
    %794 = vmatmul.f32.gmra.mxu0 %v395
    %v795 = vpop.f32.mrf.mxu0
    %v796 = vadd.f32 0.0, %v795
    %797 = vmatmul.f32.gmra.mxu0 %v398
    %v798 = vpop.f32.mrf.mxu0
    %v799 = vadd.f32 0.0, %v798
    %800 = vmatmul.f32.gmra.mxu0 %v401
    %v801 = vpop.f32.mrf.mxu0
    %v802 = vadd.f32 0.0, %v801
    %803 = vmatmul.f32.gmra.mxu0 %v404
    %v804 = vpop.f32.mrf.mxu0
    %v805 = vadd.f32 0.0, %v804
    %806 = vmatmul.f32.gmra.mxu0 %v407
    %v807 = vpop.f32.mrf.mxu0
    %v808 = vadd.f32 0.0, %v807
    %809 = vmatmul.f32.gmra.mxu0 %v410
    %v810 = vpop.f32.mrf.mxu0
    %v811 = vadd.f32 0.0, %v810
    %812 = vmatmul.f32.gmra.mxu0 %v413
    %v813 = vpop.f32.mrf.mxu0
    %v814 = vadd.f32 0.0, %v813
    %815 = vmatmul.f32.gmra.mxu0 %v416
    %v816 = vpop.f32.mrf.mxu0
    %v817 = vadd.f32 0.0, %v816
    %818 = vmatmul.f32.gmra.mxu0 %v419
    %v819 = vpop.f32.mrf.mxu0
    %v820 = vadd.f32 0.0, %v819
    %821 = vmatmul.f32.gmra.mxu0 %v422
    %v822 = vpop.f32.mrf.mxu0
    %v823 = vadd.f32 0.0, %v822
    %824 = vmatmul.f32.gmra.mxu0 %v425
    %v825 = vpop.f32.mrf.mxu0
    %v826 = vadd.f32 0.0, %v825
    %827 = vmatmul.f32.gmra.mxu0 %v428
    %v828 = vpop.f32.mrf.mxu0
    %v829 = vadd.f32 0.0, %v828
    %830 = vmatmul.f32.gmra.mxu0 %v431
    %v831 = vpop.f32.mrf.mxu0
    %v832 = vadd.f32 0.0, %v831
    %833 = vmatmul.f32.gmra.mxu0 %v434
    %v834 = vpop.f32.mrf.mxu0
    %v835 = vadd.f32 0.0, %v834
    %836 = vmatmul.f32.gmra.mxu0 %v437
    %v837 = vpop.f32.mrf.mxu0
    %v838 = vadd.f32 0.0, %v837
    %839 = vmatmul.f32.gmra.mxu0 %v440
    %v840 = vpop.f32.mrf.mxu0
    %v841 = vadd.f32 0.0, %v840
    %842 = vmatmul.f32.gmra.mxu0 %v443
    %v843 = vpop.f32.mrf.mxu0
    %v844 = vadd.f32 0.0, %v843
    %845 = vmatmul.f32.gmra.mxu0 %v446
    %v846 = vpop.f32.mrf.mxu0
    %v847 = vadd.f32 0.0, %v846
    %848 = vmatmul.f32.gmra.mxu0 %v449
    %v849 = vpop.f32.mrf.mxu0
    %v850 = vadd.f32 0.0, %v849
    %851 = vmatmul.f32.gmra.mxu0 %v452
    %v852 = vpop.f32.mrf.mxu0
    %v853 = vadd.f32 0.0, %v852
    %854 = vmatmul.f32.gmra.mxu0 %v455
    %v855 = vpop.f32.mrf.mxu0
    %v856 = vadd.f32 0.0, %v855
    %857 = vmatmul.f32.gmra.mxu0 %v458
    %v858 = vpop.f32.mrf.mxu0
    %v859 = vadd.f32 0.0, %v858
    %860 = vmatmul.f32.gmra.mxu0 %v461
    %v861 = vpop.f32.mrf.mxu0
    %v862 = vadd.f32 0.0, %v861
    %863 = vmatmul.f32.gmra.mxu0 %v464
    %v864 = vpop.f32.mrf.mxu0
    %v865 = vadd.f32 0.0, %v864
    %866 = vmatmul.f32.gmra.mxu0 %v467
    %v867 = vpop.f32.mrf.mxu0
    %v868 = vadd.f32 0.0, %v867
    %869 = vmatmul.f32.gmra.mxu0 %v470
    %v870 = vpop.f32.mrf.mxu0
    %v871 = vadd.f32 0.0, %v870
    %872 = vmatmul.f32.gmra.mxu0 %v473
    %v873 = vpop.f32.mrf.mxu0
    %v874 = vadd.f32 0.0, %v873
    %875 = vmatmul.f32.gmra.mxu0 %v476
    %v876 = vpop.f32.mrf.mxu0
    %v877 = vadd.f32 0.0, %v876
    %878 = vmatmul.f32.gmra.mxu0 %v479
    %v879 = vpop.f32.mrf.mxu0
    %v880 = vadd.f32 0.0, %v879
    %881 = vmatmul.f32.gmra.mxu0 %v482
    %v882 = vpop.f32.mrf.mxu0
    %v883 = vadd.f32 0.0, %v882
    %884 = vmatmul.f32.gmra.mxu0 %v485
    %v885 = vpop.f32.mrf.mxu0
    %v886 = vadd.f32 0.0, %v885
    %887 = vmatmul.f32.gmra.mxu0 %v488
    %v888 = vpop.f32.mrf.mxu0
    %v889 = vadd.f32 0.0, %v888
    %890 = vmatmul.f32.gmra.mxu0 %v491
    %v891 = vpop.f32.mrf.mxu0
    %v892 = vadd.f32 0.0, %v891
    %893 = vmatmul.f32.gmra.mxu0 %v494
    %v894 = vpop.f32.mrf.mxu0
    %v895 = vadd.f32 0.0, %v894
    %896 = vmatmul.f32.gmra.mxu0 %v497
    %v897 = vpop.f32.mrf.mxu0
    %v898 = vadd.f32 0.0, %v897
    %899 = vmatmul.f32.gmra.mxu0 %v500
    %v900 = vpop.f32.mrf.mxu0
    %v901 = vadd.f32 0.0, %v900
    %902 = vmatmul.f32.gmra.mxu0 %v503
    %v903 = vpop.f32.mrf.mxu0
    %v904 = vadd.f32 0.0, %v903
    %905 = vmatmul.f32.gmra.mxu0 %v506
    %v906 = vpop.f32.mrf.mxu0
    %v907 = vadd.f32 0.0, %v906
    %908 = vmatmul.f32.gmra.mxu0 %v509
    %v909 = vpop.f32.mrf.mxu0
    %v910 = vadd.f32 0.0, %v909
    %911 = vmatmul.f32.gmra.mxu0 %v512
    %v912 = vpop.f32.mrf.mxu0
    %v913 = vadd.f32 0.0, %v912
    %914 = vmatmul.f32.gmra.mxu0 %v515
    %v915 = vpop.f32.mrf.mxu0
    %v916 = vadd.f32 0.0, %v915
    %917 = vmatmul.f32.gmra.mxu0 %v518
    %v918 = vpop.f32.mrf.mxu0
    %v919 = vadd.f32 0.0, %v918
    %920 = vmatmul.f32.gmra.mxu0 %v521
    %v921 = vpop.f32.mrf.mxu0
    %v922 = vadd.f32 0.0, %v921
    %923 = vmatmul.f32.gmra.mxu0 %v524
    %v924 = vpop.f32.mrf.mxu0
    %v925 = vadd.f32 0.0, %v924
    %926 = vmatmul.f32.gmra.mxu0 %v527
    %v927 = vpop.f32.mrf.mxu0
    %v928 = vadd.f32 0.0, %v927
    %929 = vmatmul.f32.gmra.mxu0 %v530
    %v930 = vpop.f32.mrf.mxu0
    %v931 = vadd.f32 0.0, %v930
    %932 = vmatmul.f32.gmra.mxu0 %v533
    %v933 = vpop.f32.mrf.mxu0
    %v934 = vadd.f32 0.0, %v933
    %935 = vmatmul.f32.gmra.mxu0 %v536
    %v936 = vpop.f32.mrf.mxu0
    %v937 = vadd.f32 0.0, %v936
    %938 = vmatmul.f32.gmra.mxu0 %v539
    %v939 = vpop.f32.mrf.mxu0
    %v940 = vadd.f32 0.0, %v939
    %941 = vmatmul.f32.gmra.mxu0 %v542
    %v942 = vpop.f32.mrf.mxu0
    %v943 = vadd.f32 0.0, %v942
    %944 = vmatmul.f32.gmra.mxu0 %v545
    %v945 = vpop.f32.mrf.mxu0
    %v946 = vadd.f32 0.0, %v945
    %947 = vmatmul.f32.gmra.mxu0 %v548
    %v948 = vpop.f32.mrf.mxu0
    %v949 = vadd.f32 0.0, %v948
    %950 = vmatmul.f32.gmra.mxu0 %v551
    %v951 = vpop.f32.mrf.mxu0
    %v952 = vadd.f32 0.0, %v951
    %953 = vmatmul.f32.gmra.mxu0 %v554
    %v954 = vpop.f32.mrf.mxu0
    %v955 = vadd.f32 0.0, %v954
    %956 = vmatmul.f32.gmra.mxu0 %v557
    %v957 = vpop.f32.mrf.mxu0
    %v958 = vadd.f32 0.0, %v957
    %959 = vmatmul.f32.gmra.mxu0 %v560
    %v960 = vpop.f32.mrf.mxu0
    %v961 = vadd.f32 0.0, %v960
    %962 = vmatmul.f32.gmra.mxu0 %v563
    %v963 = vpop.f32.mrf.mxu0
    %v964 = vadd.f32 0.0, %v963
    %965 = vmatmul.f32.gmra.mxu0 %v566
    %v966 = vpop.f32.mrf.mxu0
    %v967 = vadd.f32 0.0, %v966
    %968 = vmatmul.f32.gmra.mxu0 %v569
    %v969 = vpop.f32.mrf.mxu0
    %v970 = vadd.f32 0.0, %v969
    %971 = vmatmul.f32.gmra.mxu0 %v572
    %v972 = vpop.f32.mrf.mxu0
    %v973 = vadd.f32 0.0, %v972
    %974 = vmatmul.f32.gmra.mxu0 %v575
    %v975 = vpop.f32.mrf.mxu0
    %v976 = vadd.f32 0.0, %v975
    %977 = vmatmul.f32.gmra.mxu0 %v578
    %v978 = vpop.f32.mrf.mxu0
    %v979 = vadd.f32 0.0, %v978
    %980 = vmatmul.f32.gmra.mxu0 %v581
    %v981 = vpop.f32.mrf.mxu0
    %v982 = vadd.f32 0.0, %v981
    %983 = vmatmul.f32.gmra.mxu0 %v584
    %v984 = vpop.f32.mrf.mxu0
    %v985 = vadd.f32 0.0, %v984
    %986 = vmatmul.f32.gmra.mxu0 %v587
    %v987 = vpop.f32.mrf.mxu0
    %v988 = vadd.f32 0.0, %v987
    %989 = vmatmul.f32.gmra.mxu0 %v590
    %v990 = vpop.f32.mrf.mxu0
    %v991 = vadd.f32 0.0, %v990
    %992 = vmatmul.f32.gmra.mxu0 %v593
    %v993 = vpop.f32.mrf.mxu0
    %v994 = vadd.f32 0.0, %v993
    %995 = vmatmul.f32.gmra.mxu0 %v596
    %v996 = vpop.f32.mrf.mxu0
    %v997 = vadd.f32 0.0, %v996
    %998 = vmatmul.f32.gmra.mxu0 %v599
    %v999 = vpop.f32.mrf.mxu0
    %v1000 = vadd.f32 0.0, %v999
    %1001 = vmatmul.f32.gmra.mxu0 %v602
    %v1002 = vpop.f32.mrf.mxu0
    %v1003 = vadd.f32 0.0, %v1002
    %1004 = vmatmul.f32.gmra.mxu0 %v605
    %v1005 = vpop.f32.mrf.mxu0
    %v1006 = vadd.f32 0.0, %v1005
    %1007 = vmatmul.f32.gmra.mxu0 %v608
    %v1008 = vpop.f32.mrf.mxu0
    %v1009 = vadd.f32 0.0, %v1008
    %1010 = vmatmul.f32.gmra.mxu0 %v611
    %v1011 = vpop.f32.mrf.mxu0
    %v1012 = vadd.f32 0.0, %v1011
    %1013 = vmatmul.f32.gmra.mxu0 %v614
    %v1014 = vpop.f32.mrf.mxu0
    %v1015 = vadd.f32 0.0, %v1014
    %1016 = vmatmul.f32.gmra.mxu0 %v617
    %v1017 = vpop.f32.mrf.mxu0
    %v1018 = vadd.f32 0.0, %v1017
    %1019 = vmatmul.f32.gmra.mxu0 %v620
    %v1020 = vpop.f32.mrf.mxu0
    %v1021 = vadd.f32 0.0, %v1020
    %1022 = vmatmul.f32.gmra.mxu0 %v623
    %v1023 = vpop.f32.mrf.mxu0
    %v1024 = vadd.f32 0.0, %v1023
    %1025 = vmatmul.f32.gmra.mxu0 %v626
    %v1026 = vpop.f32.mrf.mxu0
    %v1027 = vadd.f32 0.0, %v1026
    %1028 = vmatmul.f32.gmra.mxu0 %v629
    %v1029 = vpop.f32.mrf.mxu0
    %v1030 = vadd.f32 0.0, %v1029
    %1031 = vmatmul.f32.gmra.mxu0 %v632
    %v1032 = vpop.f32.mrf.mxu0
    %v1033 = vadd.f32 0.0, %v1032
    %1034 = vmatmul.f32.gmra.mxu0 %v635
    %v1035 = vpop.f32.mrf.mxu0
    %v1036 = vadd.f32 0.0, %v1035
    %1037 = vmatmul.f32.gmra.mxu0 %v638
    %v1038 = vpop.f32.mrf.mxu0
    %v1039 = vadd.f32 0.0, %v1038
    %1040 = vmatmul.f32.gmra.mxu0 %v641
    %v1041 = vpop.f32.mrf.mxu0
    %v1042 = vadd.f32 0.0, %v1041
    %1043 = vmatmul.f32.gmra.mxu0 %v644
    %v1044 = vpop.f32.mrf.mxu0
    %v1045 = vadd.f32 0.0, %v1044
    %1046 = vmatmul.f32.gmra.mxu0 %v647
    %v1047 = vpop.f32.mrf.mxu0
    %v1048 = vadd.f32 0.0, %v1047
    %1049 = vmatmul.f32.gmra.mxu0 %v650
    %v1050 = vpop.f32.mrf.mxu0
    %v1051 = vadd.f32 0.0, %v1050
    %1052 = vmatmul.f32.gmra.mxu0 %v653
    %v1053 = vpop.f32.mrf.mxu0
    %v1054 = vadd.f32 0.0, %v1053
    %1055 = vmatmul.f32.gmra.mxu0 %v656
    %v1056 = vpop.f32.mrf.mxu0
    %v1057 = vadd.f32 0.0, %v1056
    %1058 = vmatmul.f32.gmra.mxu0 %v659
    %v1059 = vpop.f32.mrf.mxu0
    %v1060 = vadd.f32 0.0, %v1059
    %1061 = vmatmul.f32.gmra.mxu0 %v662
    %v1062 = vpop.f32.mrf.mxu0
    %v1063 = vadd.f32 0.0, %v1062
    %1064 = vmatmul.f32.gmra.mxu0 %v665
    %v1065 = vpop.f32.mrf.mxu0
    %v1066 = vadd.f32 0.0, %v1065
    %1067 = vmatmul.f32.gmra.mxu0 %v668
    %v1068 = vpop.f32.mrf.mxu0
    %v1069 = vadd.f32 0.0, %v1068
    %1070 = vmatmul.f32.gmra.mxu0 %v671
    %v1071 = vpop.f32.mrf.mxu0
    %v1072 = vadd.f32 0.0, %v1071
    %1073 = vmatmul.f32.gmra.mxu0 %v674
    %v1074 = vpop.f32.mrf.mxu0
    %v1075 = vadd.f32 0.0, %v1074
    %1076 = vmatmul.f32.gmra.mxu0 %v677
    %v1077 = vpop.f32.mrf.mxu0
    %v1078 = vadd.f32 0.0, %v1077
    %1079 = vmatmul.f32.gmra.mxu0 %v680
    %v1080 = vpop.f32.mrf.mxu0
    %v1081 = vadd.f32 0.0, %v1080
    %1082 = vmatmul.f32.gmra.mxu0 %v683
    %v1083 = vpop.f32.mrf.mxu0
    %v1084 = vadd.f32 0.0, %v1083
    %1085 = vmatmul.f32.gmra.mxu0 %v686
    %v1086 = vpop.f32.mrf.mxu0
    %v1087 = vadd.f32 0.0, %v1086
    %1088 = vmatmul.f32.gmra.mxu0 %v689
    %v1089 = vpop.f32.mrf.mxu0
    %v1090 = vadd.f32 0.0, %v1089
    %1091 = vmatmul.f32.gmra.mxu0 %v692
    %v1092 = vpop.f32.mrf.mxu0
    %v1093 = vadd.f32 0.0, %v1092
    %1094 = vmatmul.f32.gmra.mxu0 %v695
    %v1095 = vpop.f32.mrf.mxu0
    %v1096 = vadd.f32 0.0, %v1095
    %1097 = vmatmul.f32.gmra.mxu0 %v698
    %v1098 = vpop.f32.mrf.mxu0
    %v1099 = vadd.f32 0.0, %v1098
    %1100 = vmatmul.f32.gmra.mxu0 %v701
    %v1101 = vpop.f32.mrf.mxu0
    %v1102 = vadd.f32 0.0, %v1101
    %1103 = vmatmul.f32.gmra.mxu0 %v704
    %v1104 = vpop.f32.mrf.mxu0
    %v1105 = vadd.f32 0.0, %v1104
    %1106 = vmatmul.f32.gmra.mxu0 %v707
    %v1107 = vpop.f32.mrf.mxu0
    %v1108 = vadd.f32 0.0, %v1107
    %1109 = vmatmul.f32.gmra.mxu0 %v710
    %v1110 = vpop.f32.mrf.mxu0
    %v1111 = vadd.f32 0.0, %v1110
    %1112 = vmatmul.f32.gmra.mxu0 %v713
    %v1113 = vpop.f32.mrf.mxu0
    %v1114 = vadd.f32 0.0, %v1113
    %1115 = vmatmul.f32.gmra.mxu0 %v716
    %v1116 = vpop.f32.mrf.mxu0
    %v1117 = vadd.f32 0.0, %v1116
    %1118 = vdwg.mxu0
    %v1120 = vsel %vm333, %v47, 0
    %v1123 = vsel %vm333, %v48, 0
    %v1126 = vsel %vm333, %v49, 0
    %v1129 = vsel %vm333, %v50, 0
    %v1132 = vsel %vm333, %v51, 0
    %v1135 = vsel %vm333, %v52, 0
    %v1138 = vsel %vm333, %v53, 0
    %v1141 = vsel %vm333, %v54, 0
    %v1144 = vsel %vm333, %v55, 0
    %v1147 = vsel %vm333, %v56, 0
    %v1150 = vsel %vm333, %v57, 0
    %v1153 = vsel %vm333, %v58, 0
    %v1156 = vsel %vm333, %v59, 0
    %v1159 = vsel %vm333, %v60, 0
    %v1162 = vsel %vm333, %v61, 0
    %v1165 = vsel %vm333, %v62, 0
    %v1168 = vsel %vm333, %v63, 0
    %v1171 = vsel %vm333, %v64, 0
    %v1174 = vsel %vm333, %v65, 0
    %v1177 = vsel %vm333, %v66, 0
    %v1180 = vsel %vm333, %v67, 0
    %v1183 = vsel %vm333, %v68, 0
    %v1186 = vsel %vm333, %v69, 0
    %v1189 = vsel %vm333, %v70, 0
    %v1192 = vsel %vm333, %v71, 0
    %v1195 = vsel %vm333, %v72, 0
    %v1198 = vsel %vm333, %v73, 0
    %v1201 = vsel %vm333, %v74, 0
    %v1204 = vsel %vm333, %v75, 0
    %v1207 = vsel %vm333, %v76, 0
    %v1210 = vsel %vm333, %v77, 0
    %v1213 = vsel %vm333, %v78, 0
    %v1216 = vsel %vm333, %v79, 0
    %v1219 = vsel %vm333, %v80, 0
    %v1222 = vsel %vm333, %v81, 0
    %v1225 = vsel %vm333, %v82, 0
    %v1228 = vsel %vm333, %v83, 0
    %v1231 = vsel %vm333, %v84, 0
    %v1234 = vsel %vm333, %v85, 0
    %v1237 = vsel %vm333, %v86, 0
    %v1240 = vsel %vm333, %v87, 0
    %v1243 = vsel %vm333, %v88, 0
    %v1246 = vsel %vm333, %v89, 0
    %v1249 = vsel %vm333, %v90, 0
    %v1252 = vsel %vm333, %v91, 0
    %v1255 = vsel %vm333, %v92, 0
    %v1258 = vsel %vm333, %v93, 0
    %v1261 = vsel %vm333, %v94, 0
    %v1264 = vsel %vm333, %v95, 0
    %v1267 = vsel %vm333, %v96, 0
    %v1270 = vsel %vm333, %v97, 0
    %v1273 = vsel %vm333, %v98, 0
    %v1276 = vsel %vm333, %v99, 0
    %v1279 = vsel %vm333, %v100, 0
    %v1282 = vsel %vm333, %v101, 0
    %v1285 = vsel %vm333, %v102, 0
    %v1288 = vsel %vm333, %v103, 0
    %v1291 = vsel %vm333, %v104, 0
    %v1294 = vsel %vm333, %v105, 0
    %v1297 = vsel %vm333, %v106, 0
    %v1300 = vsel %vm333, %v107, 0
    %v1303 = vsel %vm333, %v108, 0
    %v1306 = vsel %vm333, %v109, 0
    %v1309 = vsel %vm333, %v110, 0
    %v1312 = vsel %vm333, %v111, 0
    %v1315 = vsel %vm333, %v112, 0
    %v1318 = vsel %vm333, %v113, 0
    %v1321 = vsel %vm333, %v114, 0
    %v1324 = vsel %vm333, %v115, 0
    %v1327 = vsel %vm333, %v116, 0
    %v1330 = vsel %vm333, %v117, 0
    %v1333 = vsel %vm333, %v118, 0
    %v1336 = vsel %vm333, %v119, 0
    %v1339 = vsel %vm333, %v120, 0
    %v1342 = vsel %vm333, %v121, 0
    %v1345 = vsel %vm333, %v122, 0
    %v1348 = vsel %vm333, %v123, 0
    %v1351 = vsel %vm333, %v124, 0
    %v1354 = vsel %vm333, %v125, 0
    %v1357 = vsel %vm333, %v126, 0
    %v1360 = vsel %vm333, %v127, 0
    %v1363 = vsel %vm333, %v128, 0
    %v1366 = vsel %vm333, %v129, 0
    %v1369 = vsel %vm333, %v130, 0
    %v1372 = vsel %vm333, %v131, 0
    %v1375 = vsel %vm333, %v132, 0
    %v1378 = vsel %vm333, %v133, 0
    %v1381 = vsel %vm333, %v134, 0
    %v1384 = vsel %vm333, %v135, 0
    %v1387 = vsel %vm333, %v136, 0
    %v1390 = vsel %vm333, %v137, 0
    %v1393 = vsel %vm333, %v138, 0
    %v1396 = vsel %vm333, %v139, 0
    %v1399 = vsel %vm333, %v140, 0
    %v1402 = vsel %vm333, %v141, 0
    %v1405 = vsel %vm333, %v142, 0
    %v1408 = vsel %vm333, %v143, 0
    %v1411 = vsel %vm333, %v144, 0
    %v1414 = vsel %vm333, %v145, 0
    %v1417 = vsel %vm333, %v146, 0
    %v1420 = vsel %vm333, %v147, 0
    %v1423 = vsel %vm333, %v148, 0
    %v1426 = vsel %vm333, %v149, 0
    %v1429 = vsel %vm333, %v150, 0
    %v1432 = vsel %vm333, %v151, 0
    %v1435 = vsel %vm333, %v152, 0
    %v1438 = vsel %vm333, %v153, 0
    %v1441 = vsel %vm333, %v154, 0
    %v1444 = vsel %vm333, %v155, 0
    %v1447 = vsel %vm333, %v156, 0
    %v1450 = vsel %vm333, %v157, 0
    %v1453 = vsel %vm333, %v158, 0
    %v1456 = vsel %vm333, %v159, 0
    %v1459 = vsel %vm333, %v160, 0
    %v1462 = vsel %vm333, %v161, 0
    %v1465 = vsel %vm333, %v162, 0
    %v1468 = vsel %vm333, %v163, 0
    %v1471 = vsel %vm333, %v164, 0
    %v1474 = vsel %vm333, %v165, 0
    %v1477 = vsel %vm333, %v166, 0
    %v1480 = vsel %vm333, %v167, 0
    %v1483 = vsel %vm333, %v168, 0
    %v1486 = vsel %vm333, %v169, 0
    %v1489 = vsel %vm333, %v170, 0
    %v1492 = vsel %vm333, %v171, 0
    %v1495 = vsel %vm333, %v172, 0
    %v1498 = vsel %vm333, %v173, 0
    %v1501 = vsel %vm333, %v174, 0
    %1503 = vmatpush.msra.mxu0 0.0
    %1504 = vmatpush.msra.mxu0 0.0
    %1505 = vmatpush.msra.mxu0 %v188
    %1506 = vmatpush.msra.mxu0 %v187
    %1507 = vmatpush.msra.mxu0 %v186
    %1508 = vmatpush.msra.mxu0 %v185
    %1509 = vmatpush.msra.mxu0 %v184
    %1510 = vmatpush.msra.mxu0 %v183
    %1511 = vmatpush.msra.mxu0 %v182
    %1512 = vmatpush.msra.mxu0 %v181
    %1513 = vmatpush.msra.mxu0 %v180
    %1514 = vmatpush.msra.mxu0 %v179
    %1515 = vmatpush.msra.mxu0 %v178
    %1516 = vmatpush.msra.mxu0 %v177
    %1517 = vmatpush.msra.mxu0 %v176
    %1518 = vmatpush.msra.mxu0 %v175
    %1519 = vmatmul.f32.gmra.mxu0 %v1120
    %v1520 = vpop.f32.mrf.mxu0
    %v1521 = vadd.f32 %v736, %v1520
    %1522 = vmatmul.f32.gmra.mxu0 %v1123
    %v1523 = vpop.f32.mrf.mxu0
    %v1524 = vadd.f32 %v739, %v1523
    %1525 = vmatmul.f32.gmra.mxu0 %v1126
    %v1526 = vpop.f32.mrf.mxu0
    %v1527 = vadd.f32 %v742, %v1526
    %1528 = vmatmul.f32.gmra.mxu0 %v1129
    %v1529 = vpop.f32.mrf.mxu0
    %v1530 = vadd.f32 %v745, %v1529
    %1531 = vmatmul.f32.gmra.mxu0 %v1132
    %v1532 = vpop.f32.mrf.mxu0
    %v1533 = vadd.f32 %v748, %v1532
    %1534 = vmatmul.f32.gmra.mxu0 %v1135
    %v1535 = vpop.f32.mrf.mxu0
    %v1536 = vadd.f32 %v751, %v1535
    %1537 = vmatmul.f32.gmra.mxu0 %v1138
    %v1538 = vpop.f32.mrf.mxu0
    %v1539 = vadd.f32 %v754, %v1538
    %1540 = vmatmul.f32.gmra.mxu0 %v1141
    %v1541 = vpop.f32.mrf.mxu0
    %v1542 = vadd.f32 %v757, %v1541
    %1543 = vmatmul.f32.gmra.mxu0 %v1144
    %v1544 = vpop.f32.mrf.mxu0
    %v1545 = vadd.f32 %v760, %v1544
    %1546 = vmatmul.f32.gmra.mxu0 %v1147
    %v1547 = vpop.f32.mrf.mxu0
    %v1548 = vadd.f32 %v763, %v1547
    %1549 = vmatmul.f32.gmra.mxu0 %v1150
    %v1550 = vpop.f32.mrf.mxu0
    %v1551 = vadd.f32 %v766, %v1550
    %1552 = vmatmul.f32.gmra.mxu0 %v1153
    %v1553 = vpop.f32.mrf.mxu0
    %v1554 = vadd.f32 %v769, %v1553
    %1555 = vmatmul.f32.gmra.mxu0 %v1156
    %v1556 = vpop.f32.mrf.mxu0
    %v1557 = vadd.f32 %v772, %v1556
    %1558 = vmatmul.f32.gmra.mxu0 %v1159
    %v1559 = vpop.f32.mrf.mxu0
    %v1560 = vadd.f32 %v775, %v1559
    %1561 = vmatmul.f32.gmra.mxu0 %v1162
    %v1562 = vpop.f32.mrf.mxu0
    %v1563 = vadd.f32 %v778, %v1562
    %1564 = vmatmul.f32.gmra.mxu0 %v1165
    %v1565 = vpop.f32.mrf.mxu0
    %v1566 = vadd.f32 %v781, %v1565
    %1567 = vmatmul.f32.gmra.mxu0 %v1168
    %v1568 = vpop.f32.mrf.mxu0
    %v1569 = vadd.f32 %v784, %v1568
    %1570 = vmatmul.f32.gmra.mxu0 %v1171
    %v1571 = vpop.f32.mrf.mxu0
    %v1572 = vadd.f32 %v787, %v1571
    %1573 = vmatmul.f32.gmra.mxu0 %v1174
    %v1574 = vpop.f32.mrf.mxu0
    %v1575 = vadd.f32 %v790, %v1574
    %1576 = vmatmul.f32.gmra.mxu0 %v1177
    %v1577 = vpop.f32.mrf.mxu0
    %v1578 = vadd.f32 %v793, %v1577
    %1579 = vmatmul.f32.gmra.mxu0 %v1180
    %v1580 = vpop.f32.mrf.mxu0
    %v1581 = vadd.f32 %v796, %v1580
    %1582 = vmatmul.f32.gmra.mxu0 %v1183
    %v1583 = vpop.f32.mrf.mxu0
    %v1584 = vadd.f32 %v799, %v1583
    %1585 = vmatmul.f32.gmra.mxu0 %v1186
    %v1586 = vpop.f32.mrf.mxu0
    %v1587 = vadd.f32 %v802, %v1586
    %1588 = vmatmul.f32.gmra.mxu0 %v1189
    %v1589 = vpop.f32.mrf.mxu0
    %v1590 = vadd.f32 %v805, %v1589
    %1591 = vmatmul.f32.gmra.mxu0 %v1192
    %v1592 = vpop.f32.mrf.mxu0
    %v1593 = vadd.f32 %v808, %v1592
    %1594 = vmatmul.f32.gmra.mxu0 %v1195
    %v1595 = vpop.f32.mrf.mxu0
    %v1596 = vadd.f32 %v811, %v1595
    %1597 = vmatmul.f32.gmra.mxu0 %v1198
    %v1598 = vpop.f32.mrf.mxu0
    %v1599 = vadd.f32 %v814, %v1598
    %1600 = vmatmul.f32.gmra.mxu0 %v1201
    %v1601 = vpop.f32.mrf.mxu0
    %v1602 = vadd.f32 %v817, %v1601
    %1603 = vmatmul.f32.gmra.mxu0 %v1204
    %v1604 = vpop.f32.mrf.mxu0
    %v1605 = vadd.f32 %v820, %v1604
    %1606 = vmatmul.f32.gmra.mxu0 %v1207
    %v1607 = vpop.f32.mrf.mxu0
    %v1608 = vadd.f32 %v823, %v1607
    %1609 = vmatmul.f32.gmra.mxu0 %v1210
    %v1610 = vpop.f32.mrf.mxu0
    %v1611 = vadd.f32 %v826, %v1610
    %1612 = vmatmul.f32.gmra.mxu0 %v1213
    %v1613 = vpop.f32.mrf.mxu0
    %v1614 = vadd.f32 %v829, %v1613
    %1615 = vmatmul.f32.gmra.mxu0 %v1216
    %v1616 = vpop.f32.mrf.mxu0
    %v1617 = vadd.f32 %v832, %v1616
    %1618 = vmatmul.f32.gmra.mxu0 %v1219
    %v1619 = vpop.f32.mrf.mxu0
    %v1620 = vadd.f32 %v835, %v1619
    %1621 = vmatmul.f32.gmra.mxu0 %v1222
    %v1622 = vpop.f32.mrf.mxu0
    %v1623 = vadd.f32 %v838, %v1622
    %1624 = vmatmul.f32.gmra.mxu0 %v1225
    %v1625 = vpop.f32.mrf.mxu0
    %v1626 = vadd.f32 %v841, %v1625
    %1627 = vmatmul.f32.gmra.mxu0 %v1228
    %v1628 = vpop.f32.mrf.mxu0
    %v1629 = vadd.f32 %v844, %v1628
    %1630 = vmatmul.f32.gmra.mxu0 %v1231
    %v1631 = vpop.f32.mrf.mxu0
    %v1632 = vadd.f32 %v847, %v1631
    %1633 = vmatmul.f32.gmra.mxu0 %v1234
    %v1634 = vpop.f32.mrf.mxu0
    %v1635 = vadd.f32 %v850, %v1634
    %1636 = vmatmul.f32.gmra.mxu0 %v1237
    %v1637 = vpop.f32.mrf.mxu0
    %v1638 = vadd.f32 %v853, %v1637
    %1639 = vmatmul.f32.gmra.mxu0 %v1240
    %v1640 = vpop.f32.mrf.mxu0
    %v1641 = vadd.f32 %v856, %v1640
    %1642 = vmatmul.f32.gmra.mxu0 %v1243
    %v1643 = vpop.f32.mrf.mxu0
    %v1644 = vadd.f32 %v859, %v1643
    %1645 = vmatmul.f32.gmra.mxu0 %v1246
    %v1646 = vpop.f32.mrf.mxu0
    %v1647 = vadd.f32 %v862, %v1646
    %1648 = vmatmul.f32.gmra.mxu0 %v1249
    %v1649 = vpop.f32.mrf.mxu0
    %v1650 = vadd.f32 %v865, %v1649
    %1651 = vmatmul.f32.gmra.mxu0 %v1252
    %v1652 = vpop.f32.mrf.mxu0
    %v1653 = vadd.f32 %v868, %v1652
    %1654 = vmatmul.f32.gmra.mxu0 %v1255
    %v1655 = vpop.f32.mrf.mxu0
    %v1656 = vadd.f32 %v871, %v1655
    %1657 = vmatmul.f32.gmra.mxu0 %v1258
    %v1658 = vpop.f32.mrf.mxu0
    %v1659 = vadd.f32 %v874, %v1658
    %1660 = vmatmul.f32.gmra.mxu0 %v1261
    %v1661 = vpop.f32.mrf.mxu0
    %v1662 = vadd.f32 %v877, %v1661
    %1663 = vmatmul.f32.gmra.mxu0 %v1264
    %v1664 = vpop.f32.mrf.mxu0
    %v1665 = vadd.f32 %v880, %v1664
    %1666 = vmatmul.f32.gmra.mxu0 %v1267
    %v1667 = vpop.f32.mrf.mxu0
    %v1668 = vadd.f32 %v883, %v1667
    %1669 = vmatmul.f32.gmra.mxu0 %v1270
    %v1670 = vpop.f32.mrf.mxu0
    %v1671 = vadd.f32 %v886, %v1670
    %1672 = vmatmul.f32.gmra.mxu0 %v1273
    %v1673 = vpop.f32.mrf.mxu0
    %v1674 = vadd.f32 %v889, %v1673
    %1675 = vmatmul.f32.gmra.mxu0 %v1276
    %v1676 = vpop.f32.mrf.mxu0
    %v1677 = vadd.f32 %v892, %v1676
    %1678 = vmatmul.f32.gmra.mxu0 %v1279
    %v1679 = vpop.f32.mrf.mxu0
    %v1680 = vadd.f32 %v895, %v1679
    %1681 = vmatmul.f32.gmra.mxu0 %v1282
    %v1682 = vpop.f32.mrf.mxu0
    %v1683 = vadd.f32 %v898, %v1682
    %1684 = vmatmul.f32.gmra.mxu0 %v1285
    %v1685 = vpop.f32.mrf.mxu0
    %v1686 = vadd.f32 %v901, %v1685
    %1687 = vmatmul.f32.gmra.mxu0 %v1288
    %v1688 = vpop.f32.mrf.mxu0
    %v1689 = vadd.f32 %v904, %v1688
    %1690 = vmatmul.f32.gmra.mxu0 %v1291
    %v1691 = vpop.f32.mrf.mxu0
    %v1692 = vadd.f32 %v907, %v1691
    %1693 = vmatmul.f32.gmra.mxu0 %v1294
    %v1694 = vpop.f32.mrf.mxu0
    %v1695 = vadd.f32 %v910, %v1694
    %1696 = vmatmul.f32.gmra.mxu0 %v1297
    %v1697 = vpop.f32.mrf.mxu0
    %v1698 = vadd.f32 %v913, %v1697
    %1699 = vmatmul.f32.gmra.mxu0 %v1300
    %v1700 = vpop.f32.mrf.mxu0
    %v1701 = vadd.f32 %v916, %v1700
    %1702 = vmatmul.f32.gmra.mxu0 %v1303
    %v1703 = vpop.f32.mrf.mxu0
    %v1704 = vadd.f32 %v919, %v1703
    %1705 = vmatmul.f32.gmra.mxu0 %v1306
    %v1706 = vpop.f32.mrf.mxu0
    %v1707 = vadd.f32 %v922, %v1706
    %1708 = vmatmul.f32.gmra.mxu0 %v1309
    %v1709 = vpop.f32.mrf.mxu0
    %v1710 = vadd.f32 %v925, %v1709
    %1711 = vmatmul.f32.gmra.mxu0 %v1312
    %v1712 = vpop.f32.mrf.mxu0
    %v1713 = vadd.f32 %v928, %v1712
    %1714 = vmatmul.f32.gmra.mxu0 %v1315
    %v1715 = vpop.f32.mrf.mxu0
    %v1716 = vadd.f32 %v931, %v1715
    %1717 = vmatmul.f32.gmra.mxu0 %v1318
    %v1718 = vpop.f32.mrf.mxu0
    %v1719 = vadd.f32 %v934, %v1718
    %1720 = vmatmul.f32.gmra.mxu0 %v1321
    %v1721 = vpop.f32.mrf.mxu0
    %v1722 = vadd.f32 %v937, %v1721
    %1723 = vmatmul.f32.gmra.mxu0 %v1324
    %v1724 = vpop.f32.mrf.mxu0
    %v1725 = vadd.f32 %v940, %v1724
    %1726 = vmatmul.f32.gmra.mxu0 %v1327
    %v1727 = vpop.f32.mrf.mxu0
    %v1728 = vadd.f32 %v943, %v1727
    %1729 = vmatmul.f32.gmra.mxu0 %v1330
    %v1730 = vpop.f32.mrf.mxu0
    %v1731 = vadd.f32 %v946, %v1730
    %1732 = vmatmul.f32.gmra.mxu0 %v1333
    %v1733 = vpop.f32.mrf.mxu0
    %v1734 = vadd.f32 %v949, %v1733
    %1735 = vmatmul.f32.gmra.mxu0 %v1336
    %v1736 = vpop.f32.mrf.mxu0
    %v1737 = vadd.f32 %v952, %v1736
    %1738 = vmatmul.f32.gmra.mxu0 %v1339
    %v1739 = vpop.f32.mrf.mxu0
    %v1740 = vadd.f32 %v955, %v1739
    %1741 = vmatmul.f32.gmra.mxu0 %v1342
    %v1742 = vpop.f32.mrf.mxu0
    %v1743 = vadd.f32 %v958, %v1742
    %1744 = vmatmul.f32.gmra.mxu0 %v1345
    %v1745 = vpop.f32.mrf.mxu0
    %v1746 = vadd.f32 %v961, %v1745
    %1747 = vmatmul.f32.gmra.mxu0 %v1348
    %v1748 = vpop.f32.mrf.mxu0
    %v1749 = vadd.f32 %v964, %v1748
    %1750 = vmatmul.f32.gmra.mxu0 %v1351
    %v1751 = vpop.f32.mrf.mxu0
    %v1752 = vadd.f32 %v967, %v1751
    %1753 = vmatmul.f32.gmra.mxu0 %v1354
    %v1754 = vpop.f32.mrf.mxu0
    %v1755 = vadd.f32 %v970, %v1754
    %1756 = vmatmul.f32.gmra.mxu0 %v1357
    %v1757 = vpop.f32.mrf.mxu0
    %v1758 = vadd.f32 %v973, %v1757
    %1759 = vmatmul.f32.gmra.mxu0 %v1360
    %v1760 = vpop.f32.mrf.mxu0
    %v1761 = vadd.f32 %v976, %v1760
    %1762 = vmatmul.f32.gmra.mxu0 %v1363
    %v1763 = vpop.f32.mrf.mxu0
    %v1764 = vadd.f32 %v979, %v1763
    %1765 = vmatmul.f32.gmra.mxu0 %v1366
    %v1766 = vpop.f32.mrf.mxu0
    %v1767 = vadd.f32 %v982, %v1766
    %1768 = vmatmul.f32.gmra.mxu0 %v1369
    %v1769 = vpop.f32.mrf.mxu0
    %v1770 = vadd.f32 %v985, %v1769
    %1771 = vmatmul.f32.gmra.mxu0 %v1372
    %v1772 = vpop.f32.mrf.mxu0
    %v1773 = vadd.f32 %v988, %v1772
    %1774 = vmatmul.f32.gmra.mxu0 %v1375
    %v1775 = vpop.f32.mrf.mxu0
    %v1776 = vadd.f32 %v991, %v1775
    %1777 = vmatmul.f32.gmra.mxu0 %v1378
    %v1778 = vpop.f32.mrf.mxu0
    %v1779 = vadd.f32 %v994, %v1778
    %1780 = vmatmul.f32.gmra.mxu0 %v1381
    %v1781 = vpop.f32.mrf.mxu0
    %v1782 = vadd.f32 %v997, %v1781
    %1783 = vmatmul.f32.gmra.mxu0 %v1384
    %v1784 = vpop.f32.mrf.mxu0
    %v1785 = vadd.f32 %v1000, %v1784
    %1786 = vmatmul.f32.gmra.mxu0 %v1387
    %v1787 = vpop.f32.mrf.mxu0
    %v1788 = vadd.f32 %v1003, %v1787
    %1789 = vmatmul.f32.gmra.mxu0 %v1390
    %v1790 = vpop.f32.mrf.mxu0
    %v1791 = vadd.f32 %v1006, %v1790
    %1792 = vmatmul.f32.gmra.mxu0 %v1393
    %v1793 = vpop.f32.mrf.mxu0
    %v1794 = vadd.f32 %v1009, %v1793
    %1795 = vmatmul.f32.gmra.mxu0 %v1396
    %v1796 = vpop.f32.mrf.mxu0
    %v1797 = vadd.f32 %v1012, %v1796
    %1798 = vmatmul.f32.gmra.mxu0 %v1399
    %v1799 = vpop.f32.mrf.mxu0
    %v1800 = vadd.f32 %v1015, %v1799
    %1801 = vmatmul.f32.gmra.mxu0 %v1402
    %v1802 = vpop.f32.mrf.mxu0
    %v1803 = vadd.f32 %v1018, %v1802
    %1804 = vmatmul.f32.gmra.mxu0 %v1405
    %v1805 = vpop.f32.mrf.mxu0
    %v1806 = vadd.f32 %v1021, %v1805
    %1807 = vmatmul.f32.gmra.mxu0 %v1408
    %v1808 = vpop.f32.mrf.mxu0
    %v1809 = vadd.f32 %v1024, %v1808
    %1810 = vmatmul.f32.gmra.mxu0 %v1411
    %v1811 = vpop.f32.mrf.mxu0
    %v1812 = vadd.f32 %v1027, %v1811
    %1813 = vmatmul.f32.gmra.mxu0 %v1414
    %v1814 = vpop.f32.mrf.mxu0
    %v1815 = vadd.f32 %v1030, %v1814
    %1816 = vmatmul.f32.gmra.mxu0 %v1417
    %v1817 = vpop.f32.mrf.mxu0
    %v1818 = vadd.f32 %v1033, %v1817
    %1819 = vmatmul.f32.gmra.mxu0 %v1420
    %v1820 = vpop.f32.mrf.mxu0
    %v1821 = vadd.f32 %v1036, %v1820
    %1822 = vmatmul.f32.gmra.mxu0 %v1423
    %v1823 = vpop.f32.mrf.mxu0
    %v1824 = vadd.f32 %v1039, %v1823
    %1825 = vmatmul.f32.gmra.mxu0 %v1426
    %v1826 = vpop.f32.mrf.mxu0
    %v1827 = vadd.f32 %v1042, %v1826
    %1828 = vmatmul.f32.gmra.mxu0 %v1429
    %v1829 = vpop.f32.mrf.mxu0
    %v1830 = vadd.f32 %v1045, %v1829
    %1831 = vmatmul.f32.gmra.mxu0 %v1432
    %v1832 = vpop.f32.mrf.mxu0
    %v1833 = vadd.f32 %v1048, %v1832
    %1834 = vmatmul.f32.gmra.mxu0 %v1435
    %v1835 = vpop.f32.mrf.mxu0
    %v1836 = vadd.f32 %v1051, %v1835
    %1837 = vmatmul.f32.gmra.mxu0 %v1438
    %v1838 = vpop.f32.mrf.mxu0
    %v1839 = vadd.f32 %v1054, %v1838
    %1840 = vmatmul.f32.gmra.mxu0 %v1441
    %v1841 = vpop.f32.mrf.mxu0
    %v1842 = vadd.f32 %v1057, %v1841
    %1843 = vmatmul.f32.gmra.mxu0 %v1444
    %v1844 = vpop.f32.mrf.mxu0
    %v1845 = vadd.f32 %v1060, %v1844
    %1846 = vmatmul.f32.gmra.mxu0 %v1447
    %v1847 = vpop.f32.mrf.mxu0
    %v1848 = vadd.f32 %v1063, %v1847
    %1849 = vmatmul.f32.gmra.mxu0 %v1450
    %v1850 = vpop.f32.mrf.mxu0
    %v1851 = vadd.f32 %v1066, %v1850
    %1852 = vmatmul.f32.gmra.mxu0 %v1453
    %v1853 = vpop.f32.mrf.mxu0
    %v1854 = vadd.f32 %v1069, %v1853
    %1855 = vmatmul.f32.gmra.mxu0 %v1456
    %v1856 = vpop.f32.mrf.mxu0
    %v1857 = vadd.f32 %v1072, %v1856
    %1858 = vmatmul.f32.gmra.mxu0 %v1459
    %v1859 = vpop.f32.mrf.mxu0
    %v1860 = vadd.f32 %v1075, %v1859
    %1861 = vmatmul.f32.gmra.mxu0 %v1462
    %v1862 = vpop.f32.mrf.mxu0
    %v1863 = vadd.f32 %v1078, %v1862
    %1864 = vmatmul.f32.gmra.mxu0 %v1465
    %v1865 = vpop.f32.mrf.mxu0
    %v1866 = vadd.f32 %v1081, %v1865
    %1867 = vmatmul.f32.gmra.mxu0 %v1468
    %v1868 = vpop.f32.mrf.mxu0
    %v1869 = vadd.f32 %v1084, %v1868
    %1870 = vmatmul.f32.gmra.mxu0 %v1471
    %v1871 = vpop.f32.mrf.mxu0
    %v1872 = vadd.f32 %v1087, %v1871
    %1873 = vmatmul.f32.gmra.mxu0 %v1474
    %v1874 = vpop.f32.mrf.mxu0
    %v1875 = vadd.f32 %v1090, %v1874
    %1876 = vmatmul.f32.gmra.mxu0 %v1477
    %v1877 = vpop.f32.mrf.mxu0
    %v1878 = vadd.f32 %v1093, %v1877
    %1879 = vmatmul.f32.gmra.mxu0 %v1480
    %v1880 = vpop.f32.mrf.mxu0
    %v1881 = vadd.f32 %v1096, %v1880
    %1882 = vmatmul.f32.gmra.mxu0 %v1483
    %v1883 = vpop.f32.mrf.mxu0
    %v1884 = vadd.f32 %v1099, %v1883
    %1885 = vmatmul.f32.gmra.mxu0 %v1486
    %v1886 = vpop.f32.mrf.mxu0
    %v1887 = vadd.f32 %v1102, %v1886
    %1888 = vmatmul.f32.gmra.mxu0 %v1489
    %v1889 = vpop.f32.mrf.mxu0
    %v1890 = vadd.f32 %v1105, %v1889
    %1891 = vmatmul.f32.gmra.mxu0 %v1492
    %v1892 = vpop.f32.mrf.mxu0
    %v1893 = vadd.f32 %v1108, %v1892
    %1894 = vmatmul.f32.gmra.mxu0 %v1495
    %v1895 = vpop.f32.mrf.mxu0
    %v1896 = vadd.f32 %v1111, %v1895
    %1897 = vmatmul.f32.gmra.mxu0 %v1498
    %v1898 = vpop.f32.mrf.mxu0
    %v1899 = vadd.f32 %v1114, %v1898
    %1900 = vmatmul.f32.gmra.mxu0 %v1501
    %v1901 = vpop.f32.mrf.mxu0
    %v1902 = vadd.f32 %v1117, %v1901
    %1903 = vdwg.mxu0
    %s1904 = scalar_lea.vmem [#allocation2], 64
    %v1905 = vld [vmem:[%s1904] sm:$0xff]
    %v1906 = vld [vmem:[%s1904 + $0x8] sm:$0xff]
    %v1907 = vld [vmem:[%s1904 + $0x10] sm:$0xff]
    %v1908 = vld [vmem:[%s1904 + $0x18] sm:$0xff]
    %v1909 = vld [vmem:[%s1904 + $0x20] sm:$0xff]
    %v1910 = vld [vmem:[%s1904 + $0x28] sm:$0xff]
    %v1911 = vld [vmem:[%s1904 + $0x30] sm:$0xff]
    %v1912 = vld [vmem:[%s1904 + $0x38] sm:$0xff]
    %v1913 = vld [vmem:[%s1904 + $0x40] sm:$0xff]
    %v1914 = vld [vmem:[%s1904 + $0x48] sm:$0xff]
    %v1915 = vld [vmem:[%s1904 + $0x50] sm:$0xff]
    %v1916 = vld [vmem:[%s1904 + $0x58] sm:$0xff]
    %v1917 = vld [vmem:[%s1904 + $0x60] sm:$0xff]
    %v1918 = vld [vmem:[%s1904 + $0x68] sm:$0xff]
    %v1919 = vld [vmem:[%s1904 + $0x70] sm:$0xff]
    %v1920 = vld [vmem:[%s1904 + $0x78] sm:$0xff]
    %v1921 = vld [vmem:[%s1904 + $0x80] sm:$0xff]
    %v1922 = vld [vmem:[%s1904 + $0x88] sm:$0xff]
    %v1923 = vld [vmem:[%s1904 + $0x90] sm:$0xff]
    %v1924 = vld [vmem:[%s1904 + $0x98] sm:$0xff]
    %v1925 = vld [vmem:[%s1904 + $0xa0] sm:$0xff]
    %v1926 = vld [vmem:[%s1904 + $0xa8] sm:$0xff]
    %v1927 = vld [vmem:[%s1904 + $0xb0] sm:$0xff]
    %v1928 = vld [vmem:[%s1904 + $0xb8] sm:$0xff]
    %v1929 = vld [vmem:[%s1904 + $0xc0] sm:$0xff]
    %v1930 = vld [vmem:[%s1904 + $0xc8] sm:$0xff]
    %v1931 = vld [vmem:[%s1904 + $0xd0] sm:$0xff]
    %v1932 = vld [vmem:[%s1904 + $0xd8] sm:$0xff]
    %v1933 = vld [vmem:[%s1904 + $0xe0] sm:$0xff]
    %v1934 = vld [vmem:[%s1904 + $0xe8] sm:$0xff]
    %v1935 = vld [vmem:[%s1904 + $0xf0] sm:$0xff]
    %v1936 = vld [vmem:[%s1904 + $0xf8] sm:$0xff]
    %v1937 = vld [vmem:[%s1904 + $0x100] sm:$0xff]
    %v1938 = vld [vmem:[%s1904 + $0x108] sm:$0xff]
    %v1939 = vld [vmem:[%s1904 + $0x110] sm:$0xff]
    %v1940 = vld [vmem:[%s1904 + $0x118] sm:$0xff]
    %v1941 = vld [vmem:[%s1904 + $0x120] sm:$0xff]
    %v1942 = vld [vmem:[%s1904 + $0x128] sm:$0xff]
    %v1943 = vld [vmem:[%s1904 + $0x130] sm:$0xff]
    %v1944 = vld [vmem:[%s1904 + $0x138] sm:$0xff]
    %v1945 = vld [vmem:[%s1904 + $0x140] sm:$0xff]
    %v1946 = vld [vmem:[%s1904 + $0x148] sm:$0xff]
    %v1947 = vld [vmem:[%s1904 + $0x150] sm:$0xff]
    %v1948 = vld [vmem:[%s1904 + $0x158] sm:$0xff]
    %v1949 = vld [vmem:[%s1904 + $0x160] sm:$0xff]
    %v1950 = vld [vmem:[%s1904 + $0x168] sm:$0xff]
    %v1951 = vld [vmem:[%s1904 + $0x170] sm:$0xff]
    %v1952 = vld [vmem:[%s1904 + $0x178] sm:$0xff]
    %v1953 = vld [vmem:[%s1904 + $0x180] sm:$0xff]
    %v1954 = vld [vmem:[%s1904 + $0x188] sm:$0xff]
    %v1955 = vld [vmem:[%s1904 + $0x190] sm:$0xff]
    %v1956 = vld [vmem:[%s1904 + $0x198] sm:$0xff]
    %v1957 = vld [vmem:[%s1904 + $0x1a0] sm:$0xff]
    %v1958 = vld [vmem:[%s1904 + $0x1a8] sm:$0xff]
    %v1959 = vld [vmem:[%s1904 + $0x1b0] sm:$0xff]
    %v1960 = vld [vmem:[%s1904 + $0x1b8] sm:$0xff]
    %v1961 = vld [vmem:[%s1904 + $0x1c0] sm:$0xff]
    %v1962 = vld [vmem:[%s1904 + $0x1c8] sm:$0xff]
    %v1963 = vld [vmem:[%s1904 + $0x1d0] sm:$0xff]
    %v1964 = vld [vmem:[%s1904 + $0x1d8] sm:$0xff]
    %v1965 = vld [vmem:[%s1904 + $0x1e0] sm:$0xff]
    %v1966 = vld [vmem:[%s1904 + $0x1e8] sm:$0xff]
    %v1967 = vld [vmem:[%s1904 + $0x1f0] sm:$0xff]
    %v1968 = vld [vmem:[%s1904 + $0x1f8] sm:$0xff]
    %v1969 = vld [vmem:[%s1904 + $0x200] sm:$0xff]
    %v1970 = vld [vmem:[%s1904 + $0x208] sm:$0xff]
    %v1971 = vld [vmem:[%s1904 + $0x210] sm:$0xff]
    %v1972 = vld [vmem:[%s1904 + $0x218] sm:$0xff]
    %v1973 = vld [vmem:[%s1904 + $0x220] sm:$0xff]
    %v1974 = vld [vmem:[%s1904 + $0x228] sm:$0xff]
    %v1975 = vld [vmem:[%s1904 + $0x230] sm:$0xff]
    %v1976 = vld [vmem:[%s1904 + $0x238] sm:$0xff]
    %v1977 = vld [vmem:[%s1904 + $0x240] sm:$0xff]
    %v1978 = vld [vmem:[%s1904 + $0x248] sm:$0xff]
    %v1979 = vld [vmem:[%s1904 + $0x250] sm:$0xff]
    %v1980 = vld [vmem:[%s1904 + $0x258] sm:$0xff]
    %v1981 = vld [vmem:[%s1904 + $0x260] sm:$0xff]
    %v1982 = vld [vmem:[%s1904 + $0x268] sm:$0xff]
    %v1983 = vld [vmem:[%s1904 + $0x270] sm:$0xff]
    %v1984 = vld [vmem:[%s1904 + $0x278] sm:$0xff]
    %v1985 = vld [vmem:[%s1904 + $0x280] sm:$0xff]
    %v1986 = vld [vmem:[%s1904 + $0x288] sm:$0xff]
    %v1987 = vld [vmem:[%s1904 + $0x290] sm:$0xff]
    %v1988 = vld [vmem:[%s1904 + $0x298] sm:$0xff]
    %v1989 = vld [vmem:[%s1904 + $0x2a0] sm:$0xff]
    %v1990 = vld [vmem:[%s1904 + $0x2a8] sm:$0xff]
    %v1991 = vld [vmem:[%s1904 + $0x2b0] sm:$0xff]
    %v1992 = vld [vmem:[%s1904 + $0x2b8] sm:$0xff]
    %v1993 = vld [vmem:[%s1904 + $0x2c0] sm:$0xff]
    %v1994 = vld [vmem:[%s1904 + $0x2c8] sm:$0xff]
    %v1995 = vld [vmem:[%s1904 + $0x2d0] sm:$0xff]
    %v1996 = vld [vmem:[%s1904 + $0x2d8] sm:$0xff]
    %v1997 = vld [vmem:[%s1904 + $0x2e0] sm:$0xff]
    %v1998 = vld [vmem:[%s1904 + $0x2e8] sm:$0xff]
    %v1999 = vld [vmem:[%s1904 + $0x2f0] sm:$0xff]
    %v2000 = vld [vmem:[%s1904 + $0x2f8] sm:$0xff]
    %v2001 = vld [vmem:[%s1904 + $0x300] sm:$0xff]
    %v2002 = vld [vmem:[%s1904 + $0x308] sm:$0xff]
    %v2003 = vld [vmem:[%s1904 + $0x310] sm:$0xff]
    %v2004 = vld [vmem:[%s1904 + $0x318] sm:$0xff]
    %v2005 = vld [vmem:[%s1904 + $0x320] sm:$0xff]
    %v2006 = vld [vmem:[%s1904 + $0x328] sm:$0xff]
    %v2007 = vld [vmem:[%s1904 + $0x330] sm:$0xff]
    %v2008 = vld [vmem:[%s1904 + $0x338] sm:$0xff]
    %v2009 = vld [vmem:[%s1904 + $0x340] sm:$0xff]
    %v2010 = vld [vmem:[%s1904 + $0x348] sm:$0xff]
    %v2011 = vld [vmem:[%s1904 + $0x350] sm:$0xff]
    %v2012 = vld [vmem:[%s1904 + $0x358] sm:$0xff]
    %v2013 = vld [vmem:[%s1904 + $0x360] sm:$0xff]
    %v2014 = vld [vmem:[%s1904 + $0x368] sm:$0xff]
    %v2015 = vld [vmem:[%s1904 + $0x370] sm:$0xff]
    %v2016 = vld [vmem:[%s1904 + $0x378] sm:$0xff]
    %v2017 = vld [vmem:[%s1904 + $0x380] sm:$0xff]
    %v2018 = vld [vmem:[%s1904 + $0x388] sm:$0xff]
    %v2019 = vld [vmem:[%s1904 + $0x390] sm:$0xff]
    %v2020 = vld [vmem:[%s1904 + $0x398] sm:$0xff]
    %v2021 = vld [vmem:[%s1904 + $0x3a0] sm:$0xff]
    %v2022 = vld [vmem:[%s1904 + $0x3a8] sm:$0xff]
    %v2023 = vld [vmem:[%s1904 + $0x3b0] sm:$0xff]
    %v2024 = vld [vmem:[%s1904 + $0x3b8] sm:$0xff]
    %v2025 = vld [vmem:[%s1904 + $0x3c0] sm:$0xff]
    %v2026 = vld [vmem:[%s1904 + $0x3c8] sm:$0xff]
    %v2027 = vld [vmem:[%s1904 + $0x3d0] sm:$0xff]
    %v2028 = vld [vmem:[%s1904 + $0x3d8] sm:$0xff]
    %v2029 = vld [vmem:[%s1904 + $0x3e0] sm:$0xff]
    %v2030 = vld [vmem:[%s1904 + $0x3e8] sm:$0xff]
    %v2031 = vld [vmem:[%s1904 + $0x3f0] sm:$0xff]
    %v2032 = vld [vmem:[%s1904 + $0x3f8] sm:$0xff]
    %s2033 = scalar_lea.vmem [#allocation5], 224
    %v2034 = vld [vmem:[%s2033] sm:$0xff]
    %v2035 = vld [vmem:[%s2033 + $0x8] sm:$0xff]
    %v2036 = vld [vmem:[%s2033 + $0x10] sm:$0xff]
    %v2037 = vld [vmem:[%s2033 + $0x18] sm:$0xff]
    %v2038 = vld [vmem:[%s2033 + $0x20] sm:$0xff]
    %v2039 = vld [vmem:[%s2033 + $0x28] sm:$0xff]
    %v2040 = vld [vmem:[%s2033 + $0x30] sm:$0xff]
    %v2041 = vld [vmem:[%s2033 + $0x38] sm:$0xff]
    %v2042 = vld [vmem:[%s2033 + $0x40] sm:$0xff]
    %v2043 = vld [vmem:[%s2033 + $0x48] sm:$0xff]
    %v2044 = vld [vmem:[%s2033 + $0x50] sm:$0xff]
    %v2045 = vld [vmem:[%s2033 + $0x58] sm:$0xff]
    %v2046 = vld [vmem:[%s2033 + $0x60] sm:$0xff]
    %v2047 = vld [vmem:[%s2033 + $0x68] sm:$0xff]
    %v2049 = vsel %vm333, %v1905, 0
    %v2052 = vsel %vm333, %v1906, 0
    %v2055 = vsel %vm333, %v1907, 0
    %v2058 = vsel %vm333, %v1908, 0
    %v2061 = vsel %vm333, %v1909, 0
    %v2064 = vsel %vm333, %v1910, 0
    %v2067 = vsel %vm333, %v1911, 0
    %v2070 = vsel %vm333, %v1912, 0
    %v2073 = vsel %vm333, %v1913, 0
    %v2076 = vsel %vm333, %v1914, 0
    %v2079 = vsel %vm333, %v1915, 0
    %v2082 = vsel %vm333, %v1916, 0
    %v2085 = vsel %vm333, %v1917, 0
    %v2088 = vsel %vm333, %v1918, 0
    %v2091 = vsel %vm333, %v1919, 0
    %v2094 = vsel %vm333, %v1920, 0
    %v2097 = vsel %vm333, %v1921, 0
    %v2100 = vsel %vm333, %v1922, 0
    %v2103 = vsel %vm333, %v1923, 0
    %v2106 = vsel %vm333, %v1924, 0
    %v2109 = vsel %vm333, %v1925, 0
    %v2112 = vsel %vm333, %v1926, 0
    %v2115 = vsel %vm333, %v1927, 0
    %v2118 = vsel %vm333, %v1928, 0
    %v2121 = vsel %vm333, %v1929, 0
    %v2124 = vsel %vm333, %v1930, 0
    %v2127 = vsel %vm333, %v1931, 0
    %v2130 = vsel %vm333, %v1932, 0
    %v2133 = vsel %vm333, %v1933, 0
    %v2136 = vsel %vm333, %v1934, 0
    %v2139 = vsel %vm333, %v1935, 0
    %v2142 = vsel %vm333, %v1936, 0
    %v2145 = vsel %vm333, %v1937, 0
    %v2148 = vsel %vm333, %v1938, 0
    %v2151 = vsel %vm333, %v1939, 0
    %v2154 = vsel %vm333, %v1940, 0
    %v2157 = vsel %vm333, %v1941, 0
    %v2160 = vsel %vm333, %v1942, 0
    %v2163 = vsel %vm333, %v1943, 0
    %v2166 = vsel %vm333, %v1944, 0
    %v2169 = vsel %vm333, %v1945, 0
    %v2172 = vsel %vm333, %v1946, 0
    %v2175 = vsel %vm333, %v1947, 0
    %v2178 = vsel %vm333, %v1948, 0
    %v2181 = vsel %vm333, %v1949, 0
    %v2184 = vsel %vm333, %v1950, 0
    %v2187 = vsel %vm333, %v1951, 0
    %v2190 = vsel %vm333, %v1952, 0
    %v2193 = vsel %vm333, %v1953, 0
    %v2196 = vsel %vm333, %v1954, 0
    %v2199 = vsel %vm333, %v1955, 0
    %v2202 = vsel %vm333, %v1956, 0
    %v2205 = vsel %vm333, %v1957, 0
    %v2208 = vsel %vm333, %v1958, 0
    %v2211 = vsel %vm333, %v1959, 0
    %v2214 = vsel %vm333, %v1960, 0
    %v2217 = vsel %vm333, %v1961, 0
    %v2220 = vsel %vm333, %v1962, 0
    %v2223 = vsel %vm333, %v1963, 0
    %v2226 = vsel %vm333, %v1964, 0
    %v2229 = vsel %vm333, %v1965, 0
    %v2232 = vsel %vm333, %v1966, 0
    %v2235 = vsel %vm333, %v1967, 0
    %v2238 = vsel %vm333, %v1968, 0
    %v2241 = vsel %vm333, %v1969, 0
    %v2244 = vsel %vm333, %v1970, 0
    %v2247 = vsel %vm333, %v1971, 0
    %v2250 = vsel %vm333, %v1972, 0
    %v2253 = vsel %vm333, %v1973, 0
    %v2256 = vsel %vm333, %v1974, 0
    %v2259 = vsel %vm333, %v1975, 0
    %v2262 = vsel %vm333, %v1976, 0
    %v2265 = vsel %vm333, %v1977, 0
    %v2268 = vsel %vm333, %v1978, 0
    %v2271 = vsel %vm333, %v1979, 0
    %v2274 = vsel %vm333, %v1980, 0
    %v2277 = vsel %vm333, %v1981, 0
    %v2280 = vsel %vm333, %v1982, 0
    %v2283 = vsel %vm333, %v1983, 0
    %v2286 = vsel %vm333, %v1984, 0
    %v2289 = vsel %vm333, %v1985, 0
    %v2292 = vsel %vm333, %v1986, 0
    %v2295 = vsel %vm333, %v1987, 0
    %v2298 = vsel %vm333, %v1988, 0
    %v2301 = vsel %vm333, %v1989, 0
    %v2304 = vsel %vm333, %v1990, 0
    %v2307 = vsel %vm333, %v1991, 0
    %v2310 = vsel %vm333, %v1992, 0
    %v2313 = vsel %vm333, %v1993, 0
    %v2316 = vsel %vm333, %v1994, 0
    %v2319 = vsel %vm333, %v1995, 0
    %v2322 = vsel %vm333, %v1996, 0
    %v2325 = vsel %vm333, %v1997, 0
    %v2328 = vsel %vm333, %v1998, 0
    %v2331 = vsel %vm333, %v1999, 0
    %v2334 = vsel %vm333, %v2000, 0
    %v2337 = vsel %vm333, %v2001, 0
    %v2340 = vsel %vm333, %v2002, 0
    %v2343 = vsel %vm333, %v2003, 0
    %v2346 = vsel %vm333, %v2004, 0
    %v2349 = vsel %vm333, %v2005, 0
    %v2352 = vsel %vm333, %v2006, 0
    %v2355 = vsel %vm333, %v2007, 0
    %v2358 = vsel %vm333, %v2008, 0
    %v2361 = vsel %vm333, %v2009, 0
    %v2364 = vsel %vm333, %v2010, 0
    %v2367 = vsel %vm333, %v2011, 0
    %v2370 = vsel %vm333, %v2012, 0
    %v2373 = vsel %vm333, %v2013, 0
    %v2376 = vsel %vm333, %v2014, 0
    %v2379 = vsel %vm333, %v2015, 0
    %v2382 = vsel %vm333, %v2016, 0
    %v2385 = vsel %vm333, %v2017, 0
    %v2388 = vsel %vm333, %v2018, 0
    %v2391 = vsel %vm333, %v2019, 0
    %v2394 = vsel %vm333, %v2020, 0
    %v2397 = vsel %vm333, %v2021, 0
    %v2400 = vsel %vm333, %v2022, 0
    %v2403 = vsel %vm333, %v2023, 0
    %v2406 = vsel %vm333, %v2024, 0
    %v2409 = vsel %vm333, %v2025, 0
    %v2412 = vsel %vm333, %v2026, 0
    %v2415 = vsel %vm333, %v2027, 0
    %v2418 = vsel %vm333, %v2028, 0
    %v2421 = vsel %vm333, %v2029, 0
    %v2424 = vsel %vm333, %v2030, 0
    %v2427 = vsel %vm333, %v2031, 0
    %v2430 = vsel %vm333, %v2032, 0
    %2432 = vmatpush.msra.mxu0 0.0
    %2433 = vmatpush.msra.mxu0 0.0
    %2434 = vmatpush.msra.mxu0 %v2047
    %2435 = vmatpush.msra.mxu0 %v2046
    %2436 = vmatpush.msra.mxu0 %v2045
    %2437 = vmatpush.msra.mxu0 %v2044
    %2438 = vmatpush.msra.mxu0 %v2043
    %2439 = vmatpush.msra.mxu0 %v2042
    %2440 = vmatpush.msra.mxu0 %v2041
    %2441 = vmatpush.msra.mxu0 %v2040
    %2442 = vmatpush.msra.mxu0 %v2039
    %2443 = vmatpush.msra.mxu0 %v2038
    %2444 = vmatpush.msra.mxu0 %v2037
    %2445 = vmatpush.msra.mxu0 %v2036
    %2446 = vmatpush.msra.mxu0 %v2035
    %2447 = vmatpush.msra.mxu0 %v2034
    %2448 = vmatmul.f32.gmra.mxu0 %v2049
    %v2449 = vpop.f32.mrf.mxu0
    %v2450 = vadd.f32 0.0, %v2449
    %2451 = vmatmul.f32.gmra.mxu0 %v2052
    %v2452 = vpop.f32.mrf.mxu0
    %v2453 = vadd.f32 0.0, %v2452
    %2454 = vmatmul.f32.gmra.mxu0 %v2055
    %v2455 = vpop.f32.mrf.mxu0
    %v2456 = vadd.f32 0.0, %v2455
    %2457 = vmatmul.f32.gmra.mxu0 %v2058
    %v2458 = vpop.f32.mrf.mxu0
    %v2459 = vadd.f32 0.0, %v2458
    %2460 = vmatmul.f32.gmra.mxu0 %v2061
    %v2461 = vpop.f32.mrf.mxu0
    %v2462 = vadd.f32 0.0, %v2461
    %2463 = vmatmul.f32.gmra.mxu0 %v2064
    %v2464 = vpop.f32.mrf.mxu0
    %v2465 = vadd.f32 0.0, %v2464
    %2466 = vmatmul.f32.gmra.mxu0 %v2067
    %v2467 = vpop.f32.mrf.mxu0
    %v2468 = vadd.f32 0.0, %v2467
    %2469 = vmatmul.f32.gmra.mxu0 %v2070
    %v2470 = vpop.f32.mrf.mxu0
    %v2471 = vadd.f32 0.0, %v2470
    %2472 = vmatmul.f32.gmra.mxu0 %v2073
    %v2473 = vpop.f32.mrf.mxu0
    %v2474 = vadd.f32 0.0, %v2473
    %2475 = vmatmul.f32.gmra.mxu0 %v2076
    %v2476 = vpop.f32.mrf.mxu0
    %v2477 = vadd.f32 0.0, %v2476
    %2478 = vmatmul.f32.gmra.mxu0 %v2079
    %v2479 = vpop.f32.mrf.mxu0
    %v2480 = vadd.f32 0.0, %v2479
    %2481 = vmatmul.f32.gmra.mxu0 %v2082
    %v2482 = vpop.f32.mrf.mxu0
    %v2483 = vadd.f32 0.0, %v2482
    %2484 = vmatmul.f32.gmra.mxu0 %v2085
    %v2485 = vpop.f32.mrf.mxu0
    %v2486 = vadd.f32 0.0, %v2485
    %2487 = vmatmul.f32.gmra.mxu0 %v2088
    %v2488 = vpop.f32.mrf.mxu0
    %v2489 = vadd.f32 0.0, %v2488
    %2490 = vmatmul.f32.gmra.mxu0 %v2091
    %v2491 = vpop.f32.mrf.mxu0
    %v2492 = vadd.f32 0.0, %v2491
    %2493 = vmatmul.f32.gmra.mxu0 %v2094
    %v2494 = vpop.f32.mrf.mxu0
    %v2495 = vadd.f32 0.0, %v2494
    %2496 = vmatmul.f32.gmra.mxu0 %v2097
    %v2497 = vpop.f32.mrf.mxu0
    %v2498 = vadd.f32 0.0, %v2497
    %2499 = vmatmul.f32.gmra.mxu0 %v2100
    %v2500 = vpop.f32.mrf.mxu0
    %v2501 = vadd.f32 0.0, %v2500
    %2502 = vmatmul.f32.gmra.mxu0 %v2103
    %v2503 = vpop.f32.mrf.mxu0
    %v2504 = vadd.f32 0.0, %v2503
    %2505 = vmatmul.f32.gmra.mxu0 %v2106
    %v2506 = vpop.f32.mrf.mxu0
    %v2507 = vadd.f32 0.0, %v2506
    %2508 = vmatmul.f32.gmra.mxu0 %v2109
    %v2509 = vpop.f32.mrf.mxu0
    %v2510 = vadd.f32 0.0, %v2509
    %2511 = vmatmul.f32.gmra.mxu0 %v2112
    %v2512 = vpop.f32.mrf.mxu0
    %v2513 = vadd.f32 0.0, %v2512
    %2514 = vmatmul.f32.gmra.mxu0 %v2115
    %v2515 = vpop.f32.mrf.mxu0
    %v2516 = vadd.f32 0.0, %v2515
    %2517 = vmatmul.f32.gmra.mxu0 %v2118
    %v2518 = vpop.f32.mrf.mxu0
    %v2519 = vadd.f32 0.0, %v2518
    %2520 = vmatmul.f32.gmra.mxu0 %v2121
    %v2521 = vpop.f32.mrf.mxu0
    %v2522 = vadd.f32 0.0, %v2521
    %2523 = vmatmul.f32.gmra.mxu0 %v2124
    %v2524 = vpop.f32.mrf.mxu0
    %v2525 = vadd.f32 0.0, %v2524
    %2526 = vmatmul.f32.gmra.mxu0 %v2127
    %v2527 = vpop.f32.mrf.mxu0
    %v2528 = vadd.f32 0.0, %v2527
    %2529 = vmatmul.f32.gmra.mxu0 %v2130
    %v2530 = vpop.f32.mrf.mxu0
    %v2531 = vadd.f32 0.0, %v2530
    %2532 = vmatmul.f32.gmra.mxu0 %v2133
    %v2533 = vpop.f32.mrf.mxu0
    %v2534 = vadd.f32 0.0, %v2533
    %2535 = vmatmul.f32.gmra.mxu0 %v2136
    %v2536 = vpop.f32.mrf.mxu0
    %v2537 = vadd.f32 0.0, %v2536
    %2538 = vmatmul.f32.gmra.mxu0 %v2139
    %v2539 = vpop.f32.mrf.mxu0
    %v2540 = vadd.f32 0.0, %v2539
    %2541 = vmatmul.f32.gmra.mxu0 %v2142
    %v2542 = vpop.f32.mrf.mxu0
    %v2543 = vadd.f32 0.0, %v2542
    %2544 = vmatmul.f32.gmra.mxu0 %v2145
    %v2545 = vpop.f32.mrf.mxu0
    %v2546 = vadd.f32 0.0, %v2545
    %2547 = vmatmul.f32.gmra.mxu0 %v2148
    %v2548 = vpop.f32.mrf.mxu0
    %v2549 = vadd.f32 0.0, %v2548
    %2550 = vmatmul.f32.gmra.mxu0 %v2151
    %v2551 = vpop.f32.mrf.mxu0
    %v2552 = vadd.f32 0.0, %v2551
    %2553 = vmatmul.f32.gmra.mxu0 %v2154
    %v2554 = vpop.f32.mrf.mxu0
    %v2555 = vadd.f32 0.0, %v2554
    %2556 = vmatmul.f32.gmra.mxu0 %v2157
    %v2557 = vpop.f32.mrf.mxu0
    %v2558 = vadd.f32 0.0, %v2557
    %2559 = vmatmul.f32.gmra.mxu0 %v2160
    %v2560 = vpop.f32.mrf.mxu0
    %v2561 = vadd.f32 0.0, %v2560
    %2562 = vmatmul.f32.gmra.mxu0 %v2163
    %v2563 = vpop.f32.mrf.mxu0
    %v2564 = vadd.f32 0.0, %v2563
    %2565 = vmatmul.f32.gmra.mxu0 %v2166
    %v2566 = vpop.f32.mrf.mxu0
    %v2567 = vadd.f32 0.0, %v2566
    %2568 = vmatmul.f32.gmra.mxu0 %v2169
    %v2569 = vpop.f32.mrf.mxu0
    %v2570 = vadd.f32 0.0, %v2569
    %2571 = vmatmul.f32.gmra.mxu0 %v2172
    %v2572 = vpop.f32.mrf.mxu0
    %v2573 = vadd.f32 0.0, %v2572
    %2574 = vmatmul.f32.gmra.mxu0 %v2175
    %v2575 = vpop.f32.mrf.mxu0
    %v2576 = vadd.f32 0.0, %v2575
    %2577 = vmatmul.f32.gmra.mxu0 %v2178
    %v2578 = vpop.f32.mrf.mxu0
    %v2579 = vadd.f32 0.0, %v2578
    %2580 = vmatmul.f32.gmra.mxu0 %v2181
    %v2581 = vpop.f32.mrf.mxu0
    %v2582 = vadd.f32 0.0, %v2581
    %2583 = vmatmul.f32.gmra.mxu0 %v2184
    %v2584 = vpop.f32.mrf.mxu0
    %v2585 = vadd.f32 0.0, %v2584
    %2586 = vmatmul.f32.gmra.mxu0 %v2187
    %v2587 = vpop.f32.mrf.mxu0
    %v2588 = vadd.f32 0.0, %v2587
    %2589 = vmatmul.f32.gmra.mxu0 %v2190
    %v2590 = vpop.f32.mrf.mxu0
    %v2591 = vadd.f32 0.0, %v2590
    %2592 = vmatmul.f32.gmra.mxu0 %v2193
    %v2593 = vpop.f32.mrf.mxu0
    %v2594 = vadd.f32 0.0, %v2593
    %2595 = vmatmul.f32.gmra.mxu0 %v2196
    %v2596 = vpop.f32.mrf.mxu0
    %v2597 = vadd.f32 0.0, %v2596
    %2598 = vmatmul.f32.gmra.mxu0 %v2199
    %v2599 = vpop.f32.mrf.mxu0
    %v2600 = vadd.f32 0.0, %v2599
    %2601 = vmatmul.f32.gmra.mxu0 %v2202
    %v2602 = vpop.f32.mrf.mxu0
    %v2603 = vadd.f32 0.0, %v2602
    %2604 = vmatmul.f32.gmra.mxu0 %v2205
    %v2605 = vpop.f32.mrf.mxu0
    %v2606 = vadd.f32 0.0, %v2605
    %2607 = vmatmul.f32.gmra.mxu0 %v2208
    %v2608 = vpop.f32.mrf.mxu0
    %v2609 = vadd.f32 0.0, %v2608
    %2610 = vmatmul.f32.gmra.mxu0 %v2211
    %v2611 = vpop.f32.mrf.mxu0
    %v2612 = vadd.f32 0.0, %v2611
    %2613 = vmatmul.f32.gmra.mxu0 %v2214
    %v2614 = vpop.f32.mrf.mxu0
    %v2615 = vadd.f32 0.0, %v2614
    %2616 = vmatmul.f32.gmra.mxu0 %v2217
    %v2617 = vpop.f32.mrf.mxu0
    %v2618 = vadd.f32 0.0, %v2617
    %2619 = vmatmul.f32.gmra.mxu0 %v2220
    %v2620 = vpop.f32.mrf.mxu0
    %v2621 = vadd.f32 0.0, %v2620
    %2622 = vmatmul.f32.gmra.mxu0 %v2223
    %v2623 = vpop.f32.mrf.mxu0
    %v2624 = vadd.f32 0.0, %v2623
    %2625 = vmatmul.f32.gmra.mxu0 %v2226
    %v2626 = vpop.f32.mrf.mxu0
    %v2627 = vadd.f32 0.0, %v2626
    %2628 = vmatmul.f32.gmra.mxu0 %v2229
    %v2629 = vpop.f32.mrf.mxu0
    %v2630 = vadd.f32 0.0, %v2629
    %2631 = vmatmul.f32.gmra.mxu0 %v2232
    %v2632 = vpop.f32.mrf.mxu0
    %v2633 = vadd.f32 0.0, %v2632
    %2634 = vmatmul.f32.gmra.mxu0 %v2235
    %v2635 = vpop.f32.mrf.mxu0
    %v2636 = vadd.f32 0.0, %v2635
    %2637 = vmatmul.f32.gmra.mxu0 %v2238
    %v2638 = vpop.f32.mrf.mxu0
    %v2639 = vadd.f32 0.0, %v2638
    %2640 = vmatmul.f32.gmra.mxu0 %v2241
    %v2641 = vpop.f32.mrf.mxu0
    %v2642 = vadd.f32 0.0, %v2641
    %2643 = vmatmul.f32.gmra.mxu0 %v2244
    %v2644 = vpop.f32.mrf.mxu0
    %v2645 = vadd.f32 0.0, %v2644
    %2646 = vmatmul.f32.gmra.mxu0 %v2247
    %v2647 = vpop.f32.mrf.mxu0
    %v2648 = vadd.f32 0.0, %v2647
    %2649 = vmatmul.f32.gmra.mxu0 %v2250
    %v2650 = vpop.f32.mrf.mxu0
    %v2651 = vadd.f32 0.0, %v2650
    %2652 = vmatmul.f32.gmra.mxu0 %v2253
    %v2653 = vpop.f32.mrf.mxu0
    %v2654 = vadd.f32 0.0, %v2653
    %2655 = vmatmul.f32.gmra.mxu0 %v2256
    %v2656 = vpop.f32.mrf.mxu0
    %v2657 = vadd.f32 0.0, %v2656
    %2658 = vmatmul.f32.gmra.mxu0 %v2259
    %v2659 = vpop.f32.mrf.mxu0
    %v2660 = vadd.f32 0.0, %v2659
    %2661 = vmatmul.f32.gmra.mxu0 %v2262
    %v2662 = vpop.f32.mrf.mxu0
    %v2663 = vadd.f32 0.0, %v2662
    %2664 = vmatmul.f32.gmra.mxu0 %v2265
    %v2665 = vpop.f32.mrf.mxu0
    %v2666 = vadd.f32 0.0, %v2665
    %2667 = vmatmul.f32.gmra.mxu0 %v2268
    %v2668 = vpop.f32.mrf.mxu0
    %v2669 = vadd.f32 0.0, %v2668
    %2670 = vmatmul.f32.gmra.mxu0 %v2271
    %v2671 = vpop.f32.mrf.mxu0
    %v2672 = vadd.f32 0.0, %v2671
    %2673 = vmatmul.f32.gmra.mxu0 %v2274
    %v2674 = vpop.f32.mrf.mxu0
    %v2675 = vadd.f32 0.0, %v2674
    %2676 = vmatmul.f32.gmra.mxu0 %v2277
    %v2677 = vpop.f32.mrf.mxu0
    %v2678 = vadd.f32 0.0, %v2677
    %2679 = vmatmul.f32.gmra.mxu0 %v2280
    %v2680 = vpop.f32.mrf.mxu0
    %v2681 = vadd.f32 0.0, %v2680
    %2682 = vmatmul.f32.gmra.mxu0 %v2283
    %v2683 = vpop.f32.mrf.mxu0
    %v2684 = vadd.f32 0.0, %v2683
    %2685 = vmatmul.f32.gmra.mxu0 %v2286
    %v2686 = vpop.f32.mrf.mxu0
    %v2687 = vadd.f32 0.0, %v2686
    %2688 = vmatmul.f32.gmra.mxu0 %v2289
    %v2689 = vpop.f32.mrf.mxu0
    %v2690 = vadd.f32 0.0, %v2689
    %2691 = vmatmul.f32.gmra.mxu0 %v2292
    %v2692 = vpop.f32.mrf.mxu0
    %v2693 = vadd.f32 0.0, %v2692
    %2694 = vmatmul.f32.gmra.mxu0 %v2295
    %v2695 = vpop.f32.mrf.mxu0
    %v2696 = vadd.f32 0.0, %v2695
    %2697 = vmatmul.f32.gmra.mxu0 %v2298
    %v2698 = vpop.f32.mrf.mxu0
    %v2699 = vadd.f32 0.0, %v2698
    %2700 = vmatmul.f32.gmra.mxu0 %v2301
    %v2701 = vpop.f32.mrf.mxu0
    %v2702 = vadd.f32 0.0, %v2701
    %2703 = vmatmul.f32.gmra.mxu0 %v2304
    %v2704 = vpop.f32.mrf.mxu0
    %v2705 = vadd.f32 0.0, %v2704
    %2706 = vmatmul.f32.gmra.mxu0 %v2307
    %v2707 = vpop.f32.mrf.mxu0
    %v2708 = vadd.f32 0.0, %v2707
    %2709 = vmatmul.f32.gmra.mxu0 %v2310
    %v2710 = vpop.f32.mrf.mxu0
    %v2711 = vadd.f32 0.0, %v2710
    %2712 = vmatmul.f32.gmra.mxu0 %v2313
    %v2713 = vpop.f32.mrf.mxu0
    %v2714 = vadd.f32 0.0, %v2713
    %2715 = vmatmul.f32.gmra.mxu0 %v2316
    %v2716 = vpop.f32.mrf.mxu0
    %v2717 = vadd.f32 0.0, %v2716
    %2718 = vmatmul.f32.gmra.mxu0 %v2319
    %v2719 = vpop.f32.mrf.mxu0
    %v2720 = vadd.f32 0.0, %v2719
    %2721 = vmatmul.f32.gmra.mxu0 %v2322
    %v2722 = vpop.f32.mrf.mxu0
    %v2723 = vadd.f32 0.0, %v2722
    %2724 = vmatmul.f32.gmra.mxu0 %v2325
    %v2725 = vpop.f32.mrf.mxu0
    %v2726 = vadd.f32 0.0, %v2725
    %2727 = vmatmul.f32.gmra.mxu0 %v2328
    %v2728 = vpop.f32.mrf.mxu0
    %v2729 = vadd.f32 0.0, %v2728
    %2730 = vmatmul.f32.gmra.mxu0 %v2331
    %v2731 = vpop.f32.mrf.mxu0
    %v2732 = vadd.f32 0.0, %v2731
    %2733 = vmatmul.f32.gmra.mxu0 %v2334
    %v2734 = vpop.f32.mrf.mxu0
    %v2735 = vadd.f32 0.0, %v2734
    %2736 = vmatmul.f32.gmra.mxu0 %v2337
    %v2737 = vpop.f32.mrf.mxu0
    %v2738 = vadd.f32 0.0, %v2737
    %2739 = vmatmul.f32.gmra.mxu0 %v2340
    %v2740 = vpop.f32.mrf.mxu0
    %v2741 = vadd.f32 0.0, %v2740
    %2742 = vmatmul.f32.gmra.mxu0 %v2343
    %v2743 = vpop.f32.mrf.mxu0
    %v2744 = vadd.f32 0.0, %v2743
    %2745 = vmatmul.f32.gmra.mxu0 %v2346
    %v2746 = vpop.f32.mrf.mxu0
    %v2747 = vadd.f32 0.0, %v2746
    %2748 = vmatmul.f32.gmra.mxu0 %v2349
    %v2749 = vpop.f32.mrf.mxu0
    %v2750 = vadd.f32 0.0, %v2749
    %2751 = vmatmul.f32.gmra.mxu0 %v2352
    %v2752 = vpop.f32.mrf.mxu0
    %v2753 = vadd.f32 0.0, %v2752
    %2754 = vmatmul.f32.gmra.mxu0 %v2355
    %v2755 = vpop.f32.mrf.mxu0
    %v2756 = vadd.f32 0.0, %v2755
    %2757 = vmatmul.f32.gmra.mxu0 %v2358
    %v2758 = vpop.f32.mrf.mxu0
    %v2759 = vadd.f32 0.0, %v2758
    %2760 = vmatmul.f32.gmra.mxu0 %v2361
    %v2761 = vpop.f32.mrf.mxu0
    %v2762 = vadd.f32 0.0, %v2761
    %2763 = vmatmul.f32.gmra.mxu0 %v2364
    %v2764 = vpop.f32.mrf.mxu0
    %v2765 = vadd.f32 0.0, %v2764
    %2766 = vmatmul.f32.gmra.mxu0 %v2367
    %v2767 = vpop.f32.mrf.mxu0
    %v2768 = vadd.f32 0.0, %v2767
    %2769 = vmatmul.f32.gmra.mxu0 %v2370
    %v2770 = vpop.f32.mrf.mxu0
    %v2771 = vadd.f32 0.0, %v2770
    %2772 = vmatmul.f32.gmra.mxu0 %v2373
    %v2773 = vpop.f32.mrf.mxu0
    %v2774 = vadd.f32 0.0, %v2773
    %2775 = vmatmul.f32.gmra.mxu0 %v2376
    %v2776 = vpop.f32.mrf.mxu0
    %v2777 = vadd.f32 0.0, %v2776
    %2778 = vmatmul.f32.gmra.mxu0 %v2379
    %v2779 = vpop.f32.mrf.mxu0
    %v2780 = vadd.f32 0.0, %v2779
    %2781 = vmatmul.f32.gmra.mxu0 %v2382
    %v2782 = vpop.f32.mrf.mxu0
    %v2783 = vadd.f32 0.0, %v2782
    %2784 = vmatmul.f32.gmra.mxu0 %v2385
    %v2785 = vpop.f32.mrf.mxu0
    %v2786 = vadd.f32 0.0, %v2785
    %2787 = vmatmul.f32.gmra.mxu0 %v2388
    %v2788 = vpop.f32.mrf.mxu0
    %v2789 = vadd.f32 0.0, %v2788
    %2790 = vmatmul.f32.gmra.mxu0 %v2391
    %v2791 = vpop.f32.mrf.mxu0
    %v2792 = vadd.f32 0.0, %v2791
    %2793 = vmatmul.f32.gmra.mxu0 %v2394
    %v2794 = vpop.f32.mrf.mxu0
    %v2795 = vadd.f32 0.0, %v2794
    %2796 = vmatmul.f32.gmra.mxu0 %v2397
    %v2797 = vpop.f32.mrf.mxu0
    %v2798 = vadd.f32 0.0, %v2797
    %2799 = vmatmul.f32.gmra.mxu0 %v2400
    %v2800 = vpop.f32.mrf.mxu0
    %v2801 = vadd.f32 0.0, %v2800
    %2802 = vmatmul.f32.gmra.mxu0 %v2403
    %v2803 = vpop.f32.mrf.mxu0
    %v2804 = vadd.f32 0.0, %v2803
    %2805 = vmatmul.f32.gmra.mxu0 %v2406
    %v2806 = vpop.f32.mrf.mxu0
    %v2807 = vadd.f32 0.0, %v2806
    %2808 = vmatmul.f32.gmra.mxu0 %v2409
    %v2809 = vpop.f32.mrf.mxu0
    %v2810 = vadd.f32 0.0, %v2809
    %2811 = vmatmul.f32.gmra.mxu0 %v2412
    %v2812 = vpop.f32.mrf.mxu0
    %v2813 = vadd.f32 0.0, %v2812
    %2814 = vmatmul.f32.gmra.mxu0 %v2415
    %v2815 = vpop.f32.mrf.mxu0
    %v2816 = vadd.f32 0.0, %v2815
    %2817 = vmatmul.f32.gmra.mxu0 %v2418
    %v2818 = vpop.f32.mrf.mxu0
    %v2819 = vadd.f32 0.0, %v2818
    %2820 = vmatmul.f32.gmra.mxu0 %v2421
    %v2821 = vpop.f32.mrf.mxu0
    %v2822 = vadd.f32 0.0, %v2821
    %2823 = vmatmul.f32.gmra.mxu0 %v2424
    %v2824 = vpop.f32.mrf.mxu0
    %v2825 = vadd.f32 0.0, %v2824
    %2826 = vmatmul.f32.gmra.mxu0 %v2427
    %v2827 = vpop.f32.mrf.mxu0
    %v2828 = vadd.f32 0.0, %v2827
    %2829 = vmatmul.f32.gmra.mxu0 %v2430
    %v2830 = vpop.f32.mrf.mxu0
    %v2831 = vadd.f32 0.0, %v2830
    %2832 = vdwg.mxu0
    %v2833 = vadd.f32 %v1521, %v2450
    %v2834 = vadd.f32 %v1524, %v2453
    %v2835 = vadd.f32 %v1527, %v2456
    %v2836 = vadd.f32 %v1530, %v2459
    %v2837 = vadd.f32 %v1533, %v2462
    %v2838 = vadd.f32 %v1536, %v2465
    %v2839 = vadd.f32 %v1539, %v2468
    %v2840 = vadd.f32 %v1542, %v2471
    %v2841 = vadd.f32 %v1545, %v2474
    %v2842 = vadd.f32 %v1548, %v2477
    %v2843 = vadd.f32 %v1551, %v2480
    %v2844 = vadd.f32 %v1554, %v2483
    %v2845 = vadd.f32 %v1557, %v2486
    %v2846 = vadd.f32 %v1560, %v2489
    %v2847 = vadd.f32 %v1563, %v2492
    %v2848 = vadd.f32 %v1566, %v2495
    %v2849 = vadd.f32 %v1569, %v2498
    %v2850 = vadd.f32 %v1572, %v2501
    %v2851 = vadd.f32 %v1575, %v2504
    %v2852 = vadd.f32 %v1578, %v2507
    %v2853 = vadd.f32 %v1581, %v2510
    %v2854 = vadd.f32 %v1584, %v2513
    %v2855 = vadd.f32 %v1587, %v2516
    %v2856 = vadd.f32 %v1590, %v2519
    %v2857 = vadd.f32 %v1593, %v2522
    %v2858 = vadd.f32 %v1596, %v2525
    %v2859 = vadd.f32 %v1599, %v2528
    %v2860 = vadd.f32 %v1602, %v2531
    %v2861 = vadd.f32 %v1605, %v2534
    %v2862 = vadd.f32 %v1608, %v2537
    %v2863 = vadd.f32 %v1611, %v2540
    %v2864 = vadd.f32 %v1614, %v2543
    %v2865 = vadd.f32 %v1617, %v2546
    %v2866 = vadd.f32 %v1620, %v2549
    %v2867 = vadd.f32 %v1623, %v2552
    %v2868 = vadd.f32 %v1626, %v2555
    %v2869 = vadd.f32 %v1629, %v2558
    %v2870 = vadd.f32 %v1632, %v2561
    %v2871 = vadd.f32 %v1635, %v2564
    %v2872 = vadd.f32 %v1638, %v2567
    %v2873 = vadd.f32 %v1641, %v2570
    %v2874 = vadd.f32 %v1644, %v2573
    %v2875 = vadd.f32 %v1647, %v2576
    %v2876 = vadd.f32 %v1650, %v2579
    %v2877 = vadd.f32 %v1653, %v2582
    %v2878 = vadd.f32 %v1656, %v2585
    %v2879 = vadd.f32 %v1659, %v2588
    %v2880 = vadd.f32 %v1662, %v2591
    %v2881 = vadd.f32 %v1665, %v2594
    %v2882 = vadd.f32 %v1668, %v2597
    %v2883 = vadd.f32 %v1671, %v2600
    %v2884 = vadd.f32 %v1674, %v2603
    %v2885 = vadd.f32 %v1677, %v2606
    %v2886 = vadd.f32 %v1680, %v2609
    %v2887 = vadd.f32 %v1683, %v2612
    %v2888 = vadd.f32 %v1686, %v2615
    %v2889 = vadd.f32 %v1689, %v2618
    %v2890 = vadd.f32 %v1692, %v2621
    %v2891 = vadd.f32 %v1695, %v2624
    %v2892 = vadd.f32 %v1698, %v2627
    %v2893 = vadd.f32 %v1701, %v2630
    %v2894 = vadd.f32 %v1704, %v2633
    %v2895 = vadd.f32 %v1707, %v2636
    %v2896 = vadd.f32 %v1710, %v2639
    %v2897 = vadd.f32 %v1713, %v2642
    %v2898 = vadd.f32 %v1716, %v2645
    %v2899 = vadd.f32 %v1719, %v2648
    %v2900 = vadd.f32 %v1722, %v2651
    %v2901 = vadd.f32 %v1725, %v2654
    %v2902 = vadd.f32 %v1728, %v2657
    %v2903 = vadd.f32 %v1731, %v2660
    %v2904 = vadd.f32 %v1734, %v2663
    %v2905 = vadd.f32 %v1737, %v2666
    %v2906 = vadd.f32 %v1740, %v2669
    %v2907 = vadd.f32 %v1743, %v2672
    %v2908 = vadd.f32 %v1746, %v2675
    %v2909 = vadd.f32 %v1749, %v2678
    %v2910 = vadd.f32 %v1752, %v2681
    %v2911 = vadd.f32 %v1755, %v2684
    %v2912 = vadd.f32 %v1758, %v2687
    %v2913 = vadd.f32 %v1761, %v2690
    %v2914 = vadd.f32 %v1764, %v2693
    %v2915 = vadd.f32 %v1767, %v2696
    %v2916 = vadd.f32 %v1770, %v2699
    %v2917 = vadd.f32 %v1773, %v2702
    %v2918 = vadd.f32 %v1776, %v2705
    %v2919 = vadd.f32 %v1779, %v2708
    %v2920 = vadd.f32 %v1782, %v2711
    %v2921 = vadd.f32 %v1785, %v2714
    %v2922 = vadd.f32 %v1788, %v2717
    %v2923 = vadd.f32 %v1791, %v2720
    %v2924 = vadd.f32 %v1794, %v2723
    %v2925 = vadd.f32 %v1797, %v2726
    %v2926 = vadd.f32 %v1800, %v2729
    %v2927 = vadd.f32 %v1803, %v2732
    %v2928 = vadd.f32 %v1806, %v2735
    %v2929 = vadd.f32 %v1809, %v2738
    %v2930 = vadd.f32 %v1812, %v2741
    %v2931 = vadd.f32 %v1815, %v2744
    %v2932 = vadd.f32 %v1818, %v2747
    %v2933 = vadd.f32 %v1821, %v2750
    %v2934 = vadd.f32 %v1824, %v2753
    %v2935 = vadd.f32 %v1827, %v2756
    %v2936 = vadd.f32 %v1830, %v2759
    %v2937 = vadd.f32 %v1833, %v2762
    %v2938 = vadd.f32 %v1836, %v2765
    %v2939 = vadd.f32 %v1839, %v2768
    %v2940 = vadd.f32 %v1842, %v2771
    %v2941 = vadd.f32 %v1845, %v2774
    %v2942 = vadd.f32 %v1848, %v2777
    %v2943 = vadd.f32 %v1851, %v2780
    %v2944 = vadd.f32 %v1854, %v2783
    %v2945 = vadd.f32 %v1857, %v2786
    %v2946 = vadd.f32 %v1860, %v2789
    %v2947 = vadd.f32 %v1863, %v2792
    %v2948 = vadd.f32 %v1866, %v2795
    %v2949 = vadd.f32 %v1869, %v2798
    %v2950 = vadd.f32 %v1872, %v2801
    %v2951 = vadd.f32 %v1875, %v2804
    %v2952 = vadd.f32 %v1878, %v2807
    %v2953 = vadd.f32 %v1881, %v2810
    %v2954 = vadd.f32 %v1884, %v2813
    %v2955 = vadd.f32 %v1887, %v2816
    %v2956 = vadd.f32 %v1890, %v2819
    %v2957 = vadd.f32 %v1893, %v2822
    %v2958 = vadd.f32 %v1896, %v2825
    %v2959 = vadd.f32 %v1899, %v2828
    %v2960 = vadd.f32 %v1902, %v2831
    %s2961 = scalar_lea.vmem [#allocation2], 96
    %v2962 = vld [vmem:[%s2961] sm:$0xff]
    %v2963 = vld [vmem:[%s2961 + $0x8] sm:$0xff]
    %v2964 = vld [vmem:[%s2961 + $0x10] sm:$0xff]
    %v2965 = vld [vmem:[%s2961 + $0x18] sm:$0xff]
    %v2966 = vld [vmem:[%s2961 + $0x20] sm:$0xff]
    %v2967 = vld [vmem:[%s2961 + $0x28] sm:$0xff]
    %v2968 = vld [vmem:[%s2961 + $0x30] sm:$0xff]
    %v2969 = vld [vmem:[%s2961 + $0x38] sm:$0xff]
    %v2970 = vld [vmem:[%s2961 + $0x40] sm:$0xff]
    %v2971 = vld [vmem:[%s2961 + $0x48] sm:$0xff]
    %v2972 = vld [vmem:[%s2961 + $0x50] sm:$0xff]
    %v2973 = vld [vmem:[%s2961 + $0x58] sm:$0xff]
    %v2974 = vld [vmem:[%s2961 + $0x60] sm:$0xff]
    %v2975 = vld [vmem:[%s2961 + $0x68] sm:$0xff]
    %v2976 = vld [vmem:[%s2961 + $0x70] sm:$0xff]
    %v2977 = vld [vmem:[%s2961 + $0x78] sm:$0xff]
    %v2978 = vld [vmem:[%s2961 + $0x80] sm:$0xff]
    %v2979 = vld [vmem:[%s2961 + $0x88] sm:$0xff]
    %v2980 = vld [vmem:[%s2961 + $0x90] sm:$0xff]
    %v2981 = vld [vmem:[%s2961 + $0x98] sm:$0xff]
    %v2982 = vld [vmem:[%s2961 + $0xa0] sm:$0xff]
    %v2983 = vld [vmem:[%s2961 + $0xa8] sm:$0xff]
    %v2984 = vld [vmem:[%s2961 + $0xb0] sm:$0xff]
    %v2985 = vld [vmem:[%s2961 + $0xb8] sm:$0xff]
    %v2986 = vld [vmem:[%s2961 + $0xc0] sm:$0xff]
    %v2987 = vld [vmem:[%s2961 + $0xc8] sm:$0xff]
    %v2988 = vld [vmem:[%s2961 + $0xd0] sm:$0xff]
    %v2989 = vld [vmem:[%s2961 + $0xd8] sm:$0xff]
    %v2990 = vld [vmem:[%s2961 + $0xe0] sm:$0xff]
    %v2991 = vld [vmem:[%s2961 + $0xe8] sm:$0xff]
    %v2992 = vld [vmem:[%s2961 + $0xf0] sm:$0xff]
    %v2993 = vld [vmem:[%s2961 + $0xf8] sm:$0xff]
    %v2994 = vld [vmem:[%s2961 + $0x100] sm:$0xff]
    %v2995 = vld [vmem:[%s2961 + $0x108] sm:$0xff]
    %v2996 = vld [vmem:[%s2961 + $0x110] sm:$0xff]
    %v2997 = vld [vmem:[%s2961 + $0x118] sm:$0xff]
    %v2998 = vld [vmem:[%s2961 + $0x120] sm:$0xff]
    %v2999 = vld [vmem:[%s2961 + $0x128] sm:$0xff]
    %v3000 = vld [vmem:[%s2961 + $0x130] sm:$0xff]
    %v3001 = vld [vmem:[%s2961 + $0x138] sm:$0xff]
    %v3002 = vld [vmem:[%s2961 + $0x140] sm:$0xff]
    %v3003 = vld [vmem:[%s2961 + $0x148] sm:$0xff]
    %v3004 = vld [vmem:[%s2961 + $0x150] sm:$0xff]
    %v3005 = vld [vmem:[%s2961 + $0x158] sm:$0xff]
    %v3006 = vld [vmem:[%s2961 + $0x160] sm:$0xff]
    %v3007 = vld [vmem:[%s2961 + $0x168] sm:$0xff]
    %v3008 = vld [vmem:[%s2961 + $0x170] sm:$0xff]
    %v3009 = vld [vmem:[%s2961 + $0x178] sm:$0xff]
    %v3010 = vld [vmem:[%s2961 + $0x180] sm:$0xff]
    %v3011 = vld [vmem:[%s2961 + $0x188] sm:$0xff]
    %v3012 = vld [vmem:[%s2961 + $0x190] sm:$0xff]
    %v3013 = vld [vmem:[%s2961 + $0x198] sm:$0xff]
    %v3014 = vld [vmem:[%s2961 + $0x1a0] sm:$0xff]
    %v3015 = vld [vmem:[%s2961 + $0x1a8] sm:$0xff]
    %v3016 = vld [vmem:[%s2961 + $0x1b0] sm:$0xff]
    %v3017 = vld [vmem:[%s2961 + $0x1b8] sm:$0xff]
    %v3018 = vld [vmem:[%s2961 + $0x1c0] sm:$0xff]
    %v3019 = vld [vmem:[%s2961 + $0x1c8] sm:$0xff]
    %v3020 = vld [vmem:[%s2961 + $0x1d0] sm:$0xff]
    %v3021 = vld [vmem:[%s2961 + $0x1d8] sm:$0xff]
    %v3022 = vld [vmem:[%s2961 + $0x1e0] sm:$0xff]
    %v3023 = vld [vmem:[%s2961 + $0x1e8] sm:$0xff]
    %v3024 = vld [vmem:[%s2961 + $0x1f0] sm:$0xff]
    %v3025 = vld [vmem:[%s2961 + $0x1f8] sm:$0xff]
    %v3026 = vld [vmem:[%s2961 + $0x200] sm:$0xff]
    %v3027 = vld [vmem:[%s2961 + $0x208] sm:$0xff]
    %v3028 = vld [vmem:[%s2961 + $0x210] sm:$0xff]
    %v3029 = vld [vmem:[%s2961 + $0x218] sm:$0xff]
    %v3030 = vld [vmem:[%s2961 + $0x220] sm:$0xff]
    %v3031 = vld [vmem:[%s2961 + $0x228] sm:$0xff]
    %v3032 = vld [vmem:[%s2961 + $0x230] sm:$0xff]
    %v3033 = vld [vmem:[%s2961 + $0x238] sm:$0xff]
    %v3034 = vld [vmem:[%s2961 + $0x240] sm:$0xff]
    %v3035 = vld [vmem:[%s2961 + $0x248] sm:$0xff]
    %v3036 = vld [vmem:[%s2961 + $0x250] sm:$0xff]
    %v3037 = vld [vmem:[%s2961 + $0x258] sm:$0xff]
    %v3038 = vld [vmem:[%s2961 + $0x260] sm:$0xff]
    %v3039 = vld [vmem:[%s2961 + $0x268] sm:$0xff]
    %v3040 = vld [vmem:[%s2961 + $0x270] sm:$0xff]
    %v3041 = vld [vmem:[%s2961 + $0x278] sm:$0xff]
    %v3042 = vld [vmem:[%s2961 + $0x280] sm:$0xff]
    %v3043 = vld [vmem:[%s2961 + $0x288] sm:$0xff]
    %v3044 = vld [vmem:[%s2961 + $0x290] sm:$0xff]
    %v3045 = vld [vmem:[%s2961 + $0x298] sm:$0xff]
    %v3046 = vld [vmem:[%s2961 + $0x2a0] sm:$0xff]
    %v3047 = vld [vmem:[%s2961 + $0x2a8] sm:$0xff]
    %v3048 = vld [vmem:[%s2961 + $0x2b0] sm:$0xff]
    %v3049 = vld [vmem:[%s2961 + $0x2b8] sm:$0xff]
    %v3050 = vld [vmem:[%s2961 + $0x2c0] sm:$0xff]
    %v3051 = vld [vmem:[%s2961 + $0x2c8] sm:$0xff]
    %v3052 = vld [vmem:[%s2961 + $0x2d0] sm:$0xff]
    %v3053 = vld [vmem:[%s2961 + $0x2d8] sm:$0xff]
    %v3054 = vld [vmem:[%s2961 + $0x2e0] sm:$0xff]
    %v3055 = vld [vmem:[%s2961 + $0x2e8] sm:$0xff]
    %v3056 = vld [vmem:[%s2961 + $0x2f0] sm:$0xff]
    %v3057 = vld [vmem:[%s2961 + $0x2f8] sm:$0xff]
    %v3058 = vld [vmem:[%s2961 + $0x300] sm:$0xff]
    %v3059 = vld [vmem:[%s2961 + $0x308] sm:$0xff]
    %v3060 = vld [vmem:[%s2961 + $0x310] sm:$0xff]
    %v3061 = vld [vmem:[%s2961 + $0x318] sm:$0xff]
    %v3062 = vld [vmem:[%s2961 + $0x320] sm:$0xff]
    %v3063 = vld [vmem:[%s2961 + $0x328] sm:$0xff]
    %v3064 = vld [vmem:[%s2961 + $0x330] sm:$0xff]
    %v3065 = vld [vmem:[%s2961 + $0x338] sm:$0xff]
    %v3066 = vld [vmem:[%s2961 + $0x340] sm:$0xff]
    %v3067 = vld [vmem:[%s2961 + $0x348] sm:$0xff]
    %v3068 = vld [vmem:[%s2961 + $0x350] sm:$0xff]
    %v3069 = vld [vmem:[%s2961 + $0x358] sm:$0xff]
    %v3070 = vld [vmem:[%s2961 + $0x360] sm:$0xff]
    %v3071 = vld [vmem:[%s2961 + $0x368] sm:$0xff]
    %v3072 = vld [vmem:[%s2961 + $0x370] sm:$0xff]
    %v3073 = vld [vmem:[%s2961 + $0x378] sm:$0xff]
    %v3074 = vld [vmem:[%s2961 + $0x380] sm:$0xff]
    %v3075 = vld [vmem:[%s2961 + $0x388] sm:$0xff]
    %v3076 = vld [vmem:[%s2961 + $0x390] sm:$0xff]
    %v3077 = vld [vmem:[%s2961 + $0x398] sm:$0xff]
    %v3078 = vld [vmem:[%s2961 + $0x3a0] sm:$0xff]
    %v3079 = vld [vmem:[%s2961 + $0x3a8] sm:$0xff]
    %v3080 = vld [vmem:[%s2961 + $0x3b0] sm:$0xff]
    %v3081 = vld [vmem:[%s2961 + $0x3b8] sm:$0xff]
    %v3082 = vld [vmem:[%s2961 + $0x3c0] sm:$0xff]
    %v3083 = vld [vmem:[%s2961 + $0x3c8] sm:$0xff]
    %v3084 = vld [vmem:[%s2961 + $0x3d0] sm:$0xff]
    %v3085 = vld [vmem:[%s2961 + $0x3d8] sm:$0xff]
    %v3086 = vld [vmem:[%s2961 + $0x3e0] sm:$0xff]
    %v3087 = vld [vmem:[%s2961 + $0x3e8] sm:$0xff]
    %v3088 = vld [vmem:[%s2961 + $0x3f0] sm:$0xff]
    %v3089 = vld [vmem:[%s2961 + $0x3f8] sm:$0xff]
    %s3090 = scalar_lea.vmem [#allocation5], 336
    %v3091 = vld [vmem:[%s3090] sm:$0xff]
    %v3092 = vld [vmem:[%s3090 + $0x8] sm:$0xff]
    %v3093 = vld [vmem:[%s3090 + $0x10] sm:$0xff]
    %v3094 = vld [vmem:[%s3090 + $0x18] sm:$0xff]
    %v3095 = vld [vmem:[%s3090 + $0x20] sm:$0xff]
    %v3096 = vld [vmem:[%s3090 + $0x28] sm:$0xff]
    %v3097 = vld [vmem:[%s3090 + $0x30] sm:$0xff]
    %v3098 = vld [vmem:[%s3090 + $0x38] sm:$0xff]
    %v3099 = vld [vmem:[%s3090 + $0x40] sm:$0xff]
    %v3100 = vld [vmem:[%s3090 + $0x48] sm:$0xff]
    %v3101 = vld [vmem:[%s3090 + $0x50] sm:$0xff]
    %v3102 = vld [vmem:[%s3090 + $0x58] sm:$0xff]
    %v3103 = vld [vmem:[%s3090 + $0x60] sm:$0xff]
    %v3104 = vld [vmem:[%s3090 + $0x68] sm:$0xff]
    %v3106 = vsel %vm333, %v2962, 0
    %v3109 = vsel %vm333, %v2963, 0
    %v3112 = vsel %vm333, %v2964, 0
    %v3115 = vsel %vm333, %v2965, 0
    %v3118 = vsel %vm333, %v2966, 0
    %v3121 = vsel %vm333, %v2967, 0
    %v3124 = vsel %vm333, %v2968, 0
    %v3127 = vsel %vm333, %v2969, 0
    %v3130 = vsel %vm333, %v2970, 0
    %v3133 = vsel %vm333, %v2971, 0
    %v3136 = vsel %vm333, %v2972, 0
    %v3139 = vsel %vm333, %v2973, 0
    %v3142 = vsel %vm333, %v2974, 0
    %v3145 = vsel %vm333, %v2975, 0
    %v3148 = vsel %vm333, %v2976, 0
    %v3151 = vsel %vm333, %v2977, 0
    %v3154 = vsel %vm333, %v2978, 0
    %v3157 = vsel %vm333, %v2979, 0
    %v3160 = vsel %vm333, %v2980, 0
    %v3163 = vsel %vm333, %v2981, 0
    %v3166 = vsel %vm333, %v2982, 0
    %v3169 = vsel %vm333, %v2983, 0
    %v3172 = vsel %vm333, %v2984, 0
    %v3175 = vsel %vm333, %v2985, 0
    %v3178 = vsel %vm333, %v2986, 0
    %v3181 = vsel %vm333, %v2987, 0
    %v3184 = vsel %vm333, %v2988, 0
    %v3187 = vsel %vm333, %v2989, 0
    %v3190 = vsel %vm333, %v2990, 0
    %v3193 = vsel %vm333, %v2991, 0
    %v3196 = vsel %vm333, %v2992, 0
    %v3199 = vsel %vm333, %v2993, 0
    %v3202 = vsel %vm333, %v2994, 0
    %v3205 = vsel %vm333, %v2995, 0
    %v3208 = vsel %vm333, %v2996, 0
    %v3211 = vsel %vm333, %v2997, 0
    %v3214 = vsel %vm333, %v2998, 0
    %v3217 = vsel %vm333, %v2999, 0
    %v3220 = vsel %vm333, %v3000, 0
    %v3223 = vsel %vm333, %v3001, 0
    %v3226 = vsel %vm333, %v3002, 0
    %v3229 = vsel %vm333, %v3003, 0
    %v3232 = vsel %vm333, %v3004, 0
    %v3235 = vsel %vm333, %v3005, 0
    %v3238 = vsel %vm333, %v3006, 0
    %v3241 = vsel %vm333, %v3007, 0
    %v3244 = vsel %vm333, %v3008, 0
    %v3247 = vsel %vm333, %v3009, 0
    %v3250 = vsel %vm333, %v3010, 0
    %v3253 = vsel %vm333, %v3011, 0
    %v3256 = vsel %vm333, %v3012, 0
    %v3259 = vsel %vm333, %v3013, 0
    %v3262 = vsel %vm333, %v3014, 0
    %v3265 = vsel %vm333, %v3015, 0
    %v3268 = vsel %vm333, %v3016, 0
    %v3271 = vsel %vm333, %v3017, 0
    %v3274 = vsel %vm333, %v3018, 0
    %v3277 = vsel %vm333, %v3019, 0
    %v3280 = vsel %vm333, %v3020, 0
    %v3283 = vsel %vm333, %v3021, 0
    %v3286 = vsel %vm333, %v3022, 0
    %v3289 = vsel %vm333, %v3023, 0
    %v3292 = vsel %vm333, %v3024, 0
    %v3295 = vsel %vm333, %v3025, 0
    %v3298 = vsel %vm333, %v3026, 0
    %v3301 = vsel %vm333, %v3027, 0
    %v3304 = vsel %vm333, %v3028, 0
    %v3307 = vsel %vm333, %v3029, 0
    %v3310 = vsel %vm333, %v3030, 0
    %v3313 = vsel %vm333, %v3031, 0
    %v3316 = vsel %vm333, %v3032, 0
    %v3319 = vsel %vm333, %v3033, 0
    %v3322 = vsel %vm333, %v3034, 0
    %v3325 = vsel %vm333, %v3035, 0
    %v3328 = vsel %vm333, %v3036, 0
    %v3331 = vsel %vm333, %v3037, 0
    %v3334 = vsel %vm333, %v3038, 0
    %v3337 = vsel %vm333, %v3039, 0
    %v3340 = vsel %vm333, %v3040, 0
    %v3343 = vsel %vm333, %v3041, 0
    %v3346 = vsel %vm333, %v3042, 0
    %v3349 = vsel %vm333, %v3043, 0
    %v3352 = vsel %vm333, %v3044, 0
    %v3355 = vsel %vm333, %v3045, 0
    %v3358 = vsel %vm333, %v3046, 0
    %v3361 = vsel %vm333, %v3047, 0
    %v3364 = vsel %vm333, %v3048, 0
    %v3367 = vsel %vm333, %v3049, 0
    %v3370 = vsel %vm333, %v3050, 0
    %v3373 = vsel %vm333, %v3051, 0
    %v3376 = vsel %vm333, %v3052, 0
    %v3379 = vsel %vm333, %v3053, 0
    %v3382 = vsel %vm333, %v3054, 0
    %v3385 = vsel %vm333, %v3055, 0
    %v3388 = vsel %vm333, %v3056, 0
    %v3391 = vsel %vm333, %v3057, 0
    %v3394 = vsel %vm333, %v3058, 0
    %v3397 = vsel %vm333, %v3059, 0
    %v3400 = vsel %vm333, %v3060, 0
    %v3403 = vsel %vm333, %v3061, 0
    %v3406 = vsel %vm333, %v3062, 0
    %v3409 = vsel %vm333, %v3063, 0
    %v3412 = vsel %vm333, %v3064, 0
    %v3415 = vsel %vm333, %v3065, 0
    %v3418 = vsel %vm333, %v3066, 0
    %v3421 = vsel %vm333, %v3067, 0
    %v3424 = vsel %vm333, %v3068, 0
    %v3427 = vsel %vm333, %v3069, 0
    %v3430 = vsel %vm333, %v3070, 0
    %v3433 = vsel %vm333, %v3071, 0
    %v3436 = vsel %vm333, %v3072, 0
    %v3439 = vsel %vm333, %v3073, 0
    %v3442 = vsel %vm333, %v3074, 0
    %v3445 = vsel %vm333, %v3075, 0
    %v3448 = vsel %vm333, %v3076, 0
    %v3451 = vsel %vm333, %v3077, 0
    %v3454 = vsel %vm333, %v3078, 0
    %v3457 = vsel %vm333, %v3079, 0
    %v3460 = vsel %vm333, %v3080, 0
    %v3463 = vsel %vm333, %v3081, 0
    %v3466 = vsel %vm333, %v3082, 0
    %v3469 = vsel %vm333, %v3083, 0
    %v3472 = vsel %vm333, %v3084, 0
    %v3475 = vsel %vm333, %v3085, 0
    %v3478 = vsel %vm333, %v3086, 0
    %v3481 = vsel %vm333, %v3087, 0
    %v3484 = vsel %vm333, %v3088, 0
    %v3487 = vsel %vm333, %v3089, 0
    %3489 = vmatpush.msra.mxu0 0.0
    %3490 = vmatpush.msra.mxu0 0.0
    %3491 = vmatpush.msra.mxu0 %v3104
    %3492 = vmatpush.msra.mxu0 %v3103
    %3493 = vmatpush.msra.mxu0 %v3102
    %3494 = vmatpush.msra.mxu0 %v3101
    %3495 = vmatpush.msra.mxu0 %v3100
    %3496 = vmatpush.msra.mxu0 %v3099
    %3497 = vmatpush.msra.mxu0 %v3098
    %3498 = vmatpush.msra.mxu0 %v3097
    %3499 = vmatpush.msra.mxu0 %v3096
    %3500 = vmatpush.msra.mxu0 %v3095
    %3501 = vmatpush.msra.mxu0 %v3094
    %3502 = vmatpush.msra.mxu0 %v3093
    %3503 = vmatpush.msra.mxu0 %v3092
    %3504 = vmatpush.msra.mxu0 %v3091
    %3505 = vmatmul.f32.gmra.mxu0 %v3106
    %v3506 = vpop.f32.mrf.mxu0
    %v3507 = vadd.f32 0.0, %v3506
    %3508 = vmatmul.f32.gmra.mxu0 %v3109
    %v3509 = vpop.f32.mrf.mxu0
    %v3510 = vadd.f32 0.0, %v3509
    %3511 = vmatmul.f32.gmra.mxu0 %v3112
    %v3512 = vpop.f32.mrf.mxu0
    %v3513 = vadd.f32 0.0, %v3512
    %3514 = vmatmul.f32.gmra.mxu0 %v3115
    %v3515 = vpop.f32.mrf.mxu0
    %v3516 = vadd.f32 0.0, %v3515
    %3517 = vmatmul.f32.gmra.mxu0 %v3118
    %v3518 = vpop.f32.mrf.mxu0
    %v3519 = vadd.f32 0.0, %v3518
    %3520 = vmatmul.f32.gmra.mxu0 %v3121
    %v3521 = vpop.f32.mrf.mxu0
    %v3522 = vadd.f32 0.0, %v3521
    %3523 = vmatmul.f32.gmra.mxu0 %v3124
    %v3524 = vpop.f32.mrf.mxu0
    %v3525 = vadd.f32 0.0, %v3524
    %3526 = vmatmul.f32.gmra.mxu0 %v3127
    %v3527 = vpop.f32.mrf.mxu0
    %v3528 = vadd.f32 0.0, %v3527
    %3529 = vmatmul.f32.gmra.mxu0 %v3130
    %v3530 = vpop.f32.mrf.mxu0
    %v3531 = vadd.f32 0.0, %v3530
    %3532 = vmatmul.f32.gmra.mxu0 %v3133
    %v3533 = vpop.f32.mrf.mxu0
    %v3534 = vadd.f32 0.0, %v3533
    %3535 = vmatmul.f32.gmra.mxu0 %v3136
    %v3536 = vpop.f32.mrf.mxu0
    %v3537 = vadd.f32 0.0, %v3536
    %3538 = vmatmul.f32.gmra.mxu0 %v3139
    %v3539 = vpop.f32.mrf.mxu0
    %v3540 = vadd.f32 0.0, %v3539
    %3541 = vmatmul.f32.gmra.mxu0 %v3142
    %v3542 = vpop.f32.mrf.mxu0
    %v3543 = vadd.f32 0.0, %v3542
    %3544 = vmatmul.f32.gmra.mxu0 %v3145
    %v3545 = vpop.f32.mrf.mxu0
    %v3546 = vadd.f32 0.0, %v3545
    %3547 = vmatmul.f32.gmra.mxu0 %v3148
    %v3548 = vpop.f32.mrf.mxu0
    %v3549 = vadd.f32 0.0, %v3548
    %3550 = vmatmul.f32.gmra.mxu0 %v3151
    %v3551 = vpop.f32.mrf.mxu0
    %v3552 = vadd.f32 0.0, %v3551
    %3553 = vmatmul.f32.gmra.mxu0 %v3154
    %v3554 = vpop.f32.mrf.mxu0
    %v3555 = vadd.f32 0.0, %v3554
    %3556 = vmatmul.f32.gmra.mxu0 %v3157
    %v3557 = vpop.f32.mrf.mxu0
    %v3558 = vadd.f32 0.0, %v3557
    %3559 = vmatmul.f32.gmra.mxu0 %v3160
    %v3560 = vpop.f32.mrf.mxu0
    %v3561 = vadd.f32 0.0, %v3560
    %3562 = vmatmul.f32.gmra.mxu0 %v3163
    %v3563 = vpop.f32.mrf.mxu0
    %v3564 = vadd.f32 0.0, %v3563
    %3565 = vmatmul.f32.gmra.mxu0 %v3166
    %v3566 = vpop.f32.mrf.mxu0
    %v3567 = vadd.f32 0.0, %v3566
    %3568 = vmatmul.f32.gmra.mxu0 %v3169
    %v3569 = vpop.f32.mrf.mxu0
    %v3570 = vadd.f32 0.0, %v3569
    %3571 = vmatmul.f32.gmra.mxu0 %v3172
    %v3572 = vpop.f32.mrf.mxu0
    %v3573 = vadd.f32 0.0, %v3572
    %3574 = vmatmul.f32.gmra.mxu0 %v3175
    %v3575 = vpop.f32.mrf.mxu0
    %v3576 = vadd.f32 0.0, %v3575
    %3577 = vmatmul.f32.gmra.mxu0 %v3178
    %v3578 = vpop.f32.mrf.mxu0
    %v3579 = vadd.f32 0.0, %v3578
    %3580 = vmatmul.f32.gmra.mxu0 %v3181
    %v3581 = vpop.f32.mrf.mxu0
    %v3582 = vadd.f32 0.0, %v3581
    %3583 = vmatmul.f32.gmra.mxu0 %v3184
    %v3584 = vpop.f32.mrf.mxu0
    %v3585 = vadd.f32 0.0, %v3584
    %3586 = vmatmul.f32.gmra.mxu0 %v3187
    %v3587 = vpop.f32.mrf.mxu0
    %v3588 = vadd.f32 0.0, %v3587
    %3589 = vmatmul.f32.gmra.mxu0 %v3190
    %v3590 = vpop.f32.mrf.mxu0
    %v3591 = vadd.f32 0.0, %v3590
    %3592 = vmatmul.f32.gmra.mxu0 %v3193
    %v3593 = vpop.f32.mrf.mxu0
    %v3594 = vadd.f32 0.0, %v3593
    %3595 = vmatmul.f32.gmra.mxu0 %v3196
    %v3596 = vpop.f32.mrf.mxu0
    %v3597 = vadd.f32 0.0, %v3596
    %3598 = vmatmul.f32.gmra.mxu0 %v3199
    %v3599 = vpop.f32.mrf.mxu0
    %v3600 = vadd.f32 0.0, %v3599
    %3601 = vmatmul.f32.gmra.mxu0 %v3202
    %v3602 = vpop.f32.mrf.mxu0
    %v3603 = vadd.f32 0.0, %v3602
    %3604 = vmatmul.f32.gmra.mxu0 %v3205
    %v3605 = vpop.f32.mrf.mxu0
    %v3606 = vadd.f32 0.0, %v3605
    %3607 = vmatmul.f32.gmra.mxu0 %v3208
    %v3608 = vpop.f32.mrf.mxu0
    %v3609 = vadd.f32 0.0, %v3608
    %3610 = vmatmul.f32.gmra.mxu0 %v3211
    %v3611 = vpop.f32.mrf.mxu0
    %v3612 = vadd.f32 0.0, %v3611
    %3613 = vmatmul.f32.gmra.mxu0 %v3214
    %v3614 = vpop.f32.mrf.mxu0
    %v3615 = vadd.f32 0.0, %v3614
    %3616 = vmatmul.f32.gmra.mxu0 %v3217
    %v3617 = vpop.f32.mrf.mxu0
    %v3618 = vadd.f32 0.0, %v3617
    %3619 = vmatmul.f32.gmra.mxu0 %v3220
    %v3620 = vpop.f32.mrf.mxu0
    %v3621 = vadd.f32 0.0, %v3620
    %3622 = vmatmul.f32.gmra.mxu0 %v3223
    %v3623 = vpop.f32.mrf.mxu0
    %v3624 = vadd.f32 0.0, %v3623
    %3625 = vmatmul.f32.gmra.mxu0 %v3226
    %v3626 = vpop.f32.mrf.mxu0
    %v3627 = vadd.f32 0.0, %v3626
    %3628 = vmatmul.f32.gmra.mxu0 %v3229
    %v3629 = vpop.f32.mrf.mxu0
    %v3630 = vadd.f32 0.0, %v3629
    %3631 = vmatmul.f32.gmra.mxu0 %v3232
    %v3632 = vpop.f32.mrf.mxu0
    %v3633 = vadd.f32 0.0, %v3632
    %3634 = vmatmul.f32.gmra.mxu0 %v3235
    %v3635 = vpop.f32.mrf.mxu0
    %v3636 = vadd.f32 0.0, %v3635
    %3637 = vmatmul.f32.gmra.mxu0 %v3238
    %v3638 = vpop.f32.mrf.mxu0
    %v3639 = vadd.f32 0.0, %v3638
    %3640 = vmatmul.f32.gmra.mxu0 %v3241
    %v3641 = vpop.f32.mrf.mxu0
    %v3642 = vadd.f32 0.0, %v3641
    %3643 = vmatmul.f32.gmra.mxu0 %v3244
    %v3644 = vpop.f32.mrf.mxu0
    %v3645 = vadd.f32 0.0, %v3644
    %3646 = vmatmul.f32.gmra.mxu0 %v3247
    %v3647 = vpop.f32.mrf.mxu0
    %v3648 = vadd.f32 0.0, %v3647
    %3649 = vmatmul.f32.gmra.mxu0 %v3250
    %v3650 = vpop.f32.mrf.mxu0
    %v3651 = vadd.f32 0.0, %v3650
    %3652 = vmatmul.f32.gmra.mxu0 %v3253
    %v3653 = vpop.f32.mrf.mxu0
    %v3654 = vadd.f32 0.0, %v3653
    %3655 = vmatmul.f32.gmra.mxu0 %v3256
    %v3656 = vpop.f32.mrf.mxu0
    %v3657 = vadd.f32 0.0, %v3656
    %3658 = vmatmul.f32.gmra.mxu0 %v3259
    %v3659 = vpop.f32.mrf.mxu0
    %v3660 = vadd.f32 0.0, %v3659
    %3661 = vmatmul.f32.gmra.mxu0 %v3262
    %v3662 = vpop.f32.mrf.mxu0
    %v3663 = vadd.f32 0.0, %v3662
    %3664 = vmatmul.f32.gmra.mxu0 %v3265
    %v3665 = vpop.f32.mrf.mxu0
    %v3666 = vadd.f32 0.0, %v3665
    %3667 = vmatmul.f32.gmra.mxu0 %v3268
    %v3668 = vpop.f32.mrf.mxu0
    %v3669 = vadd.f32 0.0, %v3668
    %3670 = vmatmul.f32.gmra.mxu0 %v3271
    %v3671 = vpop.f32.mrf.mxu0
    %v3672 = vadd.f32 0.0, %v3671
    %3673 = vmatmul.f32.gmra.mxu0 %v3274
    %v3674 = vpop.f32.mrf.mxu0
    %v3675 = vadd.f32 0.0, %v3674
    %3676 = vmatmul.f32.gmra.mxu0 %v3277
    %v3677 = vpop.f32.mrf.mxu0
    %v3678 = vadd.f32 0.0, %v3677
    %3679 = vmatmul.f32.gmra.mxu0 %v3280
    %v3680 = vpop.f32.mrf.mxu0
    %v3681 = vadd.f32 0.0, %v3680
    %3682 = vmatmul.f32.gmra.mxu0 %v3283
    %v3683 = vpop.f32.mrf.mxu0
    %v3684 = vadd.f32 0.0, %v3683
    %3685 = vmatmul.f32.gmra.mxu0 %v3286
    %v3686 = vpop.f32.mrf.mxu0
    %v3687 = vadd.f32 0.0, %v3686
    %3688 = vmatmul.f32.gmra.mxu0 %v3289
    %v3689 = vpop.f32.mrf.mxu0
    %v3690 = vadd.f32 0.0, %v3689
    %3691 = vmatmul.f32.gmra.mxu0 %v3292
    %v3692 = vpop.f32.mrf.mxu0
    %v3693 = vadd.f32 0.0, %v3692
    %3694 = vmatmul.f32.gmra.mxu0 %v3295
    %v3695 = vpop.f32.mrf.mxu0
    %v3696 = vadd.f32 0.0, %v3695
    %3697 = vmatmul.f32.gmra.mxu0 %v3298
    %v3698 = vpop.f32.mrf.mxu0
    %v3699 = vadd.f32 0.0, %v3698
    %3700 = vmatmul.f32.gmra.mxu0 %v3301
    %v3701 = vpop.f32.mrf.mxu0
    %v3702 = vadd.f32 0.0, %v3701
    %3703 = vmatmul.f32.gmra.mxu0 %v3304
    %v3704 = vpop.f32.mrf.mxu0
    %v3705 = vadd.f32 0.0, %v3704
    %3706 = vmatmul.f32.gmra.mxu0 %v3307
    %v3707 = vpop.f32.mrf.mxu0
    %v3708 = vadd.f32 0.0, %v3707
    %3709 = vmatmul.f32.gmra.mxu0 %v3310
    %v3710 = vpop.f32.mrf.mxu0
    %v3711 = vadd.f32 0.0, %v3710
    %3712 = vmatmul.f32.gmra.mxu0 %v3313
    %v3713 = vpop.f32.mrf.mxu0
    %v3714 = vadd.f32 0.0, %v3713
    %3715 = vmatmul.f32.gmra.mxu0 %v3316
    %v3716 = vpop.f32.mrf.mxu0
    %v3717 = vadd.f32 0.0, %v3716
    %3718 = vmatmul.f32.gmra.mxu0 %v3319
    %v3719 = vpop.f32.mrf.mxu0
    %v3720 = vadd.f32 0.0, %v3719
    %3721 = vmatmul.f32.gmra.mxu0 %v3322
    %v3722 = vpop.f32.mrf.mxu0
    %v3723 = vadd.f32 0.0, %v3722
    %3724 = vmatmul.f32.gmra.mxu0 %v3325
    %v3725 = vpop.f32.mrf.mxu0
    %v3726 = vadd.f32 0.0, %v3725
    %3727 = vmatmul.f32.gmra.mxu0 %v3328
    %v3728 = vpop.f32.mrf.mxu0
    %v3729 = vadd.f32 0.0, %v3728
    %3730 = vmatmul.f32.gmra.mxu0 %v3331
    %v3731 = vpop.f32.mrf.mxu0
    %v3732 = vadd.f32 0.0, %v3731
    %3733 = vmatmul.f32.gmra.mxu0 %v3334
    %v3734 = vpop.f32.mrf.mxu0
    %v3735 = vadd.f32 0.0, %v3734
    %3736 = vmatmul.f32.gmra.mxu0 %v3337
    %v3737 = vpop.f32.mrf.mxu0
    %v3738 = vadd.f32 0.0, %v3737
    %3739 = vmatmul.f32.gmra.mxu0 %v3340
    %v3740 = vpop.f32.mrf.mxu0
    %v3741 = vadd.f32 0.0, %v3740
    %3742 = vmatmul.f32.gmra.mxu0 %v3343
    %v3743 = vpop.f32.mrf.mxu0
    %v3744 = vadd.f32 0.0, %v3743
    %3745 = vmatmul.f32.gmra.mxu0 %v3346
    %v3746 = vpop.f32.mrf.mxu0
    %v3747 = vadd.f32 0.0, %v3746
    %3748 = vmatmul.f32.gmra.mxu0 %v3349
    %v3749 = vpop.f32.mrf.mxu0
    %v3750 = vadd.f32 0.0, %v3749
    %3751 = vmatmul.f32.gmra.mxu0 %v3352
    %v3752 = vpop.f32.mrf.mxu0
    %v3753 = vadd.f32 0.0, %v3752
    %3754 = vmatmul.f32.gmra.mxu0 %v3355
    %v3755 = vpop.f32.mrf.mxu0
    %v3756 = vadd.f32 0.0, %v3755
    %3757 = vmatmul.f32.gmra.mxu0 %v3358
    %v3758 = vpop.f32.mrf.mxu0
    %v3759 = vadd.f32 0.0, %v3758
    %3760 = vmatmul.f32.gmra.mxu0 %v3361
    %v3761 = vpop.f32.mrf.mxu0
    %v3762 = vadd.f32 0.0, %v3761
    %3763 = vmatmul.f32.gmra.mxu0 %v3364
    %v3764 = vpop.f32.mrf.mxu0
    %v3765 = vadd.f32 0.0, %v3764
    %3766 = vmatmul.f32.gmra.mxu0 %v3367
    %v3767 = vpop.f32.mrf.mxu0
    %v3768 = vadd.f32 0.0, %v3767
    %3769 = vmatmul.f32.gmra.mxu0 %v3370
    %v3770 = vpop.f32.mrf.mxu0
    %v3771 = vadd.f32 0.0, %v3770
    %3772 = vmatmul.f32.gmra.mxu0 %v3373
    %v3773 = vpop.f32.mrf.mxu0
    %v3774 = vadd.f32 0.0, %v3773
    %3775 = vmatmul.f32.gmra.mxu0 %v3376
    %v3776 = vpop.f32.mrf.mxu0
    %v3777 = vadd.f32 0.0, %v3776
    %3778 = vmatmul.f32.gmra.mxu0 %v3379
    %v3779 = vpop.f32.mrf.mxu0
    %v3780 = vadd.f32 0.0, %v3779
    %3781 = vmatmul.f32.gmra.mxu0 %v3382
    %v3782 = vpop.f32.mrf.mxu0
    %v3783 = vadd.f32 0.0, %v3782
    %3784 = vmatmul.f32.gmra.mxu0 %v3385
    %v3785 = vpop.f32.mrf.mxu0
    %v3786 = vadd.f32 0.0, %v3785
    %3787 = vmatmul.f32.gmra.mxu0 %v3388
    %v3788 = vpop.f32.mrf.mxu0
    %v3789 = vadd.f32 0.0, %v3788
    %3790 = vmatmul.f32.gmra.mxu0 %v3391
    %v3791 = vpop.f32.mrf.mxu0
    %v3792 = vadd.f32 0.0, %v3791
    %3793 = vmatmul.f32.gmra.mxu0 %v3394
    %v3794 = vpop.f32.mrf.mxu0
    %v3795 = vadd.f32 0.0, %v3794
    %3796 = vmatmul.f32.gmra.mxu0 %v3397
    %v3797 = vpop.f32.mrf.mxu0
    %v3798 = vadd.f32 0.0, %v3797
    %3799 = vmatmul.f32.gmra.mxu0 %v3400
    %v3800 = vpop.f32.mrf.mxu0
    %v3801 = vadd.f32 0.0, %v3800
    %3802 = vmatmul.f32.gmra.mxu0 %v3403
    %v3803 = vpop.f32.mrf.mxu0
    %v3804 = vadd.f32 0.0, %v3803
    %3805 = vmatmul.f32.gmra.mxu0 %v3406
    %v3806 = vpop.f32.mrf.mxu0
    %v3807 = vadd.f32 0.0, %v3806
    %3808 = vmatmul.f32.gmra.mxu0 %v3409
    %v3809 = vpop.f32.mrf.mxu0
    %v3810 = vadd.f32 0.0, %v3809
    %3811 = vmatmul.f32.gmra.mxu0 %v3412
    %v3812 = vpop.f32.mrf.mxu0
    %v3813 = vadd.f32 0.0, %v3812
    %3814 = vmatmul.f32.gmra.mxu0 %v3415
    %v3815 = vpop.f32.mrf.mxu0
    %v3816 = vadd.f32 0.0, %v3815
    %3817 = vmatmul.f32.gmra.mxu0 %v3418
    %v3818 = vpop.f32.mrf.mxu0
    %v3819 = vadd.f32 0.0, %v3818
    %3820 = vmatmul.f32.gmra.mxu0 %v3421
    %v3821 = vpop.f32.mrf.mxu0
    %v3822 = vadd.f32 0.0, %v3821
    %3823 = vmatmul.f32.gmra.mxu0 %v3424
    %v3824 = vpop.f32.mrf.mxu0
    %v3825 = vadd.f32 0.0, %v3824
    %3826 = vmatmul.f32.gmra.mxu0 %v3427
    %v3827 = vpop.f32.mrf.mxu0
    %v3828 = vadd.f32 0.0, %v3827
    %3829 = vmatmul.f32.gmra.mxu0 %v3430
    %v3830 = vpop.f32.mrf.mxu0
    %v3831 = vadd.f32 0.0, %v3830
    %3832 = vmatmul.f32.gmra.mxu0 %v3433
    %v3833 = vpop.f32.mrf.mxu0
    %v3834 = vadd.f32 0.0, %v3833
    %3835 = vmatmul.f32.gmra.mxu0 %v3436
    %v3836 = vpop.f32.mrf.mxu0
    %v3837 = vadd.f32 0.0, %v3836
    %3838 = vmatmul.f32.gmra.mxu0 %v3439
    %v3839 = vpop.f32.mrf.mxu0
    %v3840 = vadd.f32 0.0, %v3839
    %3841 = vmatmul.f32.gmra.mxu0 %v3442
    %v3842 = vpop.f32.mrf.mxu0
    %v3843 = vadd.f32 0.0, %v3842
    %3844 = vmatmul.f32.gmra.mxu0 %v3445
    %v3845 = vpop.f32.mrf.mxu0
    %v3846 = vadd.f32 0.0, %v3845
    %3847 = vmatmul.f32.gmra.mxu0 %v3448
    %v3848 = vpop.f32.mrf.mxu0
    %v3849 = vadd.f32 0.0, %v3848
    %3850 = vmatmul.f32.gmra.mxu0 %v3451
    %v3851 = vpop.f32.mrf.mxu0
    %v3852 = vadd.f32 0.0, %v3851
    %3853 = vmatmul.f32.gmra.mxu0 %v3454
    %v3854 = vpop.f32.mrf.mxu0
    %v3855 = vadd.f32 0.0, %v3854
    %3856 = vmatmul.f32.gmra.mxu0 %v3457
    %v3857 = vpop.f32.mrf.mxu0
    %v3858 = vadd.f32 0.0, %v3857
    %3859 = vmatmul.f32.gmra.mxu0 %v3460
    %v3860 = vpop.f32.mrf.mxu0
    %v3861 = vadd.f32 0.0, %v3860
    %3862 = vmatmul.f32.gmra.mxu0 %v3463
    %v3863 = vpop.f32.mrf.mxu0
    %v3864 = vadd.f32 0.0, %v3863
    %3865 = vmatmul.f32.gmra.mxu0 %v3466
    %v3866 = vpop.f32.mrf.mxu0
    %v3867 = vadd.f32 0.0, %v3866
    %3868 = vmatmul.f32.gmra.mxu0 %v3469
    %v3869 = vpop.f32.mrf.mxu0
    %v3870 = vadd.f32 0.0, %v3869
    %3871 = vmatmul.f32.gmra.mxu0 %v3472
    %v3872 = vpop.f32.mrf.mxu0
    %v3873 = vadd.f32 0.0, %v3872
    %3874 = vmatmul.f32.gmra.mxu0 %v3475
    %v3875 = vpop.f32.mrf.mxu0
    %v3876 = vadd.f32 0.0, %v3875
    %3877 = vmatmul.f32.gmra.mxu0 %v3478
    %v3878 = vpop.f32.mrf.mxu0
    %v3879 = vadd.f32 0.0, %v3878
    %3880 = vmatmul.f32.gmra.mxu0 %v3481
    %v3881 = vpop.f32.mrf.mxu0
    %v3882 = vadd.f32 0.0, %v3881
    %3883 = vmatmul.f32.gmra.mxu0 %v3484
    %v3884 = vpop.f32.mrf.mxu0
    %v3885 = vadd.f32 0.0, %v3884
    %3886 = vmatmul.f32.gmra.mxu0 %v3487
    %v3887 = vpop.f32.mrf.mxu0
    %v3888 = vadd.f32 0.0, %v3887
    %3889 = vdwg.mxu0
    %v3890 = vadd.f32 %v2833, %v3507
    %v3891 = vadd.f32 %v2834, %v3510
    %v3892 = vadd.f32 %v2835, %v3513
    %v3893 = vadd.f32 %v2836, %v3516
    %v3894 = vadd.f32 %v2837, %v3519
    %v3895 = vadd.f32 %v2838, %v3522
    %v3896 = vadd.f32 %v2839, %v3525
    %v3897 = vadd.f32 %v2840, %v3528
    %v3898 = vadd.f32 %v2841, %v3531
    %v3899 = vadd.f32 %v2842, %v3534
    %v3900 = vadd.f32 %v2843, %v3537
    %v3901 = vadd.f32 %v2844, %v3540
    %v3902 = vadd.f32 %v2845, %v3543
    %v3903 = vadd.f32 %v2846, %v3546
    %v3904 = vadd.f32 %v2847, %v3549
    %v3905 = vadd.f32 %v2848, %v3552
    %v3906 = vadd.f32 %v2849, %v3555
    %v3907 = vadd.f32 %v2850, %v3558
    %v3908 = vadd.f32 %v2851, %v3561
    %v3909 = vadd.f32 %v2852, %v3564
    %v3910 = vadd.f32 %v2853, %v3567
    %v3911 = vadd.f32 %v2854, %v3570
    %v3912 = vadd.f32 %v2855, %v3573
    %v3913 = vadd.f32 %v2856, %v3576
    %v3914 = vadd.f32 %v2857, %v3579
    %v3915 = vadd.f32 %v2858, %v3582
    %v3916 = vadd.f32 %v2859, %v3585
    %v3917 = vadd.f32 %v2860, %v3588
    %v3918 = vadd.f32 %v2861, %v3591
    %v3919 = vadd.f32 %v2862, %v3594
    %v3920 = vadd.f32 %v2863, %v3597
    %v3921 = vadd.f32 %v2864, %v3600
    %v3922 = vadd.f32 %v2865, %v3603
    %v3923 = vadd.f32 %v2866, %v3606
    %v3924 = vadd.f32 %v2867, %v3609
    %v3925 = vadd.f32 %v2868, %v3612
    %v3926 = vadd.f32 %v2869, %v3615
    %v3927 = vadd.f32 %v2870, %v3618
    %v3928 = vadd.f32 %v2871, %v3621
    %v3929 = vadd.f32 %v2872, %v3624
    %v3930 = vadd.f32 %v2873, %v3627
    %v3931 = vadd.f32 %v2874, %v3630
    %v3932 = vadd.f32 %v2875, %v3633
    %v3933 = vadd.f32 %v2876, %v3636
    %v3934 = vadd.f32 %v2877, %v3639
    %v3935 = vadd.f32 %v2878, %v3642
    %v3936 = vadd.f32 %v2879, %v3645
    %v3937 = vadd.f32 %v2880, %v3648
    %v3938 = vadd.f32 %v2881, %v3651
    %v3939 = vadd.f32 %v2882, %v3654
    %v3940 = vadd.f32 %v2883, %v3657
    %v3941 = vadd.f32 %v2884, %v3660
    %v3942 = vadd.f32 %v2885, %v3663
    %v3943 = vadd.f32 %v2886, %v3666
    %v3944 = vadd.f32 %v2887, %v3669
    %v3945 = vadd.f32 %v2888, %v3672
    %v3946 = vadd.f32 %v2889, %v3675
    %v3947 = vadd.f32 %v2890, %v3678
    %v3948 = vadd.f32 %v2891, %v3681
    %v3949 = vadd.f32 %v2892, %v3684
    %v3950 = vadd.f32 %v2893, %v3687
    %v3951 = vadd.f32 %v2894, %v3690
    %v3952 = vadd.f32 %v2895, %v3693
    %v3953 = vadd.f32 %v2896, %v3696
    %v3954 = vadd.f32 %v2897, %v3699
    %v3955 = vadd.f32 %v2898, %v3702
    %v3956 = vadd.f32 %v2899, %v3705
    %v3957 = vadd.f32 %v2900, %v3708
    %v3958 = vadd.f32 %v2901, %v3711
    %v3959 = vadd.f32 %v2902, %v3714
    %v3960 = vadd.f32 %v2903, %v3717
    %v3961 = vadd.f32 %v2904, %v3720
    %v3962 = vadd.f32 %v2905, %v3723
    %v3963 = vadd.f32 %v2906, %v3726
    %v3964 = vadd.f32 %v2907, %v3729
    %v3965 = vadd.f32 %v2908, %v3732
    %v3966 = vadd.f32 %v2909, %v3735
    %v3967 = vadd.f32 %v2910, %v3738
    %v3968 = vadd.f32 %v2911, %v3741
    %v3969 = vadd.f32 %v2912, %v3744
    %v3970 = vadd.f32 %v2913, %v3747
    %v3971 = vadd.f32 %v2914, %v3750
    %v3972 = vadd.f32 %v2915, %v3753
    %v3973 = vadd.f32 %v2916, %v3756
    %v3974 = vadd.f32 %v2917, %v3759
    %v3975 = vadd.f32 %v2918, %v3762
    %v3976 = vadd.f32 %v2919, %v3765
    %v3977 = vadd.f32 %v2920, %v3768
    %v3978 = vadd.f32 %v2921, %v3771
    %v3979 = vadd.f32 %v2922, %v3774
    %v3980 = vadd.f32 %v2923, %v3777
    %v3981 = vadd.f32 %v2924, %v3780
    %v3982 = vadd.f32 %v2925, %v3783
    %v3983 = vadd.f32 %v2926, %v3786
    %v3984 = vadd.f32 %v2927, %v3789
    %v3985 = vadd.f32 %v2928, %v3792
    %v3986 = vadd.f32 %v2929, %v3795
    %v3987 = vadd.f32 %v2930, %v3798
    %v3988 = vadd.f32 %v2931, %v3801
    %v3989 = vadd.f32 %v2932, %v3804
    %v3990 = vadd.f32 %v2933, %v3807
    %v3991 = vadd.f32 %v2934, %v3810
    %v3992 = vadd.f32 %v2935, %v3813
    %v3993 = vadd.f32 %v2936, %v3816
    %v3994 = vadd.f32 %v2937, %v3819
    %v3995 = vadd.f32 %v2938, %v3822
    %v3996 = vadd.f32 %v2939, %v3825
    %v3997 = vadd.f32 %v2940, %v3828
    %v3998 = vadd.f32 %v2941, %v3831
    %v3999 = vadd.f32 %v2942, %v3834
    %v4000 = vadd.f32 %v2943, %v3837
    %v4001 = vadd.f32 %v2944, %v3840
    %v4002 = vadd.f32 %v2945, %v3843
    %v4003 = vadd.f32 %v2946, %v3846
    %v4004 = vadd.f32 %v2947, %v3849
    %v4005 = vadd.f32 %v2948, %v3852
    %v4006 = vadd.f32 %v2949, %v3855
    %v4007 = vadd.f32 %v2950, %v3858
    %v4008 = vadd.f32 %v2951, %v3861
    %v4009 = vadd.f32 %v2952, %v3864
    %v4010 = vadd.f32 %v2953, %v3867
    %v4011 = vadd.f32 %v2954, %v3870
    %v4012 = vadd.f32 %v2955, %v3873
    %v4013 = vadd.f32 %v2956, %v3876
    %v4014 = vadd.f32 %v2957, %v3879
    %v4015 = vadd.f32 %v2958, %v3882
    %v4016 = vadd.f32 %v2959, %v3885
    %v4017 = vadd.f32 %v2960, %v3888
    %s4018 = scalar_lea.vmem [#allocation2], 128
    %v4019 = vld [vmem:[%s4018] sm:$0xff]
    %v4020 = vld [vmem:[%s4018 + $0x8] sm:$0xff]
    %v4021 = vld [vmem:[%s4018 + $0x10] sm:$0xff]
    %v4022 = vld [vmem:[%s4018 + $0x18] sm:$0xff]
    %v4023 = vld [vmem:[%s4018 + $0x20] sm:$0xff]
    %v4024 = vld [vmem:[%s4018 + $0x28] sm:$0xff]
    %v4025 = vld [vmem:[%s4018 + $0x30] sm:$0xff]
    %v4026 = vld [vmem:[%s4018 + $0x38] sm:$0xff]
    %v4027 = vld [vmem:[%s4018 + $0x40] sm:$0xff]
    %v4028 = vld [vmem:[%s4018 + $0x48] sm:$0xff]
    %v4029 = vld [vmem:[%s4018 + $0x50] sm:$0xff]
    %v4030 = vld [vmem:[%s4018 + $0x58] sm:$0xff]
    %v4031 = vld [vmem:[%s4018 + $0x60] sm:$0xff]
    %v4032 = vld [vmem:[%s4018 + $0x68] sm:$0xff]
    %v4033 = vld [vmem:[%s4018 + $0x70] sm:$0xff]
    %v4034 = vld [vmem:[%s4018 + $0x78] sm:$0xff]
    %v4035 = vld [vmem:[%s4018 + $0x80] sm:$0xff]
    %v4036 = vld [vmem:[%s4018 + $0x88] sm:$0xff]
    %v4037 = vld [vmem:[%s4018 + $0x90] sm:$0xff]
    %v4038 = vld [vmem:[%s4018 + $0x98] sm:$0xff]
    %v4039 = vld [vmem:[%s4018 + $0xa0] sm:$0xff]
    %v4040 = vld [vmem:[%s4018 + $0xa8] sm:$0xff]
    %v4041 = vld [vmem:[%s4018 + $0xb0] sm:$0xff]
    %v4042 = vld [vmem:[%s4018 + $0xb8] sm:$0xff]
    %v4043 = vld [vmem:[%s4018 + $0xc0] sm:$0xff]
    %v4044 = vld [vmem:[%s4018 + $0xc8] sm:$0xff]
    %v4045 = vld [vmem:[%s4018 + $0xd0] sm:$0xff]
    %v4046 = vld [vmem:[%s4018 + $0xd8] sm:$0xff]
    %v4047 = vld [vmem:[%s4018 + $0xe0] sm:$0xff]
    %v4048 = vld [vmem:[%s4018 + $0xe8] sm:$0xff]
    %v4049 = vld [vmem:[%s4018 + $0xf0] sm:$0xff]
    %v4050 = vld [vmem:[%s4018 + $0xf8] sm:$0xff]
    %v4051 = vld [vmem:[%s4018 + $0x100] sm:$0xff]
    %v4052 = vld [vmem:[%s4018 + $0x108] sm:$0xff]
    %v4053 = vld [vmem:[%s4018 + $0x110] sm:$0xff]
    %v4054 = vld [vmem:[%s4018 + $0x118] sm:$0xff]
    %v4055 = vld [vmem:[%s4018 + $0x120] sm:$0xff]
    %v4056 = vld [vmem:[%s4018 + $0x128] sm:$0xff]
    %v4057 = vld [vmem:[%s4018 + $0x130] sm:$0xff]
    %v4058 = vld [vmem:[%s4018 + $0x138] sm:$0xff]
    %v4059 = vld [vmem:[%s4018 + $0x140] sm:$0xff]
    %v4060 = vld [vmem:[%s4018 + $0x148] sm:$0xff]
    %v4061 = vld [vmem:[%s4018 + $0x150] sm:$0xff]
    %v4062 = vld [vmem:[%s4018 + $0x158] sm:$0xff]
    %v4063 = vld [vmem:[%s4018 + $0x160] sm:$0xff]
    %v4064 = vld [vmem:[%s4018 + $0x168] sm:$0xff]
    %v4065 = vld [vmem:[%s4018 + $0x170] sm:$0xff]
    %v4066 = vld [vmem:[%s4018 + $0x178] sm:$0xff]
    %v4067 = vld [vmem:[%s4018 + $0x180] sm:$0xff]
    %v4068 = vld [vmem:[%s4018 + $0x188] sm:$0xff]
    %v4069 = vld [vmem:[%s4018 + $0x190] sm:$0xff]
    %v4070 = vld [vmem:[%s4018 + $0x198] sm:$0xff]
    %v4071 = vld [vmem:[%s4018 + $0x1a0] sm:$0xff]
    %v4072 = vld [vmem:[%s4018 + $0x1a8] sm:$0xff]
    %v4073 = vld [vmem:[%s4018 + $0x1b0] sm:$0xff]
    %v4074 = vld [vmem:[%s4018 + $0x1b8] sm:$0xff]
    %v4075 = vld [vmem:[%s4018 + $0x1c0] sm:$0xff]
    %v4076 = vld [vmem:[%s4018 + $0x1c8] sm:$0xff]
    %v4077 = vld [vmem:[%s4018 + $0x1d0] sm:$0xff]
    %v4078 = vld [vmem:[%s4018 + $0x1d8] sm:$0xff]
    %v4079 = vld [vmem:[%s4018 + $0x1e0] sm:$0xff]
    %v4080 = vld [vmem:[%s4018 + $0x1e8] sm:$0xff]
    %v4081 = vld [vmem:[%s4018 + $0x1f0] sm:$0xff]
    %v4082 = vld [vmem:[%s4018 + $0x1f8] sm:$0xff]
    %v4083 = vld [vmem:[%s4018 + $0x200] sm:$0xff]
    %v4084 = vld [vmem:[%s4018 + $0x208] sm:$0xff]
    %v4085 = vld [vmem:[%s4018 + $0x210] sm:$0xff]
    %v4086 = vld [vmem:[%s4018 + $0x218] sm:$0xff]
    %v4087 = vld [vmem:[%s4018 + $0x220] sm:$0xff]
    %v4088 = vld [vmem:[%s4018 + $0x228] sm:$0xff]
    %v4089 = vld [vmem:[%s4018 + $0x230] sm:$0xff]
    %v4090 = vld [vmem:[%s4018 + $0x238] sm:$0xff]
    %v4091 = vld [vmem:[%s4018 + $0x240] sm:$0xff]
    %v4092 = vld [vmem:[%s4018 + $0x248] sm:$0xff]
    %v4093 = vld [vmem:[%s4018 + $0x250] sm:$0xff]
    %v4094 = vld [vmem:[%s4018 + $0x258] sm:$0xff]
    %v4095 = vld [vmem:[%s4018 + $0x260] sm:$0xff]
    %v4096 = vld [vmem:[%s4018 + $0x268] sm:$0xff]
    %v4097 = vld [vmem:[%s4018 + $0x270] sm:$0xff]
    %v4098 = vld [vmem:[%s4018 + $0x278] sm:$0xff]
    %v4099 = vld [vmem:[%s4018 + $0x280] sm:$0xff]
    %v4100 = vld [vmem:[%s4018 + $0x288] sm:$0xff]
    %v4101 = vld [vmem:[%s4018 + $0x290] sm:$0xff]
    %v4102 = vld [vmem:[%s4018 + $0x298] sm:$0xff]
    %v4103 = vld [vmem:[%s4018 + $0x2a0] sm:$0xff]
    %v4104 = vld [vmem:[%s4018 + $0x2a8] sm:$0xff]
    %v4105 = vld [vmem:[%s4018 + $0x2b0] sm:$0xff]
    %v4106 = vld [vmem:[%s4018 + $0x2b8] sm:$0xff]
    %v4107 = vld [vmem:[%s4018 + $0x2c0] sm:$0xff]
    %v4108 = vld [vmem:[%s4018 + $0x2c8] sm:$0xff]
    %v4109 = vld [vmem:[%s4018 + $0x2d0] sm:$0xff]
    %v4110 = vld [vmem:[%s4018 + $0x2d8] sm:$0xff]
    %v4111 = vld [vmem:[%s4018 + $0x2e0] sm:$0xff]
    %v4112 = vld [vmem:[%s4018 + $0x2e8] sm:$0xff]
    %v4113 = vld [vmem:[%s4018 + $0x2f0] sm:$0xff]
    %v4114 = vld [vmem:[%s4018 + $0x2f8] sm:$0xff]
    %v4115 = vld [vmem:[%s4018 + $0x300] sm:$0xff]
    %v4116 = vld [vmem:[%s4018 + $0x308] sm:$0xff]
    %v4117 = vld [vmem:[%s4018 + $0x310] sm:$0xff]
    %v4118 = vld [vmem:[%s4018 + $0x318] sm:$0xff]
    %v4119 = vld [vmem:[%s4018 + $0x320] sm:$0xff]
    %v4120 = vld [vmem:[%s4018 + $0x328] sm:$0xff]
    %v4121 = vld [vmem:[%s4018 + $0x330] sm:$0xff]
    %v4122 = vld [vmem:[%s4018 + $0x338] sm:$0xff]
    %v4123 = vld [vmem:[%s4018 + $0x340] sm:$0xff]
    %v4124 = vld [vmem:[%s4018 + $0x348] sm:$0xff]
    %v4125 = vld [vmem:[%s4018 + $0x350] sm:$0xff]
    %v4126 = vld [vmem:[%s4018 + $0x358] sm:$0xff]
    %v4127 = vld [vmem:[%s4018 + $0x360] sm:$0xff]
    %v4128 = vld [vmem:[%s4018 + $0x368] sm:$0xff]
    %v4129 = vld [vmem:[%s4018 + $0x370] sm:$0xff]
    %v4130 = vld [vmem:[%s4018 + $0x378] sm:$0xff]
    %v4131 = vld [vmem:[%s4018 + $0x380] sm:$0xff]
    %v4132 = vld [vmem:[%s4018 + $0x388] sm:$0xff]
    %v4133 = vld [vmem:[%s4018 + $0x390] sm:$0xff]
    %v4134 = vld [vmem:[%s4018 + $0x398] sm:$0xff]
    %v4135 = vld [vmem:[%s4018 + $0x3a0] sm:$0xff]
    %v4136 = vld [vmem:[%s4018 + $0x3a8] sm:$0xff]
    %v4137 = vld [vmem:[%s4018 + $0x3b0] sm:$0xff]
    %v4138 = vld [vmem:[%s4018 + $0x3b8] sm:$0xff]
    %v4139 = vld [vmem:[%s4018 + $0x3c0] sm:$0xff]
    %v4140 = vld [vmem:[%s4018 + $0x3c8] sm:$0xff]
    %v4141 = vld [vmem:[%s4018 + $0x3d0] sm:$0xff]
    %v4142 = vld [vmem:[%s4018 + $0x3d8] sm:$0xff]
    %v4143 = vld [vmem:[%s4018 + $0x3e0] sm:$0xff]
    %v4144 = vld [vmem:[%s4018 + $0x3e8] sm:$0xff]
    %v4145 = vld [vmem:[%s4018 + $0x3f0] sm:$0xff]
    %v4146 = vld [vmem:[%s4018 + $0x3f8] sm:$0xff]
    %s4147 = scalar_lea.vmem [#allocation5], 448
    %v4148 = vld [vmem:[%s4147] sm:$0xff]
    %v4149 = vld [vmem:[%s4147 + $0x8] sm:$0xff]
    %v4150 = vld [vmem:[%s4147 + $0x10] sm:$0xff]
    %v4151 = vld [vmem:[%s4147 + $0x18] sm:$0xff]
    %v4152 = vld [vmem:[%s4147 + $0x20] sm:$0xff]
    %v4153 = vld [vmem:[%s4147 + $0x28] sm:$0xff]
    %v4154 = vld [vmem:[%s4147 + $0x30] sm:$0xff]
    %v4155 = vld [vmem:[%s4147 + $0x38] sm:$0xff]
    %v4156 = vld [vmem:[%s4147 + $0x40] sm:$0xff]
    %v4157 = vld [vmem:[%s4147 + $0x48] sm:$0xff]
    %v4158 = vld [vmem:[%s4147 + $0x50] sm:$0xff]
    %v4159 = vld [vmem:[%s4147 + $0x58] sm:$0xff]
    %v4160 = vld [vmem:[%s4147 + $0x60] sm:$0xff]
    %v4161 = vld [vmem:[%s4147 + $0x68] sm:$0xff]
    %v4163 = vsel %vm333, %v4019, 0
    %v4166 = vsel %vm333, %v4020, 0
    %v4169 = vsel %vm333, %v4021, 0
    %v4172 = vsel %vm333, %v4022, 0
    %v4175 = vsel %vm333, %v4023, 0
    %v4178 = vsel %vm333, %v4024, 0
    %v4181 = vsel %vm333, %v4025, 0
    %v4184 = vsel %vm333, %v4026, 0
    %v4187 = vsel %vm333, %v4027, 0
    %v4190 = vsel %vm333, %v4028, 0
    %v4193 = vsel %vm333, %v4029, 0
    %v4196 = vsel %vm333, %v4030, 0
    %v4199 = vsel %vm333, %v4031, 0
    %v4202 = vsel %vm333, %v4032, 0
    %v4205 = vsel %vm333, %v4033, 0
    %v4208 = vsel %vm333, %v4034, 0
    %v4211 = vsel %vm333, %v4035, 0
    %v4214 = vsel %vm333, %v4036, 0
    %v4217 = vsel %vm333, %v4037, 0
    %v4220 = vsel %vm333, %v4038, 0
    %v4223 = vsel %vm333, %v4039, 0
    %v4226 = vsel %vm333, %v4040, 0
    %v4229 = vsel %vm333, %v4041, 0
    %v4232 = vsel %vm333, %v4042, 0
    %v4235 = vsel %vm333, %v4043, 0
    %v4238 = vsel %vm333, %v4044, 0
    %v4241 = vsel %vm333, %v4045, 0
    %v4244 = vsel %vm333, %v4046, 0
    %v4247 = vsel %vm333, %v4047, 0
    %v4250 = vsel %vm333, %v4048, 0
    %v4253 = vsel %vm333, %v4049, 0
    %v4256 = vsel %vm333, %v4050, 0
    %v4259 = vsel %vm333, %v4051, 0
    %v4262 = vsel %vm333, %v4052, 0
    %v4265 = vsel %vm333, %v4053, 0
    %v4268 = vsel %vm333, %v4054, 0
    %v4271 = vsel %vm333, %v4055, 0
    %v4274 = vsel %vm333, %v4056, 0
    %v4277 = vsel %vm333, %v4057, 0
    %v4280 = vsel %vm333, %v4058, 0
    %v4283 = vsel %vm333, %v4059, 0
    %v4286 = vsel %vm333, %v4060, 0
    %v4289 = vsel %vm333, %v4061, 0
    %v4292 = vsel %vm333, %v4062, 0
    %v4295 = vsel %vm333, %v4063, 0
    %v4298 = vsel %vm333, %v4064, 0
    %v4301 = vsel %vm333, %v4065, 0
    %v4304 = vsel %vm333, %v4066, 0
    %v4307 = vsel %vm333, %v4067, 0
    %v4310 = vsel %vm333, %v4068, 0
    %v4313 = vsel %vm333, %v4069, 0
    %v4316 = vsel %vm333, %v4070, 0
    %v4319 = vsel %vm333, %v4071, 0
    %v4322 = vsel %vm333, %v4072, 0
    %v4325 = vsel %vm333, %v4073, 0
    %v4328 = vsel %vm333, %v4074, 0
    %v4331 = vsel %vm333, %v4075, 0
    %v4334 = vsel %vm333, %v4076, 0
    %v4337 = vsel %vm333, %v4077, 0
    %v4340 = vsel %vm333, %v4078, 0
    %v4343 = vsel %vm333, %v4079, 0
    %v4346 = vsel %vm333, %v4080, 0
    %v4349 = vsel %vm333, %v4081, 0
    %v4352 = vsel %vm333, %v4082, 0
    %v4355 = vsel %vm333, %v4083, 0
    %v4358 = vsel %vm333, %v4084, 0
    %v4361 = vsel %vm333, %v4085, 0
    %v4364 = vsel %vm333, %v4086, 0
    %v4367 = vsel %vm333, %v4087, 0
    %v4370 = vsel %vm333, %v4088, 0
    %v4373 = vsel %vm333, %v4089, 0
    %v4376 = vsel %vm333, %v4090, 0
    %v4379 = vsel %vm333, %v4091, 0
    %v4382 = vsel %vm333, %v4092, 0
    %v4385 = vsel %vm333, %v4093, 0
    %v4388 = vsel %vm333, %v4094, 0
    %v4391 = vsel %vm333, %v4095, 0
    %v4394 = vsel %vm333, %v4096, 0
    %v4397 = vsel %vm333, %v4097, 0
    %v4400 = vsel %vm333, %v4098, 0
    %v4403 = vsel %vm333, %v4099, 0
    %v4406 = vsel %vm333, %v4100, 0
    %v4409 = vsel %vm333, %v4101, 0
    %v4412 = vsel %vm333, %v4102, 0
    %v4415 = vsel %vm333, %v4103, 0
    %v4418 = vsel %vm333, %v4104, 0
    %v4421 = vsel %vm333, %v4105, 0
    %v4424 = vsel %vm333, %v4106, 0
    %v4427 = vsel %vm333, %v4107, 0
    %v4430 = vsel %vm333, %v4108, 0
    %v4433 = vsel %vm333, %v4109, 0
    %v4436 = vsel %vm333, %v4110, 0
    %v4439 = vsel %vm333, %v4111, 0
    %v4442 = vsel %vm333, %v4112, 0
    %v4445 = vsel %vm333, %v4113, 0
    %v4448 = vsel %vm333, %v4114, 0
    %v4451 = vsel %vm333, %v4115, 0
    %v4454 = vsel %vm333, %v4116, 0
    %v4457 = vsel %vm333, %v4117, 0
    %v4460 = vsel %vm333, %v4118, 0
    %v4463 = vsel %vm333, %v4119, 0
    %v4466 = vsel %vm333, %v4120, 0
    %v4469 = vsel %vm333, %v4121, 0
    %v4472 = vsel %vm333, %v4122, 0
    %v4475 = vsel %vm333, %v4123, 0
    %v4478 = vsel %vm333, %v4124, 0
    %v4481 = vsel %vm333, %v4125, 0
    %v4484 = vsel %vm333, %v4126, 0
    %v4487 = vsel %vm333, %v4127, 0
    %v4490 = vsel %vm333, %v4128, 0
    %v4493 = vsel %vm333, %v4129, 0
    %v4496 = vsel %vm333, %v4130, 0
    %v4499 = vsel %vm333, %v4131, 0
    %v4502 = vsel %vm333, %v4132, 0
    %v4505 = vsel %vm333, %v4133, 0
    %v4508 = vsel %vm333, %v4134, 0
    %v4511 = vsel %vm333, %v4135, 0
    %v4514 = vsel %vm333, %v4136, 0
    %v4517 = vsel %vm333, %v4137, 0
    %v4520 = vsel %vm333, %v4138, 0
    %v4523 = vsel %vm333, %v4139, 0
    %v4526 = vsel %vm333, %v4140, 0
    %v4529 = vsel %vm333, %v4141, 0
    %v4532 = vsel %vm333, %v4142, 0
    %v4535 = vsel %vm333, %v4143, 0
    %v4538 = vsel %vm333, %v4144, 0
    %v4541 = vsel %vm333, %v4145, 0
    %v4544 = vsel %vm333, %v4146, 0
    %4546 = vmatpush.msra.mxu0 0.0
    %4547 = vmatpush.msra.mxu0 0.0
    %4548 = vmatpush.msra.mxu0 %v4161
    %4549 = vmatpush.msra.mxu0 %v4160
    %4550 = vmatpush.msra.mxu0 %v4159
    %4551 = vmatpush.msra.mxu0 %v4158
    %4552 = vmatpush.msra.mxu0 %v4157
    %4553 = vmatpush.msra.mxu0 %v4156
    %4554 = vmatpush.msra.mxu0 %v4155
    %4555 = vmatpush.msra.mxu0 %v4154
    %4556 = vmatpush.msra.mxu0 %v4153
    %4557 = vmatpush.msra.mxu0 %v4152
    %4558 = vmatpush.msra.mxu0 %v4151
    %4559 = vmatpush.msra.mxu0 %v4150
    %4560 = vmatpush.msra.mxu0 %v4149
    %4561 = vmatpush.msra.mxu0 %v4148
    %4562 = vmatmul.f32.gmra.mxu0 %v4163
    %v4563 = vpop.f32.mrf.mxu0
    %v4564 = vadd.f32 0.0, %v4563
    %4565 = vmatmul.f32.gmra.mxu0 %v4166
    %v4566 = vpop.f32.mrf.mxu0
    %v4567 = vadd.f32 0.0, %v4566
    %4568 = vmatmul.f32.gmra.mxu0 %v4169
    %v4569 = vpop.f32.mrf.mxu0
    %v4570 = vadd.f32 0.0, %v4569
    %4571 = vmatmul.f32.gmra.mxu0 %v4172
    %v4572 = vpop.f32.mrf.mxu0
    %v4573 = vadd.f32 0.0, %v4572
    %4574 = vmatmul.f32.gmra.mxu0 %v4175
    %v4575 = vpop.f32.mrf.mxu0
    %v4576 = vadd.f32 0.0, %v4575
    %4577 = vmatmul.f32.gmra.mxu0 %v4178
    %v4578 = vpop.f32.mrf.mxu0
    %v4579 = vadd.f32 0.0, %v4578
    %4580 = vmatmul.f32.gmra.mxu0 %v4181
    %v4581 = vpop.f32.mrf.mxu0
    %v4582 = vadd.f32 0.0, %v4581
    %4583 = vmatmul.f32.gmra.mxu0 %v4184
    %v4584 = vpop.f32.mrf.mxu0
    %v4585 = vadd.f32 0.0, %v4584
    %4586 = vmatmul.f32.gmra.mxu0 %v4187
    %v4587 = vpop.f32.mrf.mxu0
    %v4588 = vadd.f32 0.0, %v4587
    %4589 = vmatmul.f32.gmra.mxu0 %v4190
    %v4590 = vpop.f32.mrf.mxu0
    %v4591 = vadd.f32 0.0, %v4590
    %4592 = vmatmul.f32.gmra.mxu0 %v4193
    %v4593 = vpop.f32.mrf.mxu0
    %v4594 = vadd.f32 0.0, %v4593
    %4595 = vmatmul.f32.gmra.mxu0 %v4196
    %v4596 = vpop.f32.mrf.mxu0
    %v4597 = vadd.f32 0.0, %v4596
    %4598 = vmatmul.f32.gmra.mxu0 %v4199
    %v4599 = vpop.f32.mrf.mxu0
    %v4600 = vadd.f32 0.0, %v4599
    %4601 = vmatmul.f32.gmra.mxu0 %v4202
    %v4602 = vpop.f32.mrf.mxu0
    %v4603 = vadd.f32 0.0, %v4602
    %4604 = vmatmul.f32.gmra.mxu0 %v4205
    %v4605 = vpop.f32.mrf.mxu0
    %v4606 = vadd.f32 0.0, %v4605
    %4607 = vmatmul.f32.gmra.mxu0 %v4208
    %v4608 = vpop.f32.mrf.mxu0
    %v4609 = vadd.f32 0.0, %v4608
    %4610 = vmatmul.f32.gmra.mxu0 %v4211
    %v4611 = vpop.f32.mrf.mxu0
    %v4612 = vadd.f32 0.0, %v4611
    %4613 = vmatmul.f32.gmra.mxu0 %v4214
    %v4614 = vpop.f32.mrf.mxu0
    %v4615 = vadd.f32 0.0, %v4614
    %4616 = vmatmul.f32.gmra.mxu0 %v4217
    %v4617 = vpop.f32.mrf.mxu0
    %v4618 = vadd.f32 0.0, %v4617
    %4619 = vmatmul.f32.gmra.mxu0 %v4220
    %v4620 = vpop.f32.mrf.mxu0
    %v4621 = vadd.f32 0.0, %v4620
    %4622 = vmatmul.f32.gmra.mxu0 %v4223
    %v4623 = vpop.f32.mrf.mxu0
    %v4624 = vadd.f32 0.0, %v4623
    %4625 = vmatmul.f32.gmra.mxu0 %v4226
    %v4626 = vpop.f32.mrf.mxu0
    %v4627 = vadd.f32 0.0, %v4626
    %4628 = vmatmul.f32.gmra.mxu0 %v4229
    %v4629 = vpop.f32.mrf.mxu0
    %v4630 = vadd.f32 0.0, %v4629
    %4631 = vmatmul.f32.gmra.mxu0 %v4232
    %v4632 = vpop.f32.mrf.mxu0
    %v4633 = vadd.f32 0.0, %v4632
    %4634 = vmatmul.f32.gmra.mxu0 %v4235
    %v4635 = vpop.f32.mrf.mxu0
    %v4636 = vadd.f32 0.0, %v4635
    %4637 = vmatmul.f32.gmra.mxu0 %v4238
    %v4638 = vpop.f32.mrf.mxu0
    %v4639 = vadd.f32 0.0, %v4638
    %4640 = vmatmul.f32.gmra.mxu0 %v4241
    %v4641 = vpop.f32.mrf.mxu0
    %v4642 = vadd.f32 0.0, %v4641
    %4643 = vmatmul.f32.gmra.mxu0 %v4244
    %v4644 = vpop.f32.mrf.mxu0
    %v4645 = vadd.f32 0.0, %v4644
    %4646 = vmatmul.f32.gmra.mxu0 %v4247
    %v4647 = vpop.f32.mrf.mxu0
    %v4648 = vadd.f32 0.0, %v4647
    %4649 = vmatmul.f32.gmra.mxu0 %v4250
    %v4650 = vpop.f32.mrf.mxu0
    %v4651 = vadd.f32 0.0, %v4650
    %4652 = vmatmul.f32.gmra.mxu0 %v4253
    %v4653 = vpop.f32.mrf.mxu0
    %v4654 = vadd.f32 0.0, %v4653
    %4655 = vmatmul.f32.gmra.mxu0 %v4256
    %v4656 = vpop.f32.mrf.mxu0
    %v4657 = vadd.f32 0.0, %v4656
    %4658 = vmatmul.f32.gmra.mxu0 %v4259
    %v4659 = vpop.f32.mrf.mxu0
    %v4660 = vadd.f32 0.0, %v4659
    %4661 = vmatmul.f32.gmra.mxu0 %v4262
    %v4662 = vpop.f32.mrf.mxu0
    %v4663 = vadd.f32 0.0, %v4662
    %4664 = vmatmul.f32.gmra.mxu0 %v4265
    %v4665 = vpop.f32.mrf.mxu0
    %v4666 = vadd.f32 0.0, %v4665
    %4667 = vmatmul.f32.gmra.mxu0 %v4268
    %v4668 = vpop.f32.mrf.mxu0
    %v4669 = vadd.f32 0.0, %v4668
    %4670 = vmatmul.f32.gmra.mxu0 %v4271
    %v4671 = vpop.f32.mrf.mxu0
    %v4672 = vadd.f32 0.0, %v4671
    %4673 = vmatmul.f32.gmra.mxu0 %v4274
    %v4674 = vpop.f32.mrf.mxu0
    %v4675 = vadd.f32 0.0, %v4674
    %4676 = vmatmul.f32.gmra.mxu0 %v4277
    %v4677 = vpop.f32.mrf.mxu0
    %v4678 = vadd.f32 0.0, %v4677
    %4679 = vmatmul.f32.gmra.mxu0 %v4280
    %v4680 = vpop.f32.mrf.mxu0
    %v4681 = vadd.f32 0.0, %v4680
    %4682 = vmatmul.f32.gmra.mxu0 %v4283
    %v4683 = vpop.f32.mrf.mxu0
    %v4684 = vadd.f32 0.0, %v4683
    %4685 = vmatmul.f32.gmra.mxu0 %v4286
    %v4686 = vpop.f32.mrf.mxu0
    %v4687 = vadd.f32 0.0, %v4686
    %4688 = vmatmul.f32.gmra.mxu0 %v4289
    %v4689 = vpop.f32.mrf.mxu0
    %v4690 = vadd.f32 0.0, %v4689
    %4691 = vmatmul.f32.gmra.mxu0 %v4292
    %v4692 = vpop.f32.mrf.mxu0
    %v4693 = vadd.f32 0.0, %v4692
    %4694 = vmatmul.f32.gmra.mxu0 %v4295
    %v4695 = vpop.f32.mrf.mxu0
    %v4696 = vadd.f32 0.0, %v4695
    %4697 = vmatmul.f32.gmra.mxu0 %v4298
    %v4698 = vpop.f32.mrf.mxu0
    %v4699 = vadd.f32 0.0, %v4698
    %4700 = vmatmul.f32.gmra.mxu0 %v4301
    %v4701 = vpop.f32.mrf.mxu0
    %v4702 = vadd.f32 0.0, %v4701
    %4703 = vmatmul.f32.gmra.mxu0 %v4304
    %v4704 = vpop.f32.mrf.mxu0
    %v4705 = vadd.f32 0.0, %v4704
    %4706 = vmatmul.f32.gmra.mxu0 %v4307
    %v4707 = vpop.f32.mrf.mxu0
    %v4708 = vadd.f32 0.0, %v4707
    %4709 = vmatmul.f32.gmra.mxu0 %v4310
    %v4710 = vpop.f32.mrf.mxu0
    %v4711 = vadd.f32 0.0, %v4710
    %4712 = vmatmul.f32.gmra.mxu0 %v4313
    %v4713 = vpop.f32.mrf.mxu0
    %v4714 = vadd.f32 0.0, %v4713
    %4715 = vmatmul.f32.gmra.mxu0 %v4316
    %v4716 = vpop.f32.mrf.mxu0
    %v4717 = vadd.f32 0.0, %v4716
    %4718 = vmatmul.f32.gmra.mxu0 %v4319
    %v4719 = vpop.f32.mrf.mxu0
    %v4720 = vadd.f32 0.0, %v4719
    %4721 = vmatmul.f32.gmra.mxu0 %v4322
    %v4722 = vpop.f32.mrf.mxu0
    %v4723 = vadd.f32 0.0, %v4722
    %4724 = vmatmul.f32.gmra.mxu0 %v4325
    %v4725 = vpop.f32.mrf.mxu0
    %v4726 = vadd.f32 0.0, %v4725
    %4727 = vmatmul.f32.gmra.mxu0 %v4328
    %v4728 = vpop.f32.mrf.mxu0
    %v4729 = vadd.f32 0.0, %v4728
    %4730 = vmatmul.f32.gmra.mxu0 %v4331
    %v4731 = vpop.f32.mrf.mxu0
    %v4732 = vadd.f32 0.0, %v4731
    %4733 = vmatmul.f32.gmra.mxu0 %v4334
    %v4734 = vpop.f32.mrf.mxu0
    %v4735 = vadd.f32 0.0, %v4734
    %4736 = vmatmul.f32.gmra.mxu0 %v4337
    %v4737 = vpop.f32.mrf.mxu0
    %v4738 = vadd.f32 0.0, %v4737
    %4739 = vmatmul.f32.gmra.mxu0 %v4340
    %v4740 = vpop.f32.mrf.mxu0
    %v4741 = vadd.f32 0.0, %v4740
    %4742 = vmatmul.f32.gmra.mxu0 %v4343
    %v4743 = vpop.f32.mrf.mxu0
    %v4744 = vadd.f32 0.0, %v4743
    %4745 = vmatmul.f32.gmra.mxu0 %v4346
    %v4746 = vpop.f32.mrf.mxu0
    %v4747 = vadd.f32 0.0, %v4746
    %4748 = vmatmul.f32.gmra.mxu0 %v4349
    %v4749 = vpop.f32.mrf.mxu0
    %v4750 = vadd.f32 0.0, %v4749
    %4751 = vmatmul.f32.gmra.mxu0 %v4352
    %v4752 = vpop.f32.mrf.mxu0
    %v4753 = vadd.f32 0.0, %v4752
    %4754 = vmatmul.f32.gmra.mxu0 %v4355
    %v4755 = vpop.f32.mrf.mxu0
    %v4756 = vadd.f32 0.0, %v4755
    %4757 = vmatmul.f32.gmra.mxu0 %v4358
    %v4758 = vpop.f32.mrf.mxu0
    %v4759 = vadd.f32 0.0, %v4758
    %4760 = vmatmul.f32.gmra.mxu0 %v4361
    %v4761 = vpop.f32.mrf.mxu0
    %v4762 = vadd.f32 0.0, %v4761
    %4763 = vmatmul.f32.gmra.mxu0 %v4364
    %v4764 = vpop.f32.mrf.mxu0
    %v4765 = vadd.f32 0.0, %v4764
    %4766 = vmatmul.f32.gmra.mxu0 %v4367
    %v4767 = vpop.f32.mrf.mxu0
    %v4768 = vadd.f32 0.0, %v4767
    %4769 = vmatmul.f32.gmra.mxu0 %v4370
    %v4770 = vpop.f32.mrf.mxu0
    %v4771 = vadd.f32 0.0, %v4770
    %4772 = vmatmul.f32.gmra.mxu0 %v4373
    %v4773 = vpop.f32.mrf.mxu0
    %v4774 = vadd.f32 0.0, %v4773
    %4775 = vmatmul.f32.gmra.mxu0 %v4376
    %v4776 = vpop.f32.mrf.mxu0
    %v4777 = vadd.f32 0.0, %v4776
    %4778 = vmatmul.f32.gmra.mxu0 %v4379
    %v4779 = vpop.f32.mrf.mxu0
    %v4780 = vadd.f32 0.0, %v4779
    %4781 = vmatmul.f32.gmra.mxu0 %v4382
    %v4782 = vpop.f32.mrf.mxu0
    %v4783 = vadd.f32 0.0, %v4782
    %4784 = vmatmul.f32.gmra.mxu0 %v4385
    %v4785 = vpop.f32.mrf.mxu0
    %v4786 = vadd.f32 0.0, %v4785
    %4787 = vmatmul.f32.gmra.mxu0 %v4388
    %v4788 = vpop.f32.mrf.mxu0
    %v4789 = vadd.f32 0.0, %v4788
    %4790 = vmatmul.f32.gmra.mxu0 %v4391
    %v4791 = vpop.f32.mrf.mxu0
    %v4792 = vadd.f32 0.0, %v4791
    %4793 = vmatmul.f32.gmra.mxu0 %v4394
    %v4794 = vpop.f32.mrf.mxu0
    %v4795 = vadd.f32 0.0, %v4794
    %4796 = vmatmul.f32.gmra.mxu0 %v4397
    %v4797 = vpop.f32.mrf.mxu0
    %v4798 = vadd.f32 0.0, %v4797
    %4799 = vmatmul.f32.gmra.mxu0 %v4400
    %v4800 = vpop.f32.mrf.mxu0
    %v4801 = vadd.f32 0.0, %v4800
    %4802 = vmatmul.f32.gmra.mxu0 %v4403
    %v4803 = vpop.f32.mrf.mxu0
    %v4804 = vadd.f32 0.0, %v4803
    %4805 = vmatmul.f32.gmra.mxu0 %v4406
    %v4806 = vpop.f32.mrf.mxu0
    %v4807 = vadd.f32 0.0, %v4806
    %4808 = vmatmul.f32.gmra.mxu0 %v4409
    %v4809 = vpop.f32.mrf.mxu0
    %v4810 = vadd.f32 0.0, %v4809
    %4811 = vmatmul.f32.gmra.mxu0 %v4412
    %v4812 = vpop.f32.mrf.mxu0
    %v4813 = vadd.f32 0.0, %v4812
    %4814 = vmatmul.f32.gmra.mxu0 %v4415
    %v4815 = vpop.f32.mrf.mxu0
    %v4816 = vadd.f32 0.0, %v4815
    %4817 = vmatmul.f32.gmra.mxu0 %v4418
    %v4818 = vpop.f32.mrf.mxu0
    %v4819 = vadd.f32 0.0, %v4818
    %4820 = vmatmul.f32.gmra.mxu0 %v4421
    %v4821 = vpop.f32.mrf.mxu0
    %v4822 = vadd.f32 0.0, %v4821
    %4823 = vmatmul.f32.gmra.mxu0 %v4424
    %v4824 = vpop.f32.mrf.mxu0
    %v4825 = vadd.f32 0.0, %v4824
    %4826 = vmatmul.f32.gmra.mxu0 %v4427
    %v4827 = vpop.f32.mrf.mxu0
    %v4828 = vadd.f32 0.0, %v4827
    %4829 = vmatmul.f32.gmra.mxu0 %v4430
    %v4830 = vpop.f32.mrf.mxu0
    %v4831 = vadd.f32 0.0, %v4830
    %4832 = vmatmul.f32.gmra.mxu0 %v4433
    %v4833 = vpop.f32.mrf.mxu0
    %v4834 = vadd.f32 0.0, %v4833
    %4835 = vmatmul.f32.gmra.mxu0 %v4436
    %v4836 = vpop.f32.mrf.mxu0
    %v4837 = vadd.f32 0.0, %v4836
    %4838 = vmatmul.f32.gmra.mxu0 %v4439
    %v4839 = vpop.f32.mrf.mxu0
    %v4840 = vadd.f32 0.0, %v4839
    %4841 = vmatmul.f32.gmra.mxu0 %v4442
    %v4842 = vpop.f32.mrf.mxu0
    %v4843 = vadd.f32 0.0, %v4842
    %4844 = vmatmul.f32.gmra.mxu0 %v4445
    %v4845 = vpop.f32.mrf.mxu0
    %v4846 = vadd.f32 0.0, %v4845
    %4847 = vmatmul.f32.gmra.mxu0 %v4448
    %v4848 = vpop.f32.mrf.mxu0
    %v4849 = vadd.f32 0.0, %v4848
    %4850 = vmatmul.f32.gmra.mxu0 %v4451
    %v4851 = vpop.f32.mrf.mxu0
    %v4852 = vadd.f32 0.0, %v4851
    %4853 = vmatmul.f32.gmra.mxu0 %v4454
    %v4854 = vpop.f32.mrf.mxu0
    %v4855 = vadd.f32 0.0, %v4854
    %4856 = vmatmul.f32.gmra.mxu0 %v4457
    %v4857 = vpop.f32.mrf.mxu0
    %v4858 = vadd.f32 0.0, %v4857
    %4859 = vmatmul.f32.gmra.mxu0 %v4460
    %v4860 = vpop.f32.mrf.mxu0
    %v4861 = vadd.f32 0.0, %v4860
    %4862 = vmatmul.f32.gmra.mxu0 %v4463
    %v4863 = vpop.f32.mrf.mxu0
    %v4864 = vadd.f32 0.0, %v4863
    %4865 = vmatmul.f32.gmra.mxu0 %v4466
    %v4866 = vpop.f32.mrf.mxu0
    %v4867 = vadd.f32 0.0, %v4866
    %4868 = vmatmul.f32.gmra.mxu0 %v4469
    %v4869 = vpop.f32.mrf.mxu0
    %v4870 = vadd.f32 0.0, %v4869
    %4871 = vmatmul.f32.gmra.mxu0 %v4472
    %v4872 = vpop.f32.mrf.mxu0
    %v4873 = vadd.f32 0.0, %v4872
    %4874 = vmatmul.f32.gmra.mxu0 %v4475
    %v4875 = vpop.f32.mrf.mxu0
    %v4876 = vadd.f32 0.0, %v4875
    %4877 = vmatmul.f32.gmra.mxu0 %v4478
    %v4878 = vpop.f32.mrf.mxu0
    %v4879 = vadd.f32 0.0, %v4878
    %4880 = vmatmul.f32.gmra.mxu0 %v4481
    %v4881 = vpop.f32.mrf.mxu0
    %v4882 = vadd.f32 0.0, %v4881
    %4883 = vmatmul.f32.gmra.mxu0 %v4484
    %v4884 = vpop.f32.mrf.mxu0
    %v4885 = vadd.f32 0.0, %v4884
    %4886 = vmatmul.f32.gmra.mxu0 %v4487
    %v4887 = vpop.f32.mrf.mxu0
    %v4888 = vadd.f32 0.0, %v4887
    %4889 = vmatmul.f32.gmra.mxu0 %v4490
    %v4890 = vpop.f32.mrf.mxu0
    %v4891 = vadd.f32 0.0, %v4890
    %4892 = vmatmul.f32.gmra.mxu0 %v4493
    %v4893 = vpop.f32.mrf.mxu0
    %v4894 = vadd.f32 0.0, %v4893
    %4895 = vmatmul.f32.gmra.mxu0 %v4496
    %v4896 = vpop.f32.mrf.mxu0
    %v4897 = vadd.f32 0.0, %v4896
    %4898 = vmatmul.f32.gmra.mxu0 %v4499
    %v4899 = vpop.f32.mrf.mxu0
    %v4900 = vadd.f32 0.0, %v4899
    %4901 = vmatmul.f32.gmra.mxu0 %v4502
    %v4902 = vpop.f32.mrf.mxu0
    %v4903 = vadd.f32 0.0, %v4902
    %4904 = vmatmul.f32.gmra.mxu0 %v4505
    %v4905 = vpop.f32.mrf.mxu0
    %v4906 = vadd.f32 0.0, %v4905
    %4907 = vmatmul.f32.gmra.mxu0 %v4508
    %v4908 = vpop.f32.mrf.mxu0
    %v4909 = vadd.f32 0.0, %v4908
    %4910 = vmatmul.f32.gmra.mxu0 %v4511
    %v4911 = vpop.f32.mrf.mxu0
    %v4912 = vadd.f32 0.0, %v4911
    %4913 = vmatmul.f32.gmra.mxu0 %v4514
    %v4914 = vpop.f32.mrf.mxu0
    %v4915 = vadd.f32 0.0, %v4914
    %4916 = vmatmul.f32.gmra.mxu0 %v4517
    %v4917 = vpop.f32.mrf.mxu0
    %v4918 = vadd.f32 0.0, %v4917
    %4919 = vmatmul.f32.gmra.mxu0 %v4520
    %v4920 = vpop.f32.mrf.mxu0
    %v4921 = vadd.f32 0.0, %v4920
    %4922 = vmatmul.f32.gmra.mxu0 %v4523
    %v4923 = vpop.f32.mrf.mxu0
    %v4924 = vadd.f32 0.0, %v4923
    %4925 = vmatmul.f32.gmra.mxu0 %v4526
    %v4926 = vpop.f32.mrf.mxu0
    %v4927 = vadd.f32 0.0, %v4926
    %4928 = vmatmul.f32.gmra.mxu0 %v4529
    %v4929 = vpop.f32.mrf.mxu0
    %v4930 = vadd.f32 0.0, %v4929
    %4931 = vmatmul.f32.gmra.mxu0 %v4532
    %v4932 = vpop.f32.mrf.mxu0
    %v4933 = vadd.f32 0.0, %v4932
    %4934 = vmatmul.f32.gmra.mxu0 %v4535
    %v4935 = vpop.f32.mrf.mxu0
    %v4936 = vadd.f32 0.0, %v4935
    %4937 = vmatmul.f32.gmra.mxu0 %v4538
    %v4938 = vpop.f32.mrf.mxu0
    %v4939 = vadd.f32 0.0, %v4938
    %4940 = vmatmul.f32.gmra.mxu0 %v4541
    %v4941 = vpop.f32.mrf.mxu0
    %v4942 = vadd.f32 0.0, %v4941
    %4943 = vmatmul.f32.gmra.mxu0 %v4544
    %v4944 = vpop.f32.mrf.mxu0
    %v4945 = vadd.f32 0.0, %v4944
    %4946 = vdwg.mxu0
    %v4947 = vadd.f32 %v3890, %v4564
    %v4948 = vadd.f32 %v3891, %v4567
    %v4949 = vadd.f32 %v3892, %v4570
    %v4950 = vadd.f32 %v3893, %v4573
    %v4951 = vadd.f32 %v3894, %v4576
    %v4952 = vadd.f32 %v3895, %v4579
    %v4953 = vadd.f32 %v3896, %v4582
    %v4954 = vadd.f32 %v3897, %v4585
    %v4955 = vadd.f32 %v3898, %v4588
    %v4956 = vadd.f32 %v3899, %v4591
    %v4957 = vadd.f32 %v3900, %v4594
    %v4958 = vadd.f32 %v3901, %v4597
    %v4959 = vadd.f32 %v3902, %v4600
    %v4960 = vadd.f32 %v3903, %v4603
    %v4961 = vadd.f32 %v3904, %v4606
    %v4962 = vadd.f32 %v3905, %v4609
    %v4963 = vadd.f32 %v3906, %v4612
    %v4964 = vadd.f32 %v3907, %v4615
    %v4965 = vadd.f32 %v3908, %v4618
    %v4966 = vadd.f32 %v3909, %v4621
    %v4967 = vadd.f32 %v3910, %v4624
    %v4968 = vadd.f32 %v3911, %v4627
    %v4969 = vadd.f32 %v3912, %v4630
    %v4970 = vadd.f32 %v3913, %v4633
    %v4971 = vadd.f32 %v3914, %v4636
    %v4972 = vadd.f32 %v3915, %v4639
    %v4973 = vadd.f32 %v3916, %v4642
    %v4974 = vadd.f32 %v3917, %v4645
    %v4975 = vadd.f32 %v3918, %v4648
    %v4976 = vadd.f32 %v3919, %v4651
    %v4977 = vadd.f32 %v3920, %v4654
    %v4978 = vadd.f32 %v3921, %v4657
    %v4979 = vadd.f32 %v3922, %v4660
    %v4980 = vadd.f32 %v3923, %v4663
    %v4981 = vadd.f32 %v3924, %v4666
    %v4982 = vadd.f32 %v3925, %v4669
    %v4983 = vadd.f32 %v3926, %v4672
    %v4984 = vadd.f32 %v3927, %v4675
    %v4985 = vadd.f32 %v3928, %v4678
    %v4986 = vadd.f32 %v3929, %v4681
    %v4987 = vadd.f32 %v3930, %v4684
    %v4988 = vadd.f32 %v3931, %v4687
    %v4989 = vadd.f32 %v3932, %v4690
    %v4990 = vadd.f32 %v3933, %v4693
    %v4991 = vadd.f32 %v3934, %v4696
    %v4992 = vadd.f32 %v3935, %v4699
    %v4993 = vadd.f32 %v3936, %v4702
    %v4994 = vadd.f32 %v3937, %v4705
    %v4995 = vadd.f32 %v3938, %v4708
    %v4996 = vadd.f32 %v3939, %v4711
    %v4997 = vadd.f32 %v3940, %v4714
    %v4998 = vadd.f32 %v3941, %v4717
    %v4999 = vadd.f32 %v3942, %v4720
    %v5000 = vadd.f32 %v3943, %v4723
    %v5001 = vadd.f32 %v3944, %v4726
    %v5002 = vadd.f32 %v3945, %v4729
    %v5003 = vadd.f32 %v3946, %v4732
    %v5004 = vadd.f32 %v3947, %v4735
    %v5005 = vadd.f32 %v3948, %v4738
    %v5006 = vadd.f32 %v3949, %v4741
    %v5007 = vadd.f32 %v3950, %v4744
    %v5008 = vadd.f32 %v3951, %v4747
    %v5009 = vadd.f32 %v3952, %v4750
    %v5010 = vadd.f32 %v3953, %v4753
    %v5011 = vadd.f32 %v3954, %v4756
    %v5012 = vadd.f32 %v3955, %v4759
    %v5013 = vadd.f32 %v3956, %v4762
    %v5014 = vadd.f32 %v3957, %v4765
    %v5015 = vadd.f32 %v3958, %v4768
    %v5016 = vadd.f32 %v3959, %v4771
    %v5017 = vadd.f32 %v3960, %v4774
    %v5018 = vadd.f32 %v3961, %v4777
    %v5019 = vadd.f32 %v3962, %v4780
    %v5020 = vadd.f32 %v3963, %v4783
    %v5021 = vadd.f32 %v3964, %v4786
    %v5022 = vadd.f32 %v3965, %v4789
    %v5023 = vadd.f32 %v3966, %v4792
    %v5024 = vadd.f32 %v3967, %v4795
    %v5025 = vadd.f32 %v3968, %v4798
    %v5026 = vadd.f32 %v3969, %v4801
    %v5027 = vadd.f32 %v3970, %v4804
    %v5028 = vadd.f32 %v3971, %v4807
    %v5029 = vadd.f32 %v3972, %v4810
    %v5030 = vadd.f32 %v3973, %v4813
    %v5031 = vadd.f32 %v3974, %v4816
    %v5032 = vadd.f32 %v3975, %v4819
    %v5033 = vadd.f32 %v3976, %v4822
    %v5034 = vadd.f32 %v3977, %v4825
    %v5035 = vadd.f32 %v3978, %v4828
    %v5036 = vadd.f32 %v3979, %v4831
    %v5037 = vadd.f32 %v3980, %v4834
    %v5038 = vadd.f32 %v3981, %v4837
    %v5039 = vadd.f32 %v3982, %v4840
    %v5040 = vadd.f32 %v3983, %v4843
    %v5041 = vadd.f32 %v3984, %v4846
    %v5042 = vadd.f32 %v3985, %v4849
    %v5043 = vadd.f32 %v3986, %v4852
    %v5044 = vadd.f32 %v3987, %v4855
    %v5045 = vadd.f32 %v3988, %v4858
    %v5046 = vadd.f32 %v3989, %v4861
    %v5047 = vadd.f32 %v3990, %v4864
    %v5048 = vadd.f32 %v3991, %v4867
    %v5049 = vadd.f32 %v3992, %v4870
    %v5050 = vadd.f32 %v3993, %v4873
    %v5051 = vadd.f32 %v3994, %v4876
    %v5052 = vadd.f32 %v3995, %v4879
    %v5053 = vadd.f32 %v3996, %v4882
    %v5054 = vadd.f32 %v3997, %v4885
    %v5055 = vadd.f32 %v3998, %v4888
    %v5056 = vadd.f32 %v3999, %v4891
    %v5057 = vadd.f32 %v4000, %v4894
    %v5058 = vadd.f32 %v4001, %v4897
    %v5059 = vadd.f32 %v4002, %v4900
    %v5060 = vadd.f32 %v4003, %v4903
    %v5061 = vadd.f32 %v4004, %v4906
    %v5062 = vadd.f32 %v4005, %v4909
    %v5063 = vadd.f32 %v4006, %v4912
    %v5064 = vadd.f32 %v4007, %v4915
    %v5065 = vadd.f32 %v4008, %v4918
    %v5066 = vadd.f32 %v4009, %v4921
    %v5067 = vadd.f32 %v4010, %v4924
    %v5068 = vadd.f32 %v4011, %v4927
    %v5069 = vadd.f32 %v4012, %v4930
    %v5070 = vadd.f32 %v4013, %v4933
    %v5071 = vadd.f32 %v4014, %v4936
    %v5072 = vadd.f32 %v4015, %v4939
    %v5073 = vadd.f32 %v4016, %v4942
    %v5074 = vadd.f32 %v4017, %v4945
    %s5075 = scalar_lea.vmem [#allocation2], 160
    %v5076 = vld [vmem:[%s5075] sm:$0xff]
    %v5077 = vld [vmem:[%s5075 + $0x8] sm:$0xff]
    %v5078 = vld [vmem:[%s5075 + $0x10] sm:$0xff]
    %v5079 = vld [vmem:[%s5075 + $0x18] sm:$0xff]
    %v5080 = vld [vmem:[%s5075 + $0x20] sm:$0xff]
    %v5081 = vld [vmem:[%s5075 + $0x28] sm:$0xff]
    %v5082 = vld [vmem:[%s5075 + $0x30] sm:$0xff]
    %v5083 = vld [vmem:[%s5075 + $0x38] sm:$0xff]
    %v5084 = vld [vmem:[%s5075 + $0x40] sm:$0xff]
    %v5085 = vld [vmem:[%s5075 + $0x48] sm:$0xff]
    %v5086 = vld [vmem:[%s5075 + $0x50] sm:$0xff]
    %v5087 = vld [vmem:[%s5075 + $0x58] sm:$0xff]
    %v5088 = vld [vmem:[%s5075 + $0x60] sm:$0xff]
    %v5089 = vld [vmem:[%s5075 + $0x68] sm:$0xff]
    %v5090 = vld [vmem:[%s5075 + $0x70] sm:$0xff]
    %v5091 = vld [vmem:[%s5075 + $0x78] sm:$0xff]
    %v5092 = vld [vmem:[%s5075 + $0x80] sm:$0xff]
    %v5093 = vld [vmem:[%s5075 + $0x88] sm:$0xff]
    %v5094 = vld [vmem:[%s5075 + $0x90] sm:$0xff]
    %v5095 = vld [vmem:[%s5075 + $0x98] sm:$0xff]
    %v5096 = vld [vmem:[%s5075 + $0xa0] sm:$0xff]
    %v5097 = vld [vmem:[%s5075 + $0xa8] sm:$0xff]
    %v5098 = vld [vmem:[%s5075 + $0xb0] sm:$0xff]
    %v5099 = vld [vmem:[%s5075 + $0xb8] sm:$0xff]
    %v5100 = vld [vmem:[%s5075 + $0xc0] sm:$0xff]
    %v5101 = vld [vmem:[%s5075 + $0xc8] sm:$0xff]
    %v5102 = vld [vmem:[%s5075 + $0xd0] sm:$0xff]
    %v5103 = vld [vmem:[%s5075 + $0xd8] sm:$0xff]
    %v5104 = vld [vmem:[%s5075 + $0xe0] sm:$0xff]
    %v5105 = vld [vmem:[%s5075 + $0xe8] sm:$0xff]
    %v5106 = vld [vmem:[%s5075 + $0xf0] sm:$0xff]
    %v5107 = vld [vmem:[%s5075 + $0xf8] sm:$0xff]
    %v5108 = vld [vmem:[%s5075 + $0x100] sm:$0xff]
    %v5109 = vld [vmem:[%s5075 + $0x108] sm:$0xff]
    %v5110 = vld [vmem:[%s5075 + $0x110] sm:$0xff]
    %v5111 = vld [vmem:[%s5075 + $0x118] sm:$0xff]
    %v5112 = vld [vmem:[%s5075 + $0x120] sm:$0xff]
    %v5113 = vld [vmem:[%s5075 + $0x128] sm:$0xff]
    %v5114 = vld [vmem:[%s5075 + $0x130] sm:$0xff]
    %v5115 = vld [vmem:[%s5075 + $0x138] sm:$0xff]
    %v5116 = vld [vmem:[%s5075 + $0x140] sm:$0xff]
    %v5117 = vld [vmem:[%s5075 + $0x148] sm:$0xff]
    %v5118 = vld [vmem:[%s5075 + $0x150] sm:$0xff]
    %v5119 = vld [vmem:[%s5075 + $0x158] sm:$0xff]
    %v5120 = vld [vmem:[%s5075 + $0x160] sm:$0xff]
    %v5121 = vld [vmem:[%s5075 + $0x168] sm:$0xff]
    %v5122 = vld [vmem:[%s5075 + $0x170] sm:$0xff]
    %v5123 = vld [vmem:[%s5075 + $0x178] sm:$0xff]
    %v5124 = vld [vmem:[%s5075 + $0x180] sm:$0xff]
    %v5125 = vld [vmem:[%s5075 + $0x188] sm:$0xff]
    %v5126 = vld [vmem:[%s5075 + $0x190] sm:$0xff]
    %v5127 = vld [vmem:[%s5075 + $0x198] sm:$0xff]
    %v5128 = vld [vmem:[%s5075 + $0x1a0] sm:$0xff]
    %v5129 = vld [vmem:[%s5075 + $0x1a8] sm:$0xff]
    %v5130 = vld [vmem:[%s5075 + $0x1b0] sm:$0xff]
    %v5131 = vld [vmem:[%s5075 + $0x1b8] sm:$0xff]
    %v5132 = vld [vmem:[%s5075 + $0x1c0] sm:$0xff]
    %v5133 = vld [vmem:[%s5075 + $0x1c8] sm:$0xff]
    %v5134 = vld [vmem:[%s5075 + $0x1d0] sm:$0xff]
    %v5135 = vld [vmem:[%s5075 + $0x1d8] sm:$0xff]
    %v5136 = vld [vmem:[%s5075 + $0x1e0] sm:$0xff]
    %v5137 = vld [vmem:[%s5075 + $0x1e8] sm:$0xff]
    %v5138 = vld [vmem:[%s5075 + $0x1f0] sm:$0xff]
    %v5139 = vld [vmem:[%s5075 + $0x1f8] sm:$0xff]
    %v5140 = vld [vmem:[%s5075 + $0x200] sm:$0xff]
    %v5141 = vld [vmem:[%s5075 + $0x208] sm:$0xff]
    %v5142 = vld [vmem:[%s5075 + $0x210] sm:$0xff]
    %v5143 = vld [vmem:[%s5075 + $0x218] sm:$0xff]
    %v5144 = vld [vmem:[%s5075 + $0x220] sm:$0xff]
    %v5145 = vld [vmem:[%s5075 + $0x228] sm:$0xff]
    %v5146 = vld [vmem:[%s5075 + $0x230] sm:$0xff]
    %v5147 = vld [vmem:[%s5075 + $0x238] sm:$0xff]
    %v5148 = vld [vmem:[%s5075 + $0x240] sm:$0xff]
    %v5149 = vld [vmem:[%s5075 + $0x248] sm:$0xff]
    %v5150 = vld [vmem:[%s5075 + $0x250] sm:$0xff]
    %v5151 = vld [vmem:[%s5075 + $0x258] sm:$0xff]
    %v5152 = vld [vmem:[%s5075 + $0x260] sm:$0xff]
    %v5153 = vld [vmem:[%s5075 + $0x268] sm:$0xff]
    %v5154 = vld [vmem:[%s5075 + $0x270] sm:$0xff]
    %v5155 = vld [vmem:[%s5075 + $0x278] sm:$0xff]
    %v5156 = vld [vmem:[%s5075 + $0x280] sm:$0xff]
    %v5157 = vld [vmem:[%s5075 + $0x288] sm:$0xff]
    %v5158 = vld [vmem:[%s5075 + $0x290] sm:$0xff]
    %v5159 = vld [vmem:[%s5075 + $0x298] sm:$0xff]
    %v5160 = vld [vmem:[%s5075 + $0x2a0] sm:$0xff]
    %v5161 = vld [vmem:[%s5075 + $0x2a8] sm:$0xff]
    %v5162 = vld [vmem:[%s5075 + $0x2b0] sm:$0xff]
    %v5163 = vld [vmem:[%s5075 + $0x2b8] sm:$0xff]
    %v5164 = vld [vmem:[%s5075 + $0x2c0] sm:$0xff]
    %v5165 = vld [vmem:[%s5075 + $0x2c8] sm:$0xff]
    %v5166 = vld [vmem:[%s5075 + $0x2d0] sm:$0xff]
    %v5167 = vld [vmem:[%s5075 + $0x2d8] sm:$0xff]
    %v5168 = vld [vmem:[%s5075 + $0x2e0] sm:$0xff]
    %v5169 = vld [vmem:[%s5075 + $0x2e8] sm:$0xff]
    %v5170 = vld [vmem:[%s5075 + $0x2f0] sm:$0xff]
    %v5171 = vld [vmem:[%s5075 + $0x2f8] sm:$0xff]
    %v5172 = vld [vmem:[%s5075 + $0x300] sm:$0xff]
    %v5173 = vld [vmem:[%s5075 + $0x308] sm:$0xff]
    %v5174 = vld [vmem:[%s5075 + $0x310] sm:$0xff]
    %v5175 = vld [vmem:[%s5075 + $0x318] sm:$0xff]
    %v5176 = vld [vmem:[%s5075 + $0x320] sm:$0xff]
    %v5177 = vld [vmem:[%s5075 + $0x328] sm:$0xff]
    %v5178 = vld [vmem:[%s5075 + $0x330] sm:$0xff]
    %v5179 = vld [vmem:[%s5075 + $0x338] sm:$0xff]
    %v5180 = vld [vmem:[%s5075 + $0x340] sm:$0xff]
    %v5181 = vld [vmem:[%s5075 + $0x348] sm:$0xff]
    %v5182 = vld [vmem:[%s5075 + $0x350] sm:$0xff]
    %v5183 = vld [vmem:[%s5075 + $0x358] sm:$0xff]
    %v5184 = vld [vmem:[%s5075 + $0x360] sm:$0xff]
    %v5185 = vld [vmem:[%s5075 + $0x368] sm:$0xff]
    %v5186 = vld [vmem:[%s5075 + $0x370] sm:$0xff]
    %v5187 = vld [vmem:[%s5075 + $0x378] sm:$0xff]
    %v5188 = vld [vmem:[%s5075 + $0x380] sm:$0xff]
    %v5189 = vld [vmem:[%s5075 + $0x388] sm:$0xff]
    %v5190 = vld [vmem:[%s5075 + $0x390] sm:$0xff]
    %v5191 = vld [vmem:[%s5075 + $0x398] sm:$0xff]
    %v5192 = vld [vmem:[%s5075 + $0x3a0] sm:$0xff]
    %v5193 = vld [vmem:[%s5075 + $0x3a8] sm:$0xff]
    %v5194 = vld [vmem:[%s5075 + $0x3b0] sm:$0xff]
    %v5195 = vld [vmem:[%s5075 + $0x3b8] sm:$0xff]
    %v5196 = vld [vmem:[%s5075 + $0x3c0] sm:$0xff]
    %v5197 = vld [vmem:[%s5075 + $0x3c8] sm:$0xff]
    %v5198 = vld [vmem:[%s5075 + $0x3d0] sm:$0xff]
    %v5199 = vld [vmem:[%s5075 + $0x3d8] sm:$0xff]
    %v5200 = vld [vmem:[%s5075 + $0x3e0] sm:$0xff]
    %v5201 = vld [vmem:[%s5075 + $0x3e8] sm:$0xff]
    %v5202 = vld [vmem:[%s5075 + $0x3f0] sm:$0xff]
    %v5203 = vld [vmem:[%s5075 + $0x3f8] sm:$0xff]
    %s5204 = scalar_lea.vmem [#allocation5], 560
    %v5205 = vld [vmem:[%s5204] sm:$0xff]
    %v5206 = vld [vmem:[%s5204 + $0x8] sm:$0xff]
    %v5207 = vld [vmem:[%s5204 + $0x10] sm:$0xff]
    %v5208 = vld [vmem:[%s5204 + $0x18] sm:$0xff]
    %v5209 = vld [vmem:[%s5204 + $0x20] sm:$0xff]
    %v5210 = vld [vmem:[%s5204 + $0x28] sm:$0xff]
    %v5211 = vld [vmem:[%s5204 + $0x30] sm:$0xff]
    %v5212 = vld [vmem:[%s5204 + $0x38] sm:$0xff]
    %v5213 = vld [vmem:[%s5204 + $0x40] sm:$0xff]
    %v5214 = vld [vmem:[%s5204 + $0x48] sm:$0xff]
    %v5215 = vld [vmem:[%s5204 + $0x50] sm:$0xff]
    %v5216 = vld [vmem:[%s5204 + $0x58] sm:$0xff]
    %v5217 = vld [vmem:[%s5204 + $0x60] sm:$0xff]
    %v5218 = vld [vmem:[%s5204 + $0x68] sm:$0xff]
    %v5220 = vsel %vm333, %v5076, 0
    %v5223 = vsel %vm333, %v5077, 0
    %v5226 = vsel %vm333, %v5078, 0
    %v5229 = vsel %vm333, %v5079, 0
    %v5232 = vsel %vm333, %v5080, 0
    %v5235 = vsel %vm333, %v5081, 0
    %v5238 = vsel %vm333, %v5082, 0
    %v5241 = vsel %vm333, %v5083, 0
    %v5244 = vsel %vm333, %v5084, 0
    %v5247 = vsel %vm333, %v5085, 0
    %v5250 = vsel %vm333, %v5086, 0
    %v5253 = vsel %vm333, %v5087, 0
    %v5256 = vsel %vm333, %v5088, 0
    %v5259 = vsel %vm333, %v5089, 0
    %v5262 = vsel %vm333, %v5090, 0
    %v5265 = vsel %vm333, %v5091, 0
    %v5268 = vsel %vm333, %v5092, 0
    %v5271 = vsel %vm333, %v5093, 0
    %v5274 = vsel %vm333, %v5094, 0
    %v5277 = vsel %vm333, %v5095, 0
    %v5280 = vsel %vm333, %v5096, 0
    %v5283 = vsel %vm333, %v5097, 0
    %v5286 = vsel %vm333, %v5098, 0
    %v5289 = vsel %vm333, %v5099, 0
    %v5292 = vsel %vm333, %v5100, 0
    %v5295 = vsel %vm333, %v5101, 0
    %v5298 = vsel %vm333, %v5102, 0
    %v5301 = vsel %vm333, %v5103, 0
    %v5304 = vsel %vm333, %v5104, 0
    %v5307 = vsel %vm333, %v5105, 0
    %v5310 = vsel %vm333, %v5106, 0
    %v5313 = vsel %vm333, %v5107, 0
    %v5316 = vsel %vm333, %v5108, 0
    %v5319 = vsel %vm333, %v5109, 0
    %v5322 = vsel %vm333, %v5110, 0
    %v5325 = vsel %vm333, %v5111, 0
    %v5328 = vsel %vm333, %v5112, 0
    %v5331 = vsel %vm333, %v5113, 0
    %v5334 = vsel %vm333, %v5114, 0
    %v5337 = vsel %vm333, %v5115, 0
    %v5340 = vsel %vm333, %v5116, 0
    %v5343 = vsel %vm333, %v5117, 0
    %v5346 = vsel %vm333, %v5118, 0
    %v5349 = vsel %vm333, %v5119, 0
    %v5352 = vsel %vm333, %v5120, 0
    %v5355 = vsel %vm333, %v5121, 0
    %v5358 = vsel %vm333, %v5122, 0
    %v5361 = vsel %vm333, %v5123, 0
    %v5364 = vsel %vm333, %v5124, 0
    %v5367 = vsel %vm333, %v5125, 0
    %v5370 = vsel %vm333, %v5126, 0
    %v5373 = vsel %vm333, %v5127, 0
    %v5376 = vsel %vm333, %v5128, 0
    %v5379 = vsel %vm333, %v5129, 0
    %v5382 = vsel %vm333, %v5130, 0
    %v5385 = vsel %vm333, %v5131, 0
    %v5388 = vsel %vm333, %v5132, 0
    %v5391 = vsel %vm333, %v5133, 0
    %v5394 = vsel %vm333, %v5134, 0
    %v5397 = vsel %vm333, %v5135, 0
    %v5400 = vsel %vm333, %v5136, 0
    %v5403 = vsel %vm333, %v5137, 0
    %v5406 = vsel %vm333, %v5138, 0
    %v5409 = vsel %vm333, %v5139, 0
    %v5412 = vsel %vm333, %v5140, 0
    %v5415 = vsel %vm333, %v5141, 0
    %v5418 = vsel %vm333, %v5142, 0
    %v5421 = vsel %vm333, %v5143, 0
    %v5424 = vsel %vm333, %v5144, 0
    %v5427 = vsel %vm333, %v5145, 0
    %v5430 = vsel %vm333, %v5146, 0
    %v5433 = vsel %vm333, %v5147, 0
    %v5436 = vsel %vm333, %v5148, 0
    %v5439 = vsel %vm333, %v5149, 0
    %v5442 = vsel %vm333, %v5150, 0
    %v5445 = vsel %vm333, %v5151, 0
    %v5448 = vsel %vm333, %v5152, 0
    %v5451 = vsel %vm333, %v5153, 0
    %v5454 = vsel %vm333, %v5154, 0
    %v5457 = vsel %vm333, %v5155, 0
    %v5460 = vsel %vm333, %v5156, 0
    %v5463 = vsel %vm333, %v5157, 0
    %v5466 = vsel %vm333, %v5158, 0
    %v5469 = vsel %vm333, %v5159, 0
    %v5472 = vsel %vm333, %v5160, 0
    %v5475 = vsel %vm333, %v5161, 0
    %v5478 = vsel %vm333, %v5162, 0
    %v5481 = vsel %vm333, %v5163, 0
    %v5484 = vsel %vm333, %v5164, 0
    %v5487 = vsel %vm333, %v5165, 0
    %v5490 = vsel %vm333, %v5166, 0
    %v5493 = vsel %vm333, %v5167, 0
    %v5496 = vsel %vm333, %v5168, 0
    %v5499 = vsel %vm333, %v5169, 0
    %v5502 = vsel %vm333, %v5170, 0
    %v5505 = vsel %vm333, %v5171, 0
    %v5508 = vsel %vm333, %v5172, 0
    %v5511 = vsel %vm333, %v5173, 0
    %v5514 = vsel %vm333, %v5174, 0
    %v5517 = vsel %vm333, %v5175, 0
    %v5520 = vsel %vm333, %v5176, 0
    %v5523 = vsel %vm333, %v5177, 0
    %v5526 = vsel %vm333, %v5178, 0
    %v5529 = vsel %vm333, %v5179, 0
    %v5532 = vsel %vm333, %v5180, 0
    %v5535 = vsel %vm333, %v5181, 0
    %v5538 = vsel %vm333, %v5182, 0
    %v5541 = vsel %vm333, %v5183, 0
    %v5544 = vsel %vm333, %v5184, 0
    %v5547 = vsel %vm333, %v5185, 0
    %v5550 = vsel %vm333, %v5186, 0
    %v5553 = vsel %vm333, %v5187, 0
    %v5556 = vsel %vm333, %v5188, 0
    %v5559 = vsel %vm333, %v5189, 0
    %v5562 = vsel %vm333, %v5190, 0
    %v5565 = vsel %vm333, %v5191, 0
    %v5568 = vsel %vm333, %v5192, 0
    %v5571 = vsel %vm333, %v5193, 0
    %v5574 = vsel %vm333, %v5194, 0
    %v5577 = vsel %vm333, %v5195, 0
    %v5580 = vsel %vm333, %v5196, 0
    %v5583 = vsel %vm333, %v5197, 0
    %v5586 = vsel %vm333, %v5198, 0
    %v5589 = vsel %vm333, %v5199, 0
    %v5592 = vsel %vm333, %v5200, 0
    %v5595 = vsel %vm333, %v5201, 0
    %v5598 = vsel %vm333, %v5202, 0
    %v5601 = vsel %vm333, %v5203, 0
    %5603 = vmatpush.msra.mxu0 0.0
    %5604 = vmatpush.msra.mxu0 0.0
    %5605 = vmatpush.msra.mxu0 %v5218
    %5606 = vmatpush.msra.mxu0 %v5217
    %5607 = vmatpush.msra.mxu0 %v5216
    %5608 = vmatpush.msra.mxu0 %v5215
    %5609 = vmatpush.msra.mxu0 %v5214
    %5610 = vmatpush.msra.mxu0 %v5213
    %5611 = vmatpush.msra.mxu0 %v5212
    %5612 = vmatpush.msra.mxu0 %v5211
    %5613 = vmatpush.msra.mxu0 %v5210
    %5614 = vmatpush.msra.mxu0 %v5209
    %5615 = vmatpush.msra.mxu0 %v5208
    %5616 = vmatpush.msra.mxu0 %v5207
    %5617 = vmatpush.msra.mxu0 %v5206
    %5618 = vmatpush.msra.mxu0 %v5205
    %5619 = vmatmul.f32.gmra.mxu0 %v5220
    %v5620 = vpop.f32.mrf.mxu0
    %v5621 = vadd.f32 0.0, %v5620
    %5622 = vmatmul.f32.gmra.mxu0 %v5223
    %v5623 = vpop.f32.mrf.mxu0
    %v5624 = vadd.f32 0.0, %v5623
    %5625 = vmatmul.f32.gmra.mxu0 %v5226
    %v5626 = vpop.f32.mrf.mxu0
    %v5627 = vadd.f32 0.0, %v5626
    %5628 = vmatmul.f32.gmra.mxu0 %v5229
    %v5629 = vpop.f32.mrf.mxu0
    %v5630 = vadd.f32 0.0, %v5629
    %5631 = vmatmul.f32.gmra.mxu0 %v5232
    %v5632 = vpop.f32.mrf.mxu0
    %v5633 = vadd.f32 0.0, %v5632
    %5634 = vmatmul.f32.gmra.mxu0 %v5235
    %v5635 = vpop.f32.mrf.mxu0
    %v5636 = vadd.f32 0.0, %v5635
    %5637 = vmatmul.f32.gmra.mxu0 %v5238
    %v5638 = vpop.f32.mrf.mxu0
    %v5639 = vadd.f32 0.0, %v5638
    %5640 = vmatmul.f32.gmra.mxu0 %v5241
    %v5641 = vpop.f32.mrf.mxu0
    %v5642 = vadd.f32 0.0, %v5641
    %5643 = vmatmul.f32.gmra.mxu0 %v5244
    %v5644 = vpop.f32.mrf.mxu0
    %v5645 = vadd.f32 0.0, %v5644
    %5646 = vmatmul.f32.gmra.mxu0 %v5247
    %v5647 = vpop.f32.mrf.mxu0
    %v5648 = vadd.f32 0.0, %v5647
    %5649 = vmatmul.f32.gmra.mxu0 %v5250
    %v5650 = vpop.f32.mrf.mxu0
    %v5651 = vadd.f32 0.0, %v5650
    %5652 = vmatmul.f32.gmra.mxu0 %v5253
    %v5653 = vpop.f32.mrf.mxu0
    %v5654 = vadd.f32 0.0, %v5653
    %5655 = vmatmul.f32.gmra.mxu0 %v5256
    %v5656 = vpop.f32.mrf.mxu0
    %v5657 = vadd.f32 0.0, %v5656
    %5658 = vmatmul.f32.gmra.mxu0 %v5259
    %v5659 = vpop.f32.mrf.mxu0
    %v5660 = vadd.f32 0.0, %v5659
    %5661 = vmatmul.f32.gmra.mxu0 %v5262
    %v5662 = vpop.f32.mrf.mxu0
    %v5663 = vadd.f32 0.0, %v5662
    %5664 = vmatmul.f32.gmra.mxu0 %v5265
    %v5665 = vpop.f32.mrf.mxu0
    %v5666 = vadd.f32 0.0, %v5665
    %5667 = vmatmul.f32.gmra.mxu0 %v5268
    %v5668 = vpop.f32.mrf.mxu0
    %v5669 = vadd.f32 0.0, %v5668
    %5670 = vmatmul.f32.gmra.mxu0 %v5271
    %v5671 = vpop.f32.mrf.mxu0
    %v5672 = vadd.f32 0.0, %v5671
    %5673 = vmatmul.f32.gmra.mxu0 %v5274
    %v5674 = vpop.f32.mrf.mxu0
    %v5675 = vadd.f32 0.0, %v5674
    %5676 = vmatmul.f32.gmra.mxu0 %v5277
    %v5677 = vpop.f32.mrf.mxu0
    %v5678 = vadd.f32 0.0, %v5677
    %5679 = vmatmul.f32.gmra.mxu0 %v5280
    %v5680 = vpop.f32.mrf.mxu0
    %v5681 = vadd.f32 0.0, %v5680
    %5682 = vmatmul.f32.gmra.mxu0 %v5283
    %v5683 = vpop.f32.mrf.mxu0
    %v5684 = vadd.f32 0.0, %v5683
    %5685 = vmatmul.f32.gmra.mxu0 %v5286
    %v5686 = vpop.f32.mrf.mxu0
    %v5687 = vadd.f32 0.0, %v5686
    %5688 = vmatmul.f32.gmra.mxu0 %v5289
    %v5689 = vpop.f32.mrf.mxu0
    %v5690 = vadd.f32 0.0, %v5689
    %5691 = vmatmul.f32.gmra.mxu0 %v5292
    %v5692 = vpop.f32.mrf.mxu0
    %v5693 = vadd.f32 0.0, %v5692
    %5694 = vmatmul.f32.gmra.mxu0 %v5295
    %v5695 = vpop.f32.mrf.mxu0
    %v5696 = vadd.f32 0.0, %v5695
    %5697 = vmatmul.f32.gmra.mxu0 %v5298
    %v5698 = vpop.f32.mrf.mxu0
    %v5699 = vadd.f32 0.0, %v5698
    %5700 = vmatmul.f32.gmra.mxu0 %v5301
    %v5701 = vpop.f32.mrf.mxu0
    %v5702 = vadd.f32 0.0, %v5701
    %5703 = vmatmul.f32.gmra.mxu0 %v5304
    %v5704 = vpop.f32.mrf.mxu0
    %v5705 = vadd.f32 0.0, %v5704
    %5706 = vmatmul.f32.gmra.mxu0 %v5307
    %v5707 = vpop.f32.mrf.mxu0
    %v5708 = vadd.f32 0.0, %v5707
    %5709 = vmatmul.f32.gmra.mxu0 %v5310
    %v5710 = vpop.f32.mrf.mxu0
    %v5711 = vadd.f32 0.0, %v5710
    %5712 = vmatmul.f32.gmra.mxu0 %v5313
    %v5713 = vpop.f32.mrf.mxu0
    %v5714 = vadd.f32 0.0, %v5713
    %5715 = vmatmul.f32.gmra.mxu0 %v5316
    %v5716 = vpop.f32.mrf.mxu0
    %v5717 = vadd.f32 0.0, %v5716
    %5718 = vmatmul.f32.gmra.mxu0 %v5319
    %v5719 = vpop.f32.mrf.mxu0
    %v5720 = vadd.f32 0.0, %v5719
    %5721 = vmatmul.f32.gmra.mxu0 %v5322
    %v5722 = vpop.f32.mrf.mxu0
    %v5723 = vadd.f32 0.0, %v5722
    %5724 = vmatmul.f32.gmra.mxu0 %v5325
    %v5725 = vpop.f32.mrf.mxu0
    %v5726 = vadd.f32 0.0, %v5725
    %5727 = vmatmul.f32.gmra.mxu0 %v5328
    %v5728 = vpop.f32.mrf.mxu0
    %v5729 = vadd.f32 0.0, %v5728
    %5730 = vmatmul.f32.gmra.mxu0 %v5331
    %v5731 = vpop.f32.mrf.mxu0
    %v5732 = vadd.f32 0.0, %v5731
    %5733 = vmatmul.f32.gmra.mxu0 %v5334
    %v5734 = vpop.f32.mrf.mxu0
    %v5735 = vadd.f32 0.0, %v5734
    %5736 = vmatmul.f32.gmra.mxu0 %v5337
    %v5737 = vpop.f32.mrf.mxu0
    %v5738 = vadd.f32 0.0, %v5737
    %5739 = vmatmul.f32.gmra.mxu0 %v5340
    %v5740 = vpop.f32.mrf.mxu0
    %v5741 = vadd.f32 0.0, %v5740
    %5742 = vmatmul.f32.gmra.mxu0 %v5343
    %v5743 = vpop.f32.mrf.mxu0
    %v5744 = vadd.f32 0.0, %v5743
    %5745 = vmatmul.f32.gmra.mxu0 %v5346
    %v5746 = vpop.f32.mrf.mxu0
    %v5747 = vadd.f32 0.0, %v5746
    %5748 = vmatmul.f32.gmra.mxu0 %v5349
    %v5749 = vpop.f32.mrf.mxu0
    %v5750 = vadd.f32 0.0, %v5749
    %5751 = vmatmul.f32.gmra.mxu0 %v5352
    %v5752 = vpop.f32.mrf.mxu0
    %v5753 = vadd.f32 0.0, %v5752
    %5754 = vmatmul.f32.gmra.mxu0 %v5355
    %v5755 = vpop.f32.mrf.mxu0
    %v5756 = vadd.f32 0.0, %v5755
    %5757 = vmatmul.f32.gmra.mxu0 %v5358
    %v5758 = vpop.f32.mrf.mxu0
    %v5759 = vadd.f32 0.0, %v5758
    %5760 = vmatmul.f32.gmra.mxu0 %v5361
    %v5761 = vpop.f32.mrf.mxu0
    %v5762 = vadd.f32 0.0, %v5761
    %5763 = vmatmul.f32.gmra.mxu0 %v5364
    %v5764 = vpop.f32.mrf.mxu0
    %v5765 = vadd.f32 0.0, %v5764
    %5766 = vmatmul.f32.gmra.mxu0 %v5367
    %v5767 = vpop.f32.mrf.mxu0
    %v5768 = vadd.f32 0.0, %v5767
    %5769 = vmatmul.f32.gmra.mxu0 %v5370
    %v5770 = vpop.f32.mrf.mxu0
    %v5771 = vadd.f32 0.0, %v5770
    %5772 = vmatmul.f32.gmra.mxu0 %v5373
    %v5773 = vpop.f32.mrf.mxu0
    %v5774 = vadd.f32 0.0, %v5773
    %5775 = vmatmul.f32.gmra.mxu0 %v5376
    %v5776 = vpop.f32.mrf.mxu0
    %v5777 = vadd.f32 0.0, %v5776
    %5778 = vmatmul.f32.gmra.mxu0 %v5379
    %v5779 = vpop.f32.mrf.mxu0
    %v5780 = vadd.f32 0.0, %v5779
    %5781 = vmatmul.f32.gmra.mxu0 %v5382
    %v5782 = vpop.f32.mrf.mxu0
    %v5783 = vadd.f32 0.0, %v5782
    %5784 = vmatmul.f32.gmra.mxu0 %v5385
    %v5785 = vpop.f32.mrf.mxu0
    %v5786 = vadd.f32 0.0, %v5785
    %5787 = vmatmul.f32.gmra.mxu0 %v5388
    %v5788 = vpop.f32.mrf.mxu0
    %v5789 = vadd.f32 0.0, %v5788
    %5790 = vmatmul.f32.gmra.mxu0 %v5391
    %v5791 = vpop.f32.mrf.mxu0
    %v5792 = vadd.f32 0.0, %v5791
    %5793 = vmatmul.f32.gmra.mxu0 %v5394
    %v5794 = vpop.f32.mrf.mxu0
    %v5795 = vadd.f32 0.0, %v5794
    %5796 = vmatmul.f32.gmra.mxu0 %v5397
    %v5797 = vpop.f32.mrf.mxu0
    %v5798 = vadd.f32 0.0, %v5797
    %5799 = vmatmul.f32.gmra.mxu0 %v5400
    %v5800 = vpop.f32.mrf.mxu0
    %v5801 = vadd.f32 0.0, %v5800
    %5802 = vmatmul.f32.gmra.mxu0 %v5403
    %v5803 = vpop.f32.mrf.mxu0
    %v5804 = vadd.f32 0.0, %v5803
    %5805 = vmatmul.f32.gmra.mxu0 %v5406
    %v5806 = vpop.f32.mrf.mxu0
    %v5807 = vadd.f32 0.0, %v5806
    %5808 = vmatmul.f32.gmra.mxu0 %v5409
    %v5809 = vpop.f32.mrf.mxu0
    %v5810 = vadd.f32 0.0, %v5809
    %5811 = vmatmul.f32.gmra.mxu0 %v5412
    %v5812 = vpop.f32.mrf.mxu0
    %v5813 = vadd.f32 0.0, %v5812
    %5814 = vmatmul.f32.gmra.mxu0 %v5415
    %v5815 = vpop.f32.mrf.mxu0
    %v5816 = vadd.f32 0.0, %v5815
    %5817 = vmatmul.f32.gmra.mxu0 %v5418
    %v5818 = vpop.f32.mrf.mxu0
    %v5819 = vadd.f32 0.0, %v5818
    %5820 = vmatmul.f32.gmra.mxu0 %v5421
    %v5821 = vpop.f32.mrf.mxu0
    %v5822 = vadd.f32 0.0, %v5821
    %5823 = vmatmul.f32.gmra.mxu0 %v5424
    %v5824 = vpop.f32.mrf.mxu0
    %v5825 = vadd.f32 0.0, %v5824
    %5826 = vmatmul.f32.gmra.mxu0 %v5427
    %v5827 = vpop.f32.mrf.mxu0
    %v5828 = vadd.f32 0.0, %v5827
    %5829 = vmatmul.f32.gmra.mxu0 %v5430
    %v5830 = vpop.f32.mrf.mxu0
    %v5831 = vadd.f32 0.0, %v5830
    %5832 = vmatmul.f32.gmra.mxu0 %v5433
    %v5833 = vpop.f32.mrf.mxu0
    %v5834 = vadd.f32 0.0, %v5833
    %5835 = vmatmul.f32.gmra.mxu0 %v5436
    %v5836 = vpop.f32.mrf.mxu0
    %v5837 = vadd.f32 0.0, %v5836
    %5838 = vmatmul.f32.gmra.mxu0 %v5439
    %v5839 = vpop.f32.mrf.mxu0
    %v5840 = vadd.f32 0.0, %v5839
    %5841 = vmatmul.f32.gmra.mxu0 %v5442
    %v5842 = vpop.f32.mrf.mxu0
    %v5843 = vadd.f32 0.0, %v5842
    %5844 = vmatmul.f32.gmra.mxu0 %v5445
    %v5845 = vpop.f32.mrf.mxu0
    %v5846 = vadd.f32 0.0, %v5845
    %5847 = vmatmul.f32.gmra.mxu0 %v5448
    %v5848 = vpop.f32.mrf.mxu0
    %v5849 = vadd.f32 0.0, %v5848
    %5850 = vmatmul.f32.gmra.mxu0 %v5451
    %v5851 = vpop.f32.mrf.mxu0
    %v5852 = vadd.f32 0.0, %v5851
    %5853 = vmatmul.f32.gmra.mxu0 %v5454
    %v5854 = vpop.f32.mrf.mxu0
    %v5855 = vadd.f32 0.0, %v5854
    %5856 = vmatmul.f32.gmra.mxu0 %v5457
    %v5857 = vpop.f32.mrf.mxu0
    %v5858 = vadd.f32 0.0, %v5857
    %5859 = vmatmul.f32.gmra.mxu0 %v5460
    %v5860 = vpop.f32.mrf.mxu0
    %v5861 = vadd.f32 0.0, %v5860
    %5862 = vmatmul.f32.gmra.mxu0 %v5463
    %v5863 = vpop.f32.mrf.mxu0
    %v5864 = vadd.f32 0.0, %v5863
    %5865 = vmatmul.f32.gmra.mxu0 %v5466
    %v5866 = vpop.f32.mrf.mxu0
    %v5867 = vadd.f32 0.0, %v5866
    %5868 = vmatmul.f32.gmra.mxu0 %v5469
    %v5869 = vpop.f32.mrf.mxu0
    %v5870 = vadd.f32 0.0, %v5869
    %5871 = vmatmul.f32.gmra.mxu0 %v5472
    %v5872 = vpop.f32.mrf.mxu0
    %v5873 = vadd.f32 0.0, %v5872
    %5874 = vmatmul.f32.gmra.mxu0 %v5475
    %v5875 = vpop.f32.mrf.mxu0
    %v5876 = vadd.f32 0.0, %v5875
    %5877 = vmatmul.f32.gmra.mxu0 %v5478
    %v5878 = vpop.f32.mrf.mxu0
    %v5879 = vadd.f32 0.0, %v5878
    %5880 = vmatmul.f32.gmra.mxu0 %v5481
    %v5881 = vpop.f32.mrf.mxu0
    %v5882 = vadd.f32 0.0, %v5881
    %5883 = vmatmul.f32.gmra.mxu0 %v5484
    %v5884 = vpop.f32.mrf.mxu0
    %v5885 = vadd.f32 0.0, %v5884
    %5886 = vmatmul.f32.gmra.mxu0 %v5487
    %v5887 = vpop.f32.mrf.mxu0
    %v5888 = vadd.f32 0.0, %v5887
    %5889 = vmatmul.f32.gmra.mxu0 %v5490
    %v5890 = vpop.f32.mrf.mxu0
    %v5891 = vadd.f32 0.0, %v5890
    %5892 = vmatmul.f32.gmra.mxu0 %v5493
    %v5893 = vpop.f32.mrf.mxu0
    %v5894 = vadd.f32 0.0, %v5893
    %5895 = vmatmul.f32.gmra.mxu0 %v5496
    %v5896 = vpop.f32.mrf.mxu0
    %v5897 = vadd.f32 0.0, %v5896
    %5898 = vmatmul.f32.gmra.mxu0 %v5499
    %v5899 = vpop.f32.mrf.mxu0
    %v5900 = vadd.f32 0.0, %v5899
    %5901 = vmatmul.f32.gmra.mxu0 %v5502
    %v5902 = vpop.f32.mrf.mxu0
    %v5903 = vadd.f32 0.0, %v5902
    %5904 = vmatmul.f32.gmra.mxu0 %v5505
    %v5905 = vpop.f32.mrf.mxu0
    %v5906 = vadd.f32 0.0, %v5905
    %5907 = vmatmul.f32.gmra.mxu0 %v5508
    %v5908 = vpop.f32.mrf.mxu0
    %v5909 = vadd.f32 0.0, %v5908
    %5910 = vmatmul.f32.gmra.mxu0 %v5511
    %v5911 = vpop.f32.mrf.mxu0
    %v5912 = vadd.f32 0.0, %v5911
    %5913 = vmatmul.f32.gmra.mxu0 %v5514
    %v5914 = vpop.f32.mrf.mxu0
    %v5915 = vadd.f32 0.0, %v5914
    %5916 = vmatmul.f32.gmra.mxu0 %v5517
    %v5917 = vpop.f32.mrf.mxu0
    %v5918 = vadd.f32 0.0, %v5917
    %5919 = vmatmul.f32.gmra.mxu0 %v5520
    %v5920 = vpop.f32.mrf.mxu0
    %v5921 = vadd.f32 0.0, %v5920
    %5922 = vmatmul.f32.gmra.mxu0 %v5523
    %v5923 = vpop.f32.mrf.mxu0
    %v5924 = vadd.f32 0.0, %v5923
    %5925 = vmatmul.f32.gmra.mxu0 %v5526
    %v5926 = vpop.f32.mrf.mxu0
    %v5927 = vadd.f32 0.0, %v5926
    %5928 = vmatmul.f32.gmra.mxu0 %v5529
    %v5929 = vpop.f32.mrf.mxu0
    %v5930 = vadd.f32 0.0, %v5929
    %5931 = vmatmul.f32.gmra.mxu0 %v5532
    %v5932 = vpop.f32.mrf.mxu0
    %v5933 = vadd.f32 0.0, %v5932
    %5934 = vmatmul.f32.gmra.mxu0 %v5535
    %v5935 = vpop.f32.mrf.mxu0
    %v5936 = vadd.f32 0.0, %v5935
    %5937 = vmatmul.f32.gmra.mxu0 %v5538
    %v5938 = vpop.f32.mrf.mxu0
    %v5939 = vadd.f32 0.0, %v5938
    %5940 = vmatmul.f32.gmra.mxu0 %v5541
    %v5941 = vpop.f32.mrf.mxu0
    %v5942 = vadd.f32 0.0, %v5941
    %5943 = vmatmul.f32.gmra.mxu0 %v5544
    %v5944 = vpop.f32.mrf.mxu0
    %v5945 = vadd.f32 0.0, %v5944
    %5946 = vmatmul.f32.gmra.mxu0 %v5547
    %v5947 = vpop.f32.mrf.mxu0
    %v5948 = vadd.f32 0.0, %v5947
    %5949 = vmatmul.f32.gmra.mxu0 %v5550
    %v5950 = vpop.f32.mrf.mxu0
    %v5951 = vadd.f32 0.0, %v5950
    %5952 = vmatmul.f32.gmra.mxu0 %v5553
    %v5953 = vpop.f32.mrf.mxu0
    %v5954 = vadd.f32 0.0, %v5953
    %5955 = vmatmul.f32.gmra.mxu0 %v5556
    %v5956 = vpop.f32.mrf.mxu0
    %v5957 = vadd.f32 0.0, %v5956
    %5958 = vmatmul.f32.gmra.mxu0 %v5559
    %v5959 = vpop.f32.mrf.mxu0
    %v5960 = vadd.f32 0.0, %v5959
    %5961 = vmatmul.f32.gmra.mxu0 %v5562
    %v5962 = vpop.f32.mrf.mxu0
    %v5963 = vadd.f32 0.0, %v5962
    %5964 = vmatmul.f32.gmra.mxu0 %v5565
    %v5965 = vpop.f32.mrf.mxu0
    %v5966 = vadd.f32 0.0, %v5965
    %5967 = vmatmul.f32.gmra.mxu0 %v5568
    %v5968 = vpop.f32.mrf.mxu0
    %v5969 = vadd.f32 0.0, %v5968
    %5970 = vmatmul.f32.gmra.mxu0 %v5571
    %v5971 = vpop.f32.mrf.mxu0
    %v5972 = vadd.f32 0.0, %v5971
    %5973 = vmatmul.f32.gmra.mxu0 %v5574
    %v5974 = vpop.f32.mrf.mxu0
    %v5975 = vadd.f32 0.0, %v5974
    %5976 = vmatmul.f32.gmra.mxu0 %v5577
    %v5977 = vpop.f32.mrf.mxu0
    %v5978 = vadd.f32 0.0, %v5977
    %5979 = vmatmul.f32.gmra.mxu0 %v5580
    %v5980 = vpop.f32.mrf.mxu0
    %v5981 = vadd.f32 0.0, %v5980
    %5982 = vmatmul.f32.gmra.mxu0 %v5583
    %v5983 = vpop.f32.mrf.mxu0
    %v5984 = vadd.f32 0.0, %v5983
    %5985 = vmatmul.f32.gmra.mxu0 %v5586
    %v5986 = vpop.f32.mrf.mxu0
    %v5987 = vadd.f32 0.0, %v5986
    %5988 = vmatmul.f32.gmra.mxu0 %v5589
    %v5989 = vpop.f32.mrf.mxu0
    %v5990 = vadd.f32 0.0, %v5989
    %5991 = vmatmul.f32.gmra.mxu0 %v5592
    %v5992 = vpop.f32.mrf.mxu0
    %v5993 = vadd.f32 0.0, %v5992
    %5994 = vmatmul.f32.gmra.mxu0 %v5595
    %v5995 = vpop.f32.mrf.mxu0
    %v5996 = vadd.f32 0.0, %v5995
    %5997 = vmatmul.f32.gmra.mxu0 %v5598
    %v5998 = vpop.f32.mrf.mxu0
    %v5999 = vadd.f32 0.0, %v5998
    %6000 = vmatmul.f32.gmra.mxu0 %v5601
    %v6001 = vpop.f32.mrf.mxu0
    %v6002 = vadd.f32 0.0, %v6001
    %6003 = vdwg.mxu0
    %v6004 = vadd.f32 %v4947, %v5621
    %v6005 = vadd.f32 %v4948, %v5624
    %v6006 = vadd.f32 %v4949, %v5627
    %v6007 = vadd.f32 %v4950, %v5630
    %v6008 = vadd.f32 %v4951, %v5633
    %v6009 = vadd.f32 %v4952, %v5636
    %v6010 = vadd.f32 %v4953, %v5639
    %v6011 = vadd.f32 %v4954, %v5642
    %v6012 = vadd.f32 %v4955, %v5645
    %v6013 = vadd.f32 %v4956, %v5648
    %v6014 = vadd.f32 %v4957, %v5651
    %v6015 = vadd.f32 %v4958, %v5654
    %v6016 = vadd.f32 %v4959, %v5657
    %v6017 = vadd.f32 %v4960, %v5660
    %v6018 = vadd.f32 %v4961, %v5663
    %v6019 = vadd.f32 %v4962, %v5666
    %v6020 = vadd.f32 %v4963, %v5669
    %v6021 = vadd.f32 %v4964, %v5672
    %v6022 = vadd.f32 %v4965, %v5675
    %v6023 = vadd.f32 %v4966, %v5678
    %v6024 = vadd.f32 %v4967, %v5681
    %v6025 = vadd.f32 %v4968, %v5684
    %v6026 = vadd.f32 %v4969, %v5687
    %v6027 = vadd.f32 %v4970, %v5690
    %v6028 = vadd.f32 %v4971, %v5693
    %v6029 = vadd.f32 %v4972, %v5696
    %v6030 = vadd.f32 %v4973, %v5699
    %v6031 = vadd.f32 %v4974, %v5702
    %v6032 = vadd.f32 %v4975, %v5705
    %v6033 = vadd.f32 %v4976, %v5708
    %v6034 = vadd.f32 %v4977, %v5711
    %v6035 = vadd.f32 %v4978, %v5714
    %v6036 = vadd.f32 %v4979, %v5717
    %v6037 = vadd.f32 %v4980, %v5720
    %v6038 = vadd.f32 %v4981, %v5723
    %v6039 = vadd.f32 %v4982, %v5726
    %v6040 = vadd.f32 %v4983, %v5729
    %v6041 = vadd.f32 %v4984, %v5732
    %v6042 = vadd.f32 %v4985, %v5735
    %v6043 = vadd.f32 %v4986, %v5738
    %v6044 = vadd.f32 %v4987, %v5741
    %v6045 = vadd.f32 %v4988, %v5744
    %v6046 = vadd.f32 %v4989, %v5747
    %v6047 = vadd.f32 %v4990, %v5750
    %v6048 = vadd.f32 %v4991, %v5753
    %v6049 = vadd.f32 %v4992, %v5756
    %v6050 = vadd.f32 %v4993, %v5759
    %v6051 = vadd.f32 %v4994, %v5762
    %v6052 = vadd.f32 %v4995, %v5765
    %v6053 = vadd.f32 %v4996, %v5768
    %v6054 = vadd.f32 %v4997, %v5771
    %v6055 = vadd.f32 %v4998, %v5774
    %v6056 = vadd.f32 %v4999, %v5777
    %v6057 = vadd.f32 %v5000, %v5780
    %v6058 = vadd.f32 %v5001, %v5783
    %v6059 = vadd.f32 %v5002, %v5786
    %v6060 = vadd.f32 %v5003, %v5789
    %v6061 = vadd.f32 %v5004, %v5792
    %v6062 = vadd.f32 %v5005, %v5795
    %v6063 = vadd.f32 %v5006, %v5798
    %v6064 = vadd.f32 %v5007, %v5801
    %v6065 = vadd.f32 %v5008, %v5804
    %v6066 = vadd.f32 %v5009, %v5807
    %v6067 = vadd.f32 %v5010, %v5810
    %v6068 = vadd.f32 %v5011, %v5813
    %v6069 = vadd.f32 %v5012, %v5816
    %v6070 = vadd.f32 %v5013, %v5819
    %v6071 = vadd.f32 %v5014, %v5822
    %v6072 = vadd.f32 %v5015, %v5825
    %v6073 = vadd.f32 %v5016, %v5828
    %v6074 = vadd.f32 %v5017, %v5831
    %v6075 = vadd.f32 %v5018, %v5834
    %v6076 = vadd.f32 %v5019, %v5837
    %v6077 = vadd.f32 %v5020, %v5840
    %v6078 = vadd.f32 %v5021, %v5843
    %v6079 = vadd.f32 %v5022, %v5846
    %v6080 = vadd.f32 %v5023, %v5849
    %v6081 = vadd.f32 %v5024, %v5852
    %v6082 = vadd.f32 %v5025, %v5855
    %v6083 = vadd.f32 %v5026, %v5858
    %v6084 = vadd.f32 %v5027, %v5861
    %v6085 = vadd.f32 %v5028, %v5864
    %v6086 = vadd.f32 %v5029, %v5867
    %v6087 = vadd.f32 %v5030, %v5870
    %v6088 = vadd.f32 %v5031, %v5873
    %v6089 = vadd.f32 %v5032, %v5876
    %v6090 = vadd.f32 %v5033, %v5879
    %v6091 = vadd.f32 %v5034, %v5882
    %v6092 = vadd.f32 %v5035, %v5885
    %v6093 = vadd.f32 %v5036, %v5888
    %v6094 = vadd.f32 %v5037, %v5891
    %v6095 = vadd.f32 %v5038, %v5894
    %v6096 = vadd.f32 %v5039, %v5897
    %v6097 = vadd.f32 %v5040, %v5900
    %v6098 = vadd.f32 %v5041, %v5903
    %v6099 = vadd.f32 %v5042, %v5906
    %v6100 = vadd.f32 %v5043, %v5909
    %v6101 = vadd.f32 %v5044, %v5912
    %v6102 = vadd.f32 %v5045, %v5915
    %v6103 = vadd.f32 %v5046, %v5918
    %v6104 = vadd.f32 %v5047, %v5921
    %v6105 = vadd.f32 %v5048, %v5924
    %v6106 = vadd.f32 %v5049, %v5927
    %v6107 = vadd.f32 %v5050, %v5930
    %v6108 = vadd.f32 %v5051, %v5933
    %v6109 = vadd.f32 %v5052, %v5936
    %v6110 = vadd.f32 %v5053, %v5939
    %v6111 = vadd.f32 %v5054, %v5942
    %v6112 = vadd.f32 %v5055, %v5945
    %v6113 = vadd.f32 %v5056, %v5948
    %v6114 = vadd.f32 %v5057, %v5951
    %v6115 = vadd.f32 %v5058, %v5954
    %v6116 = vadd.f32 %v5059, %v5957
    %v6117 = vadd.f32 %v5060, %v5960
    %v6118 = vadd.f32 %v5061, %v5963
    %v6119 = vadd.f32 %v5062, %v5966
    %v6120 = vadd.f32 %v5063, %v5969
    %v6121 = vadd.f32 %v5064, %v5972
    %v6122 = vadd.f32 %v5065, %v5975
    %v6123 = vadd.f32 %v5066, %v5978
    %v6124 = vadd.f32 %v5067, %v5981
    %v6125 = vadd.f32 %v5068, %v5984
    %v6126 = vadd.f32 %v5069, %v5987
    %v6127 = vadd.f32 %v5070, %v5990
    %v6128 = vadd.f32 %v5071, %v5993
    %v6129 = vadd.f32 %v5072, %v5996
    %v6130 = vadd.f32 %v5073, %v5999
    %v6131 = vadd.f32 %v5074, %v6002
    %s6132 = scalar_lea.vmem [#allocation2], 192
    %v6133 = vld [vmem:[%s6132] sm:$0xff]
    %v6134 = vld [vmem:[%s6132 + $0x8] sm:$0xff]
    %v6135 = vld [vmem:[%s6132 + $0x10] sm:$0xff]
    %v6136 = vld [vmem:[%s6132 + $0x18] sm:$0xff]
    %v6137 = vld [vmem:[%s6132 + $0x20] sm:$0xff]
    %v6138 = vld [vmem:[%s6132 + $0x28] sm:$0xff]
    %v6139 = vld [vmem:[%s6132 + $0x30] sm:$0xff]
    %v6140 = vld [vmem:[%s6132 + $0x38] sm:$0xff]
    %v6141 = vld [vmem:[%s6132 + $0x40] sm:$0xff]
    %v6142 = vld [vmem:[%s6132 + $0x48] sm:$0xff]
    %v6143 = vld [vmem:[%s6132 + $0x50] sm:$0xff]
    %v6144 = vld [vmem:[%s6132 + $0x58] sm:$0xff]
    %v6145 = vld [vmem:[%s6132 + $0x60] sm:$0xff]
    %v6146 = vld [vmem:[%s6132 + $0x68] sm:$0xff]
    %v6147 = vld [vmem:[%s6132 + $0x70] sm:$0xff]
    %v6148 = vld [vmem:[%s6132 + $0x78] sm:$0xff]
    %v6149 = vld [vmem:[%s6132 + $0x80] sm:$0xff]
    %v6150 = vld [vmem:[%s6132 + $0x88] sm:$0xff]
    %v6151 = vld [vmem:[%s6132 + $0x90] sm:$0xff]
    %v6152 = vld [vmem:[%s6132 + $0x98] sm:$0xff]
    %v6153 = vld [vmem:[%s6132 + $0xa0] sm:$0xff]
    %v6154 = vld [vmem:[%s6132 + $0xa8] sm:$0xff]
    %v6155 = vld [vmem:[%s6132 + $0xb0] sm:$0xff]
    %v6156 = vld [vmem:[%s6132 + $0xb8] sm:$0xff]
    %v6157 = vld [vmem:[%s6132 + $0xc0] sm:$0xff]
    %v6158 = vld [vmem:[%s6132 + $0xc8] sm:$0xff]
    %v6159 = vld [vmem:[%s6132 + $0xd0] sm:$0xff]
    %v6160 = vld [vmem:[%s6132 + $0xd8] sm:$0xff]
    %v6161 = vld [vmem:[%s6132 + $0xe0] sm:$0xff]
    %v6162 = vld [vmem:[%s6132 + $0xe8] sm:$0xff]
    %v6163 = vld [vmem:[%s6132 + $0xf0] sm:$0xff]
    %v6164 = vld [vmem:[%s6132 + $0xf8] sm:$0xff]
    %v6165 = vld [vmem:[%s6132 + $0x100] sm:$0xff]
    %v6166 = vld [vmem:[%s6132 + $0x108] sm:$0xff]
    %v6167 = vld [vmem:[%s6132 + $0x110] sm:$0xff]
    %v6168 = vld [vmem:[%s6132 + $0x118] sm:$0xff]
    %v6169 = vld [vmem:[%s6132 + $0x120] sm:$0xff]
    %v6170 = vld [vmem:[%s6132 + $0x128] sm:$0xff]
    %v6171 = vld [vmem:[%s6132 + $0x130] sm:$0xff]
    %v6172 = vld [vmem:[%s6132 + $0x138] sm:$0xff]
    %v6173 = vld [vmem:[%s6132 + $0x140] sm:$0xff]
    %v6174 = vld [vmem:[%s6132 + $0x148] sm:$0xff]
    %v6175 = vld [vmem:[%s6132 + $0x150] sm:$0xff]
    %v6176 = vld [vmem:[%s6132 + $0x158] sm:$0xff]
    %v6177 = vld [vmem:[%s6132 + $0x160] sm:$0xff]
    %v6178 = vld [vmem:[%s6132 + $0x168] sm:$0xff]
    %v6179 = vld [vmem:[%s6132 + $0x170] sm:$0xff]
    %v6180 = vld [vmem:[%s6132 + $0x178] sm:$0xff]
    %v6181 = vld [vmem:[%s6132 + $0x180] sm:$0xff]
    %v6182 = vld [vmem:[%s6132 + $0x188] sm:$0xff]
    %v6183 = vld [vmem:[%s6132 + $0x190] sm:$0xff]
    %v6184 = vld [vmem:[%s6132 + $0x198] sm:$0xff]
    %v6185 = vld [vmem:[%s6132 + $0x1a0] sm:$0xff]
    %v6186 = vld [vmem:[%s6132 + $0x1a8] sm:$0xff]
    %v6187 = vld [vmem:[%s6132 + $0x1b0] sm:$0xff]
    %v6188 = vld [vmem:[%s6132 + $0x1b8] sm:$0xff]
    %v6189 = vld [vmem:[%s6132 + $0x1c0] sm:$0xff]
    %v6190 = vld [vmem:[%s6132 + $0x1c8] sm:$0xff]
    %v6191 = vld [vmem:[%s6132 + $0x1d0] sm:$0xff]
    %v6192 = vld [vmem:[%s6132 + $0x1d8] sm:$0xff]
    %v6193 = vld [vmem:[%s6132 + $0x1e0] sm:$0xff]
    %v6194 = vld [vmem:[%s6132 + $0x1e8] sm:$0xff]
    %v6195 = vld [vmem:[%s6132 + $0x1f0] sm:$0xff]
    %v6196 = vld [vmem:[%s6132 + $0x1f8] sm:$0xff]
    %v6197 = vld [vmem:[%s6132 + $0x200] sm:$0xff]
    %v6198 = vld [vmem:[%s6132 + $0x208] sm:$0xff]
    %v6199 = vld [vmem:[%s6132 + $0x210] sm:$0xff]
    %v6200 = vld [vmem:[%s6132 + $0x218] sm:$0xff]
    %v6201 = vld [vmem:[%s6132 + $0x220] sm:$0xff]
    %v6202 = vld [vmem:[%s6132 + $0x228] sm:$0xff]
    %v6203 = vld [vmem:[%s6132 + $0x230] sm:$0xff]
    %v6204 = vld [vmem:[%s6132 + $0x238] sm:$0xff]
    %v6205 = vld [vmem:[%s6132 + $0x240] sm:$0xff]
    %v6206 = vld [vmem:[%s6132 + $0x248] sm:$0xff]
    %v6207 = vld [vmem:[%s6132 + $0x250] sm:$0xff]
    %v6208 = vld [vmem:[%s6132 + $0x258] sm:$0xff]
    %v6209 = vld [vmem:[%s6132 + $0x260] sm:$0xff]
    %v6210 = vld [vmem:[%s6132 + $0x268] sm:$0xff]
    %v6211 = vld [vmem:[%s6132 + $0x270] sm:$0xff]
    %v6212 = vld [vmem:[%s6132 + $0x278] sm:$0xff]
    %v6213 = vld [vmem:[%s6132 + $0x280] sm:$0xff]
    %v6214 = vld [vmem:[%s6132 + $0x288] sm:$0xff]
    %v6215 = vld [vmem:[%s6132 + $0x290] sm:$0xff]
    %v6216 = vld [vmem:[%s6132 + $0x298] sm:$0xff]
    %v6217 = vld [vmem:[%s6132 + $0x2a0] sm:$0xff]
    %v6218 = vld [vmem:[%s6132 + $0x2a8] sm:$0xff]
    %v6219 = vld [vmem:[%s6132 + $0x2b0] sm:$0xff]
    %v6220 = vld [vmem:[%s6132 + $0x2b8] sm:$0xff]
    %v6221 = vld [vmem:[%s6132 + $0x2c0] sm:$0xff]
    %v6222 = vld [vmem:[%s6132 + $0x2c8] sm:$0xff]
    %v6223 = vld [vmem:[%s6132 + $0x2d0] sm:$0xff]
    %v6224 = vld [vmem:[%s6132 + $0x2d8] sm:$0xff]
    %v6225 = vld [vmem:[%s6132 + $0x2e0] sm:$0xff]
    %v6226 = vld [vmem:[%s6132 + $0x2e8] sm:$0xff]
    %v6227 = vld [vmem:[%s6132 + $0x2f0] sm:$0xff]
    %v6228 = vld [vmem:[%s6132 + $0x2f8] sm:$0xff]
    %v6229 = vld [vmem:[%s6132 + $0x300] sm:$0xff]
    %v6230 = vld [vmem:[%s6132 + $0x308] sm:$0xff]
    %v6231 = vld [vmem:[%s6132 + $0x310] sm:$0xff]
    %v6232 = vld [vmem:[%s6132 + $0x318] sm:$0xff]
    %v6233 = vld [vmem:[%s6132 + $0x320] sm:$0xff]
    %v6234 = vld [vmem:[%s6132 + $0x328] sm:$0xff]
    %v6235 = vld [vmem:[%s6132 + $0x330] sm:$0xff]
    %v6236 = vld [vmem:[%s6132 + $0x338] sm:$0xff]
    %v6237 = vld [vmem:[%s6132 + $0x340] sm:$0xff]
    %v6238 = vld [vmem:[%s6132 + $0x348] sm:$0xff]
    %v6239 = vld [vmem:[%s6132 + $0x350] sm:$0xff]
    %v6240 = vld [vmem:[%s6132 + $0x358] sm:$0xff]
    %v6241 = vld [vmem:[%s6132 + $0x360] sm:$0xff]
    %v6242 = vld [vmem:[%s6132 + $0x368] sm:$0xff]
    %v6243 = vld [vmem:[%s6132 + $0x370] sm:$0xff]
    %v6244 = vld [vmem:[%s6132 + $0x378] sm:$0xff]
    %v6245 = vld [vmem:[%s6132 + $0x380] sm:$0xff]
    %v6246 = vld [vmem:[%s6132 + $0x388] sm:$0xff]
    %v6247 = vld [vmem:[%s6132 + $0x390] sm:$0xff]
    %v6248 = vld [vmem:[%s6132 + $0x398] sm:$0xff]
    %v6249 = vld [vmem:[%s6132 + $0x3a0] sm:$0xff]
    %v6250 = vld [vmem:[%s6132 + $0x3a8] sm:$0xff]
    %v6251 = vld [vmem:[%s6132 + $0x3b0] sm:$0xff]
    %v6252 = vld [vmem:[%s6132 + $0x3b8] sm:$0xff]
    %v6253 = vld [vmem:[%s6132 + $0x3c0] sm:$0xff]
    %v6254 = vld [vmem:[%s6132 + $0x3c8] sm:$0xff]
    %v6255 = vld [vmem:[%s6132 + $0x3d0] sm:$0xff]
    %v6256 = vld [vmem:[%s6132 + $0x3d8] sm:$0xff]
    %v6257 = vld [vmem:[%s6132 + $0x3e0] sm:$0xff]
    %v6258 = vld [vmem:[%s6132 + $0x3e8] sm:$0xff]
    %v6259 = vld [vmem:[%s6132 + $0x3f0] sm:$0xff]
    %v6260 = vld [vmem:[%s6132 + $0x3f8] sm:$0xff]
    %s6261 = scalar_lea.vmem [#allocation5], 672
    %v6262 = vld [vmem:[%s6261] sm:$0xff]
    %v6263 = vld [vmem:[%s6261 + $0x8] sm:$0xff]
    %v6264 = vld [vmem:[%s6261 + $0x10] sm:$0xff]
    %v6265 = vld [vmem:[%s6261 + $0x18] sm:$0xff]
    %v6266 = vld [vmem:[%s6261 + $0x20] sm:$0xff]
    %v6267 = vld [vmem:[%s6261 + $0x28] sm:$0xff]
    %v6268 = vld [vmem:[%s6261 + $0x30] sm:$0xff]
    %v6269 = vld [vmem:[%s6261 + $0x38] sm:$0xff]
    %v6270 = vld [vmem:[%s6261 + $0x40] sm:$0xff]
    %v6271 = vld [vmem:[%s6261 + $0x48] sm:$0xff]
    %v6272 = vld [vmem:[%s6261 + $0x50] sm:$0xff]
    %v6273 = vld [vmem:[%s6261 + $0x58] sm:$0xff]
    %v6274 = vld [vmem:[%s6261 + $0x60] sm:$0xff]
    %v6275 = vld [vmem:[%s6261 + $0x68] sm:$0xff]
    %v6277 = vsel %vm333, %v6133, 0
    %v6280 = vsel %vm333, %v6134, 0
    %v6283 = vsel %vm333, %v6135, 0
    %v6286 = vsel %vm333, %v6136, 0
    %v6289 = vsel %vm333, %v6137, 0
    %v6292 = vsel %vm333, %v6138, 0
    %v6295 = vsel %vm333, %v6139, 0
    %v6298 = vsel %vm333, %v6140, 0
    %v6301 = vsel %vm333, %v6141, 0
    %v6304 = vsel %vm333, %v6142, 0
    %v6307 = vsel %vm333, %v6143, 0
    %v6310 = vsel %vm333, %v6144, 0
    %v6313 = vsel %vm333, %v6145, 0
    %v6316 = vsel %vm333, %v6146, 0
    %v6319 = vsel %vm333, %v6147, 0
    %v6322 = vsel %vm333, %v6148, 0
    %v6325 = vsel %vm333, %v6149, 0
    %v6328 = vsel %vm333, %v6150, 0
    %v6331 = vsel %vm333, %v6151, 0
    %v6334 = vsel %vm333, %v6152, 0
    %v6337 = vsel %vm333, %v6153, 0
    %v6340 = vsel %vm333, %v6154, 0
    %v6343 = vsel %vm333, %v6155, 0
    %v6346 = vsel %vm333, %v6156, 0
    %v6349 = vsel %vm333, %v6157, 0
    %v6352 = vsel %vm333, %v6158, 0
    %v6355 = vsel %vm333, %v6159, 0
    %v6358 = vsel %vm333, %v6160, 0
    %v6361 = vsel %vm333, %v6161, 0
    %v6364 = vsel %vm333, %v6162, 0
    %v6367 = vsel %vm333, %v6163, 0
    %v6370 = vsel %vm333, %v6164, 0
    %v6373 = vsel %vm333, %v6165, 0
    %v6376 = vsel %vm333, %v6166, 0
    %v6379 = vsel %vm333, %v6167, 0
    %v6382 = vsel %vm333, %v6168, 0
    %v6385 = vsel %vm333, %v6169, 0
    %v6388 = vsel %vm333, %v6170, 0
    %v6391 = vsel %vm333, %v6171, 0
    %v6394 = vsel %vm333, %v6172, 0
    %v6397 = vsel %vm333, %v6173, 0
    %v6400 = vsel %vm333, %v6174, 0
    %v6403 = vsel %vm333, %v6175, 0
    %v6406 = vsel %vm333, %v6176, 0
    %v6409 = vsel %vm333, %v6177, 0
    %v6412 = vsel %vm333, %v6178, 0
    %v6415 = vsel %vm333, %v6179, 0
    %v6418 = vsel %vm333, %v6180, 0
    %v6421 = vsel %vm333, %v6181, 0
    %v6424 = vsel %vm333, %v6182, 0
    %v6427 = vsel %vm333, %v6183, 0
    %v6430 = vsel %vm333, %v6184, 0
    %v6433 = vsel %vm333, %v6185, 0
    %v6436 = vsel %vm333, %v6186, 0
    %v6439 = vsel %vm333, %v6187, 0
    %v6442 = vsel %vm333, %v6188, 0
    %v6445 = vsel %vm333, %v6189, 0
    %v6448 = vsel %vm333, %v6190, 0
    %v6451 = vsel %vm333, %v6191, 0
    %v6454 = vsel %vm333, %v6192, 0
    %v6457 = vsel %vm333, %v6193, 0
    %v6460 = vsel %vm333, %v6194, 0
    %v6463 = vsel %vm333, %v6195, 0
    %v6466 = vsel %vm333, %v6196, 0
    %v6469 = vsel %vm333, %v6197, 0
    %v6472 = vsel %vm333, %v6198, 0
    %v6475 = vsel %vm333, %v6199, 0
    %v6478 = vsel %vm333, %v6200, 0
    %v6481 = vsel %vm333, %v6201, 0
    %v6484 = vsel %vm333, %v6202, 0
    %v6487 = vsel %vm333, %v6203, 0
    %v6490 = vsel %vm333, %v6204, 0
    %v6493 = vsel %vm333, %v6205, 0
    %v6496 = vsel %vm333, %v6206, 0
    %v6499 = vsel %vm333, %v6207, 0
    %v6502 = vsel %vm333, %v6208, 0
    %v6505 = vsel %vm333, %v6209, 0
    %v6508 = vsel %vm333, %v6210, 0
    %v6511 = vsel %vm333, %v6211, 0
    %v6514 = vsel %vm333, %v6212, 0
    %v6517 = vsel %vm333, %v6213, 0
    %v6520 = vsel %vm333, %v6214, 0
    %v6523 = vsel %vm333, %v6215, 0
    %v6526 = vsel %vm333, %v6216, 0
    %v6529 = vsel %vm333, %v6217, 0
    %v6532 = vsel %vm333, %v6218, 0
    %v6535 = vsel %vm333, %v6219, 0
    %v6538 = vsel %vm333, %v6220, 0
    %v6541 = vsel %vm333, %v6221, 0
    %v6544 = vsel %vm333, %v6222, 0
    %v6547 = vsel %vm333, %v6223, 0
    %v6550 = vsel %vm333, %v6224, 0
    %v6553 = vsel %vm333, %v6225, 0
    %v6556 = vsel %vm333, %v6226, 0
    %v6559 = vsel %vm333, %v6227, 0
    %v6562 = vsel %vm333, %v6228, 0
    %v6565 = vsel %vm333, %v6229, 0
    %v6568 = vsel %vm333, %v6230, 0
    %v6571 = vsel %vm333, %v6231, 0
    %v6574 = vsel %vm333, %v6232, 0
    %v6577 = vsel %vm333, %v6233, 0
    %v6580 = vsel %vm333, %v6234, 0
    %v6583 = vsel %vm333, %v6235, 0
    %v6586 = vsel %vm333, %v6236, 0
    %v6589 = vsel %vm333, %v6237, 0
    %v6592 = vsel %vm333, %v6238, 0
    %v6595 = vsel %vm333, %v6239, 0
    %v6598 = vsel %vm333, %v6240, 0
    %v6601 = vsel %vm333, %v6241, 0
    %v6604 = vsel %vm333, %v6242, 0
    %v6607 = vsel %vm333, %v6243, 0
    %v6610 = vsel %vm333, %v6244, 0
    %v6613 = vsel %vm333, %v6245, 0
    %v6616 = vsel %vm333, %v6246, 0
    %v6619 = vsel %vm333, %v6247, 0
    %v6622 = vsel %vm333, %v6248, 0
    %v6625 = vsel %vm333, %v6249, 0
    %v6628 = vsel %vm333, %v6250, 0
    %v6631 = vsel %vm333, %v6251, 0
    %v6634 = vsel %vm333, %v6252, 0
    %v6637 = vsel %vm333, %v6253, 0
    %v6640 = vsel %vm333, %v6254, 0
    %v6643 = vsel %vm333, %v6255, 0
    %v6646 = vsel %vm333, %v6256, 0
    %v6649 = vsel %vm333, %v6257, 0
    %v6652 = vsel %vm333, %v6258, 0
    %v6655 = vsel %vm333, %v6259, 0
    %v6658 = vsel %vm333, %v6260, 0
    %6660 = vmatpush.msra.mxu0 0.0
    %6661 = vmatpush.msra.mxu0 0.0
    %6662 = vmatpush.msra.mxu0 %v6275
    %6663 = vmatpush.msra.mxu0 %v6274
    %6664 = vmatpush.msra.mxu0 %v6273
    %6665 = vmatpush.msra.mxu0 %v6272
    %6666 = vmatpush.msra.mxu0 %v6271
    %6667 = vmatpush.msra.mxu0 %v6270
    %6668 = vmatpush.msra.mxu0 %v6269
    %6669 = vmatpush.msra.mxu0 %v6268
    %6670 = vmatpush.msra.mxu0 %v6267
    %6671 = vmatpush.msra.mxu0 %v6266
    %6672 = vmatpush.msra.mxu0 %v6265
    %6673 = vmatpush.msra.mxu0 %v6264
    %6674 = vmatpush.msra.mxu0 %v6263
    %6675 = vmatpush.msra.mxu0 %v6262
    %6676 = vmatmul.f32.gmra.mxu0 %v6277
    %v6677 = vpop.f32.mrf.mxu0
    %v6678 = vadd.f32 0.0, %v6677
    %6679 = vmatmul.f32.gmra.mxu0 %v6280
    %v6680 = vpop.f32.mrf.mxu0
    %v6681 = vadd.f32 0.0, %v6680
    %6682 = vmatmul.f32.gmra.mxu0 %v6283
    %v6683 = vpop.f32.mrf.mxu0
    %v6684 = vadd.f32 0.0, %v6683
    %6685 = vmatmul.f32.gmra.mxu0 %v6286
    %v6686 = vpop.f32.mrf.mxu0
    %v6687 = vadd.f32 0.0, %v6686
    %6688 = vmatmul.f32.gmra.mxu0 %v6289
    %v6689 = vpop.f32.mrf.mxu0
    %v6690 = vadd.f32 0.0, %v6689
    %6691 = vmatmul.f32.gmra.mxu0 %v6292
    %v6692 = vpop.f32.mrf.mxu0
    %v6693 = vadd.f32 0.0, %v6692
    %6694 = vmatmul.f32.gmra.mxu0 %v6295
    %v6695 = vpop.f32.mrf.mxu0
    %v6696 = vadd.f32 0.0, %v6695
    %6697 = vmatmul.f32.gmra.mxu0 %v6298
    %v6698 = vpop.f32.mrf.mxu0
    %v6699 = vadd.f32 0.0, %v6698
    %6700 = vmatmul.f32.gmra.mxu0 %v6301
    %v6701 = vpop.f32.mrf.mxu0
    %v6702 = vadd.f32 0.0, %v6701
    %6703 = vmatmul.f32.gmra.mxu0 %v6304
    %v6704 = vpop.f32.mrf.mxu0
    %v6705 = vadd.f32 0.0, %v6704
    %6706 = vmatmul.f32.gmra.mxu0 %v6307
    %v6707 = vpop.f32.mrf.mxu0
    %v6708 = vadd.f32 0.0, %v6707
    %6709 = vmatmul.f32.gmra.mxu0 %v6310
    %v6710 = vpop.f32.mrf.mxu0
    %v6711 = vadd.f32 0.0, %v6710
    %6712 = vmatmul.f32.gmra.mxu0 %v6313
    %v6713 = vpop.f32.mrf.mxu0
    %v6714 = vadd.f32 0.0, %v6713
    %6715 = vmatmul.f32.gmra.mxu0 %v6316
    %v6716 = vpop.f32.mrf.mxu0
    %v6717 = vadd.f32 0.0, %v6716
    %6718 = vmatmul.f32.gmra.mxu0 %v6319
    %v6719 = vpop.f32.mrf.mxu0
    %v6720 = vadd.f32 0.0, %v6719
    %6721 = vmatmul.f32.gmra.mxu0 %v6322
    %v6722 = vpop.f32.mrf.mxu0
    %v6723 = vadd.f32 0.0, %v6722
    %6724 = vmatmul.f32.gmra.mxu0 %v6325
    %v6725 = vpop.f32.mrf.mxu0
    %v6726 = vadd.f32 0.0, %v6725
    %6727 = vmatmul.f32.gmra.mxu0 %v6328
    %v6728 = vpop.f32.mrf.mxu0
    %v6729 = vadd.f32 0.0, %v6728
    %6730 = vmatmul.f32.gmra.mxu0 %v6331
    %v6731 = vpop.f32.mrf.mxu0
    %v6732 = vadd.f32 0.0, %v6731
    %6733 = vmatmul.f32.gmra.mxu0 %v6334
    %v6734 = vpop.f32.mrf.mxu0
    %v6735 = vadd.f32 0.0, %v6734
    %6736 = vmatmul.f32.gmra.mxu0 %v6337
    %v6737 = vpop.f32.mrf.mxu0
    %v6738 = vadd.f32 0.0, %v6737
    %6739 = vmatmul.f32.gmra.mxu0 %v6340
    %v6740 = vpop.f32.mrf.mxu0
    %v6741 = vadd.f32 0.0, %v6740
    %6742 = vmatmul.f32.gmra.mxu0 %v6343
    %v6743 = vpop.f32.mrf.mxu0
    %v6744 = vadd.f32 0.0, %v6743
    %6745 = vmatmul.f32.gmra.mxu0 %v6346
    %v6746 = vpop.f32.mrf.mxu0
    %v6747 = vadd.f32 0.0, %v6746
    %6748 = vmatmul.f32.gmra.mxu0 %v6349
    %v6749 = vpop.f32.mrf.mxu0
    %v6750 = vadd.f32 0.0, %v6749
    %6751 = vmatmul.f32.gmra.mxu0 %v6352
    %v6752 = vpop.f32.mrf.mxu0
    %v6753 = vadd.f32 0.0, %v6752
    %6754 = vmatmul.f32.gmra.mxu0 %v6355
    %v6755 = vpop.f32.mrf.mxu0
    %v6756 = vadd.f32 0.0, %v6755
    %6757 = vmatmul.f32.gmra.mxu0 %v6358
    %v6758 = vpop.f32.mrf.mxu0
    %v6759 = vadd.f32 0.0, %v6758
    %6760 = vmatmul.f32.gmra.mxu0 %v6361
    %v6761 = vpop.f32.mrf.mxu0
    %v6762 = vadd.f32 0.0, %v6761
    %6763 = vmatmul.f32.gmra.mxu0 %v6364
    %v6764 = vpop.f32.mrf.mxu0
    %v6765 = vadd.f32 0.0, %v6764
    %6766 = vmatmul.f32.gmra.mxu0 %v6367
    %v6767 = vpop.f32.mrf.mxu0
    %v6768 = vadd.f32 0.0, %v6767
    %6769 = vmatmul.f32.gmra.mxu0 %v6370
    %v6770 = vpop.f32.mrf.mxu0
    %v6771 = vadd.f32 0.0, %v6770
    %6772 = vmatmul.f32.gmra.mxu0 %v6373
    %v6773 = vpop.f32.mrf.mxu0
    %v6774 = vadd.f32 0.0, %v6773
    %6775 = vmatmul.f32.gmra.mxu0 %v6376
    %v6776 = vpop.f32.mrf.mxu0
    %v6777 = vadd.f32 0.0, %v6776
    %6778 = vmatmul.f32.gmra.mxu0 %v6379
    %v6779 = vpop.f32.mrf.mxu0
    %v6780 = vadd.f32 0.0, %v6779
    %6781 = vmatmul.f32.gmra.mxu0 %v6382
    %v6782 = vpop.f32.mrf.mxu0
    %v6783 = vadd.f32 0.0, %v6782
    %6784 = vmatmul.f32.gmra.mxu0 %v6385
    %v6785 = vpop.f32.mrf.mxu0
    %v6786 = vadd.f32 0.0, %v6785
    %6787 = vmatmul.f32.gmra.mxu0 %v6388
    %v6788 = vpop.f32.mrf.mxu0
    %v6789 = vadd.f32 0.0, %v6788
    %6790 = vmatmul.f32.gmra.mxu0 %v6391
    %v6791 = vpop.f32.mrf.mxu0
    %v6792 = vadd.f32 0.0, %v6791
    %6793 = vmatmul.f32.gmra.mxu0 %v6394
    %v6794 = vpop.f32.mrf.mxu0
    %v6795 = vadd.f32 0.0, %v6794
    %6796 = vmatmul.f32.gmra.mxu0 %v6397
    %v6797 = vpop.f32.mrf.mxu0
    %v6798 = vadd.f32 0.0, %v6797
    %6799 = vmatmul.f32.gmra.mxu0 %v6400
    %v6800 = vpop.f32.mrf.mxu0
    %v6801 = vadd.f32 0.0, %v6800
    %6802 = vmatmul.f32.gmra.mxu0 %v6403
    %v6803 = vpop.f32.mrf.mxu0
    %v6804 = vadd.f32 0.0, %v6803
    %6805 = vmatmul.f32.gmra.mxu0 %v6406
    %v6806 = vpop.f32.mrf.mxu0
    %v6807 = vadd.f32 0.0, %v6806
    %6808 = vmatmul.f32.gmra.mxu0 %v6409
    %v6809 = vpop.f32.mrf.mxu0
    %v6810 = vadd.f32 0.0, %v6809
    %6811 = vmatmul.f32.gmra.mxu0 %v6412
    %v6812 = vpop.f32.mrf.mxu0
    %v6813 = vadd.f32 0.0, %v6812
    %6814 = vmatmul.f32.gmra.mxu0 %v6415
    %v6815 = vpop.f32.mrf.mxu0
    %v6816 = vadd.f32 0.0, %v6815
    %6817 = vmatmul.f32.gmra.mxu0 %v6418
    %v6818 = vpop.f32.mrf.mxu0
    %v6819 = vadd.f32 0.0, %v6818
    %6820 = vmatmul.f32.gmra.mxu0 %v6421
    %v6821 = vpop.f32.mrf.mxu0
    %v6822 = vadd.f32 0.0, %v6821
    %6823 = vmatmul.f32.gmra.mxu0 %v6424
    %v6824 = vpop.f32.mrf.mxu0
    %v6825 = vadd.f32 0.0, %v6824
    %6826 = vmatmul.f32.gmra.mxu0 %v6427
    %v6827 = vpop.f32.mrf.mxu0
    %v6828 = vadd.f32 0.0, %v6827
    %6829 = vmatmul.f32.gmra.mxu0 %v6430
    %v6830 = vpop.f32.mrf.mxu0
    %v6831 = vadd.f32 0.0, %v6830
    %6832 = vmatmul.f32.gmra.mxu0 %v6433
    %v6833 = vpop.f32.mrf.mxu0
    %v6834 = vadd.f32 0.0, %v6833
    %6835 = vmatmul.f32.gmra.mxu0 %v6436
    %v6836 = vpop.f32.mrf.mxu0
    %v6837 = vadd.f32 0.0, %v6836
    %6838 = vmatmul.f32.gmra.mxu0 %v6439
    %v6839 = vpop.f32.mrf.mxu0
    %v6840 = vadd.f32 0.0, %v6839
    %6841 = vmatmul.f32.gmra.mxu0 %v6442
    %v6842 = vpop.f32.mrf.mxu0
    %v6843 = vadd.f32 0.0, %v6842
    %6844 = vmatmul.f32.gmra.mxu0 %v6445
    %v6845 = vpop.f32.mrf.mxu0
    %v6846 = vadd.f32 0.0, %v6845
    %6847 = vmatmul.f32.gmra.mxu0 %v6448
    %v6848 = vpop.f32.mrf.mxu0
    %v6849 = vadd.f32 0.0, %v6848
    %6850 = vmatmul.f32.gmra.mxu0 %v6451
    %v6851 = vpop.f32.mrf.mxu0
    %v6852 = vadd.f32 0.0, %v6851
    %6853 = vmatmul.f32.gmra.mxu0 %v6454
    %v6854 = vpop.f32.mrf.mxu0
    %v6855 = vadd.f32 0.0, %v6854
    %6856 = vmatmul.f32.gmra.mxu0 %v6457
    %v6857 = vpop.f32.mrf.mxu0
    %v6858 = vadd.f32 0.0, %v6857
    %6859 = vmatmul.f32.gmra.mxu0 %v6460
    %v6860 = vpop.f32.mrf.mxu0
    %v6861 = vadd.f32 0.0, %v6860
    %6862 = vmatmul.f32.gmra.mxu0 %v6463
    %v6863 = vpop.f32.mrf.mxu0
    %v6864 = vadd.f32 0.0, %v6863
    %6865 = vmatmul.f32.gmra.mxu0 %v6466
    %v6866 = vpop.f32.mrf.mxu0
    %v6867 = vadd.f32 0.0, %v6866
    %6868 = vmatmul.f32.gmra.mxu0 %v6469
    %v6869 = vpop.f32.mrf.mxu0
    %v6870 = vadd.f32 0.0, %v6869
    %6871 = vmatmul.f32.gmra.mxu0 %v6472
    %v6872 = vpop.f32.mrf.mxu0
    %v6873 = vadd.f32 0.0, %v6872
    %6874 = vmatmul.f32.gmra.mxu0 %v6475
    %v6875 = vpop.f32.mrf.mxu0
    %v6876 = vadd.f32 0.0, %v6875
    %6877 = vmatmul.f32.gmra.mxu0 %v6478
    %v6878 = vpop.f32.mrf.mxu0
    %v6879 = vadd.f32 0.0, %v6878
    %6880 = vmatmul.f32.gmra.mxu0 %v6481
    %v6881 = vpop.f32.mrf.mxu0
    %v6882 = vadd.f32 0.0, %v6881
    %6883 = vmatmul.f32.gmra.mxu0 %v6484
    %v6884 = vpop.f32.mrf.mxu0
    %v6885 = vadd.f32 0.0, %v6884
    %6886 = vmatmul.f32.gmra.mxu0 %v6487
    %v6887 = vpop.f32.mrf.mxu0
    %v6888 = vadd.f32 0.0, %v6887
    %6889 = vmatmul.f32.gmra.mxu0 %v6490
    %v6890 = vpop.f32.mrf.mxu0
    %v6891 = vadd.f32 0.0, %v6890
    %6892 = vmatmul.f32.gmra.mxu0 %v6493
    %v6893 = vpop.f32.mrf.mxu0
    %v6894 = vadd.f32 0.0, %v6893
    %6895 = vmatmul.f32.gmra.mxu0 %v6496
    %v6896 = vpop.f32.mrf.mxu0
    %v6897 = vadd.f32 0.0, %v6896
    %6898 = vmatmul.f32.gmra.mxu0 %v6499
    %v6899 = vpop.f32.mrf.mxu0
    %v6900 = vadd.f32 0.0, %v6899
    %6901 = vmatmul.f32.gmra.mxu0 %v6502
    %v6902 = vpop.f32.mrf.mxu0
    %v6903 = vadd.f32 0.0, %v6902
    %6904 = vmatmul.f32.gmra.mxu0 %v6505
    %v6905 = vpop.f32.mrf.mxu0
    %v6906 = vadd.f32 0.0, %v6905
    %6907 = vmatmul.f32.gmra.mxu0 %v6508
    %v6908 = vpop.f32.mrf.mxu0
    %v6909 = vadd.f32 0.0, %v6908
    %6910 = vmatmul.f32.gmra.mxu0 %v6511
    %v6911 = vpop.f32.mrf.mxu0
    %v6912 = vadd.f32 0.0, %v6911
    %6913 = vmatmul.f32.gmra.mxu0 %v6514
    %v6914 = vpop.f32.mrf.mxu0
    %v6915 = vadd.f32 0.0, %v6914
    %6916 = vmatmul.f32.gmra.mxu0 %v6517
    %v6917 = vpop.f32.mrf.mxu0
    %v6918 = vadd.f32 0.0, %v6917
    %6919 = vmatmul.f32.gmra.mxu0 %v6520
    %v6920 = vpop.f32.mrf.mxu0
    %v6921 = vadd.f32 0.0, %v6920
    %6922 = vmatmul.f32.gmra.mxu0 %v6523
    %v6923 = vpop.f32.mrf.mxu0
    %v6924 = vadd.f32 0.0, %v6923
    %6925 = vmatmul.f32.gmra.mxu0 %v6526
    %v6926 = vpop.f32.mrf.mxu0
    %v6927 = vadd.f32 0.0, %v6926
    %6928 = vmatmul.f32.gmra.mxu0 %v6529
    %v6929 = vpop.f32.mrf.mxu0
    %v6930 = vadd.f32 0.0, %v6929
    %6931 = vmatmul.f32.gmra.mxu0 %v6532
    %v6932 = vpop.f32.mrf.mxu0
    %v6933 = vadd.f32 0.0, %v6932
    %6934 = vmatmul.f32.gmra.mxu0 %v6535
    %v6935 = vpop.f32.mrf.mxu0
    %v6936 = vadd.f32 0.0, %v6935
    %6937 = vmatmul.f32.gmra.mxu0 %v6538
    %v6938 = vpop.f32.mrf.mxu0
    %v6939 = vadd.f32 0.0, %v6938
    %6940 = vmatmul.f32.gmra.mxu0 %v6541
    %v6941 = vpop.f32.mrf.mxu0
    %v6942 = vadd.f32 0.0, %v6941
    %6943 = vmatmul.f32.gmra.mxu0 %v6544
    %v6944 = vpop.f32.mrf.mxu0
    %v6945 = vadd.f32 0.0, %v6944
    %6946 = vmatmul.f32.gmra.mxu0 %v6547
    %v6947 = vpop.f32.mrf.mxu0
    %v6948 = vadd.f32 0.0, %v6947
    %6949 = vmatmul.f32.gmra.mxu0 %v6550
    %v6950 = vpop.f32.mrf.mxu0
    %v6951 = vadd.f32 0.0, %v6950
    %6952 = vmatmul.f32.gmra.mxu0 %v6553
    %v6953 = vpop.f32.mrf.mxu0
    %v6954 = vadd.f32 0.0, %v6953
    %6955 = vmatmul.f32.gmra.mxu0 %v6556
    %v6956 = vpop.f32.mrf.mxu0
    %v6957 = vadd.f32 0.0, %v6956
    %6958 = vmatmul.f32.gmra.mxu0 %v6559
    %v6959 = vpop.f32.mrf.mxu0
    %v6960 = vadd.f32 0.0, %v6959
    %6961 = vmatmul.f32.gmra.mxu0 %v6562
    %v6962 = vpop.f32.mrf.mxu0
    %v6963 = vadd.f32 0.0, %v6962
    %6964 = vmatmul.f32.gmra.mxu0 %v6565
    %v6965 = vpop.f32.mrf.mxu0
    %v6966 = vadd.f32 0.0, %v6965
    %6967 = vmatmul.f32.gmra.mxu0 %v6568
    %v6968 = vpop.f32.mrf.mxu0
    %v6969 = vadd.f32 0.0, %v6968
    %6970 = vmatmul.f32.gmra.mxu0 %v6571
    %v6971 = vpop.f32.mrf.mxu0
    %v6972 = vadd.f32 0.0, %v6971
    %6973 = vmatmul.f32.gmra.mxu0 %v6574
    %v6974 = vpop.f32.mrf.mxu0
    %v6975 = vadd.f32 0.0, %v6974
    %6976 = vmatmul.f32.gmra.mxu0 %v6577
    %v6977 = vpop.f32.mrf.mxu0
    %v6978 = vadd.f32 0.0, %v6977
    %6979 = vmatmul.f32.gmra.mxu0 %v6580
    %v6980 = vpop.f32.mrf.mxu0
    %v6981 = vadd.f32 0.0, %v6980
    %6982 = vmatmul.f32.gmra.mxu0 %v6583
    %v6983 = vpop.f32.mrf.mxu0
    %v6984 = vadd.f32 0.0, %v6983
    %6985 = vmatmul.f32.gmra.mxu0 %v6586
    %v6986 = vpop.f32.mrf.mxu0
    %v6987 = vadd.f32 0.0, %v6986
    %6988 = vmatmul.f32.gmra.mxu0 %v6589
    %v6989 = vpop.f32.mrf.mxu0
    %v6990 = vadd.f32 0.0, %v6989
    %6991 = vmatmul.f32.gmra.mxu0 %v6592
    %v6992 = vpop.f32.mrf.mxu0
    %v6993 = vadd.f32 0.0, %v6992
    %6994 = vmatmul.f32.gmra.mxu0 %v6595
    %v6995 = vpop.f32.mrf.mxu0
    %v6996 = vadd.f32 0.0, %v6995
    %6997 = vmatmul.f32.gmra.mxu0 %v6598
    %v6998 = vpop.f32.mrf.mxu0
    %v6999 = vadd.f32 0.0, %v6998
    %7000 = vmatmul.f32.gmra.mxu0 %v6601
    %v7001 = vpop.f32.mrf.mxu0
    %v7002 = vadd.f32 0.0, %v7001
    %7003 = vmatmul.f32.gmra.mxu0 %v6604
    %v7004 = vpop.f32.mrf.mxu0
    %v7005 = vadd.f32 0.0, %v7004
    %7006 = vmatmul.f32.gmra.mxu0 %v6607
    %v7007 = vpop.f32.mrf.mxu0
    %v7008 = vadd.f32 0.0, %v7007
    %7009 = vmatmul.f32.gmra.mxu0 %v6610
    %v7010 = vpop.f32.mrf.mxu0
    %v7011 = vadd.f32 0.0, %v7010
    %7012 = vmatmul.f32.gmra.mxu0 %v6613
    %v7013 = vpop.f32.mrf.mxu0
    %v7014 = vadd.f32 0.0, %v7013
    %7015 = vmatmul.f32.gmra.mxu0 %v6616
    %v7016 = vpop.f32.mrf.mxu0
    %v7017 = vadd.f32 0.0, %v7016
    %7018 = vmatmul.f32.gmra.mxu0 %v6619
    %v7019 = vpop.f32.mrf.mxu0
    %v7020 = vadd.f32 0.0, %v7019
    %7021 = vmatmul.f32.gmra.mxu0 %v6622
    %v7022 = vpop.f32.mrf.mxu0
    %v7023 = vadd.f32 0.0, %v7022
    %7024 = vmatmul.f32.gmra.mxu0 %v6625
    %v7025 = vpop.f32.mrf.mxu0
    %v7026 = vadd.f32 0.0, %v7025
    %7027 = vmatmul.f32.gmra.mxu0 %v6628
    %v7028 = vpop.f32.mrf.mxu0
    %v7029 = vadd.f32 0.0, %v7028
    %7030 = vmatmul.f32.gmra.mxu0 %v6631
    %v7031 = vpop.f32.mrf.mxu0
    %v7032 = vadd.f32 0.0, %v7031
    %7033 = vmatmul.f32.gmra.mxu0 %v6634
    %v7034 = vpop.f32.mrf.mxu0
    %v7035 = vadd.f32 0.0, %v7034
    %7036 = vmatmul.f32.gmra.mxu0 %v6637
    %v7037 = vpop.f32.mrf.mxu0
    %v7038 = vadd.f32 0.0, %v7037
    %7039 = vmatmul.f32.gmra.mxu0 %v6640
    %v7040 = vpop.f32.mrf.mxu0
    %v7041 = vadd.f32 0.0, %v7040
    %7042 = vmatmul.f32.gmra.mxu0 %v6643
    %v7043 = vpop.f32.mrf.mxu0
    %v7044 = vadd.f32 0.0, %v7043
    %7045 = vmatmul.f32.gmra.mxu0 %v6646
    %v7046 = vpop.f32.mrf.mxu0
    %v7047 = vadd.f32 0.0, %v7046
    %7048 = vmatmul.f32.gmra.mxu0 %v6649
    %v7049 = vpop.f32.mrf.mxu0
    %v7050 = vadd.f32 0.0, %v7049
    %7051 = vmatmul.f32.gmra.mxu0 %v6652
    %v7052 = vpop.f32.mrf.mxu0
    %v7053 = vadd.f32 0.0, %v7052
    %7054 = vmatmul.f32.gmra.mxu0 %v6655
    %v7055 = vpop.f32.mrf.mxu0
    %v7056 = vadd.f32 0.0, %v7055
    %7057 = vmatmul.f32.gmra.mxu0 %v6658
    %v7058 = vpop.f32.mrf.mxu0
    %v7059 = vadd.f32 0.0, %v7058
    %7060 = vdwg.mxu0
    %v7061 = vadd.f32 %v6004, %v6678
    %v7062 = vadd.f32 %v6005, %v6681
    %v7063 = vadd.f32 %v6006, %v6684
    %v7064 = vadd.f32 %v6007, %v6687
    %v7065 = vadd.f32 %v6008, %v6690
    %v7066 = vadd.f32 %v6009, %v6693
    %v7067 = vadd.f32 %v6010, %v6696
    %v7068 = vadd.f32 %v6011, %v6699
    %v7069 = vadd.f32 %v6012, %v6702
    %v7070 = vadd.f32 %v6013, %v6705
    %v7071 = vadd.f32 %v6014, %v6708
    %v7072 = vadd.f32 %v6015, %v6711
    %v7073 = vadd.f32 %v6016, %v6714
    %v7074 = vadd.f32 %v6017, %v6717
    %v7075 = vadd.f32 %v6018, %v6720
    %v7076 = vadd.f32 %v6019, %v6723
    %v7077 = vadd.f32 %v6020, %v6726
    %v7078 = vadd.f32 %v6021, %v6729
    %v7079 = vadd.f32 %v6022, %v6732
    %v7080 = vadd.f32 %v6023, %v6735
    %v7081 = vadd.f32 %v6024, %v6738
    %v7082 = vadd.f32 %v6025, %v6741
    %v7083 = vadd.f32 %v6026, %v6744
    %v7084 = vadd.f32 %v6027, %v6747
    %v7085 = vadd.f32 %v6028, %v6750
    %v7086 = vadd.f32 %v6029, %v6753
    %v7087 = vadd.f32 %v6030, %v6756
    %v7088 = vadd.f32 %v6031, %v6759
    %v7089 = vadd.f32 %v6032, %v6762
    %v7090 = vadd.f32 %v6033, %v6765
    %v7091 = vadd.f32 %v6034, %v6768
    %v7092 = vadd.f32 %v6035, %v6771
    %v7093 = vadd.f32 %v6036, %v6774
    %v7094 = vadd.f32 %v6037, %v6777
    %v7095 = vadd.f32 %v6038, %v6780
    %v7096 = vadd.f32 %v6039, %v6783
    %v7097 = vadd.f32 %v6040, %v6786
    %v7098 = vadd.f32 %v6041, %v6789
    %v7099 = vadd.f32 %v6042, %v6792
    %v7100 = vadd.f32 %v6043, %v6795
    %v7101 = vadd.f32 %v6044, %v6798
    %v7102 = vadd.f32 %v6045, %v6801
    %v7103 = vadd.f32 %v6046, %v6804
    %v7104 = vadd.f32 %v6047, %v6807
    %v7105 = vadd.f32 %v6048, %v6810
    %v7106 = vadd.f32 %v6049, %v6813
    %v7107 = vadd.f32 %v6050, %v6816
    %v7108 = vadd.f32 %v6051, %v6819
    %v7109 = vadd.f32 %v6052, %v6822
    %v7110 = vadd.f32 %v6053, %v6825
    %v7111 = vadd.f32 %v6054, %v6828
    %v7112 = vadd.f32 %v6055, %v6831
    %v7113 = vadd.f32 %v6056, %v6834
    %v7114 = vadd.f32 %v6057, %v6837
    %v7115 = vadd.f32 %v6058, %v6840
    %v7116 = vadd.f32 %v6059, %v6843
    %v7117 = vadd.f32 %v6060, %v6846
    %v7118 = vadd.f32 %v6061, %v6849
    %v7119 = vadd.f32 %v6062, %v6852
    %v7120 = vadd.f32 %v6063, %v6855
    %v7121 = vadd.f32 %v6064, %v6858
    %v7122 = vadd.f32 %v6065, %v6861
    %v7123 = vadd.f32 %v6066, %v6864
    %v7124 = vadd.f32 %v6067, %v6867
    %v7125 = vadd.f32 %v6068, %v6870
    %v7126 = vadd.f32 %v6069, %v6873
    %v7127 = vadd.f32 %v6070, %v6876
    %v7128 = vadd.f32 %v6071, %v6879
    %v7129 = vadd.f32 %v6072, %v6882
    %v7130 = vadd.f32 %v6073, %v6885
    %v7131 = vadd.f32 %v6074, %v6888
    %v7132 = vadd.f32 %v6075, %v6891
    %v7133 = vadd.f32 %v6076, %v6894
    %v7134 = vadd.f32 %v6077, %v6897
    %v7135 = vadd.f32 %v6078, %v6900
    %v7136 = vadd.f32 %v6079, %v6903
    %v7137 = vadd.f32 %v6080, %v6906
    %v7138 = vadd.f32 %v6081, %v6909
    %v7139 = vadd.f32 %v6082, %v6912
    %v7140 = vadd.f32 %v6083, %v6915
    %v7141 = vadd.f32 %v6084, %v6918
    %v7142 = vadd.f32 %v6085, %v6921
    %v7143 = vadd.f32 %v6086, %v6924
    %v7144 = vadd.f32 %v6087, %v6927
    %v7145 = vadd.f32 %v6088, %v6930
    %v7146 = vadd.f32 %v6089, %v6933
    %v7147 = vadd.f32 %v6090, %v6936
    %v7148 = vadd.f32 %v6091, %v6939
    %v7149 = vadd.f32 %v6092, %v6942
    %v7150 = vadd.f32 %v6093, %v6945
    %v7151 = vadd.f32 %v6094, %v6948
    %v7152 = vadd.f32 %v6095, %v6951
    %v7153 = vadd.f32 %v6096, %v6954
    %v7154 = vadd.f32 %v6097, %v6957
    %v7155 = vadd.f32 %v6098, %v6960
    %v7156 = vadd.f32 %v6099, %v6963
    %v7157 = vadd.f32 %v6100, %v6966
    %v7158 = vadd.f32 %v6101, %v6969
    %v7159 = vadd.f32 %v6102, %v6972
    %v7160 = vadd.f32 %v6103, %v6975
    %v7161 = vadd.f32 %v6104, %v6978
    %v7162 = vadd.f32 %v6105, %v6981
    %v7163 = vadd.f32 %v6106, %v6984
    %v7164 = vadd.f32 %v6107, %v6987
    %v7165 = vadd.f32 %v6108, %v6990
    %v7166 = vadd.f32 %v6109, %v6993
    %v7167 = vadd.f32 %v6110, %v6996
    %v7168 = vadd.f32 %v6111, %v6999
    %v7169 = vadd.f32 %v6112, %v7002
    %v7170 = vadd.f32 %v6113, %v7005
    %v7171 = vadd.f32 %v6114, %v7008
    %v7172 = vadd.f32 %v6115, %v7011
    %v7173 = vadd.f32 %v6116, %v7014
    %v7174 = vadd.f32 %v6117, %v7017
    %v7175 = vadd.f32 %v6118, %v7020
    %v7176 = vadd.f32 %v6119, %v7023
    %v7177 = vadd.f32 %v6120, %v7026
    %v7178 = vadd.f32 %v6121, %v7029
    %v7179 = vadd.f32 %v6122, %v7032
    %v7180 = vadd.f32 %v6123, %v7035
    %v7181 = vadd.f32 %v6124, %v7038
    %v7182 = vadd.f32 %v6125, %v7041
    %v7183 = vadd.f32 %v6126, %v7044
    %v7184 = vadd.f32 %v6127, %v7047
    %v7185 = vadd.f32 %v6128, %v7050
    %v7186 = vadd.f32 %v6129, %v7053
    %v7187 = vadd.f32 %v6130, %v7056
    %v7188 = vadd.f32 %v6131, %v7059
    %v7189 = vld [vmem:[%s2] sm:$0x1]
    %v7190 = vadd.f32 %v7189, 1.0
    %v7192 = vperm.slane %v7190, 0
    %v7194 = vadd.f32 %v7061, %v7192
    %v7195 = vadd.f32 %v7062, %v7192
    %v7196 = vadd.f32 %v7063, %v7192
    %v7197 = vadd.f32 %v7064, %v7192
    %v7198 = vadd.f32 %v7065, %v7192
    %v7199 = vadd.f32 %v7066, %v7192
    %v7200 = vadd.f32 %v7067, %v7192
    %v7201 = vadd.f32 %v7068, %v7192
    %v7202 = vadd.f32 %v7069, %v7192
    %v7203 = vadd.f32 %v7070, %v7192
    %v7204 = vadd.f32 %v7071, %v7192
    %v7205 = vadd.f32 %v7072, %v7192
    %v7206 = vadd.f32 %v7073, %v7192
    %v7207 = vadd.f32 %v7074, %v7192
    %v7208 = vadd.f32 %v7075, %v7192
    %v7209 = vadd.f32 %v7076, %v7192
    %v7210 = vadd.f32 %v7077, %v7192
    %v7211 = vadd.f32 %v7078, %v7192
    %v7212 = vadd.f32 %v7079, %v7192
    %v7213 = vadd.f32 %v7080, %v7192
    %v7214 = vadd.f32 %v7081, %v7192
    %v7215 = vadd.f32 %v7082, %v7192
    %v7216 = vadd.f32 %v7083, %v7192
    %v7217 = vadd.f32 %v7084, %v7192
    %v7218 = vadd.f32 %v7085, %v7192
    %v7219 = vadd.f32 %v7086, %v7192
    %v7220 = vadd.f32 %v7087, %v7192
    %v7221 = vadd.f32 %v7088, %v7192
    %v7222 = vadd.f32 %v7089, %v7192
    %v7223 = vadd.f32 %v7090, %v7192
    %v7224 = vadd.f32 %v7091, %v7192
    %v7225 = vadd.f32 %v7092, %v7192
    %v7226 = vadd.f32 %v7093, %v7192
    %v7227 = vadd.f32 %v7094, %v7192
    %v7228 = vadd.f32 %v7095, %v7192
    %v7229 = vadd.f32 %v7096, %v7192
    %v7230 = vadd.f32 %v7097, %v7192
    %v7231 = vadd.f32 %v7098, %v7192
    %v7232 = vadd.f32 %v7099, %v7192
    %v7233 = vadd.f32 %v7100, %v7192
    %v7234 = vadd.f32 %v7101, %v7192
    %v7235 = vadd.f32 %v7102, %v7192
    %v7236 = vadd.f32 %v7103, %v7192
    %v7237 = vadd.f32 %v7104, %v7192
    %v7238 = vadd.f32 %v7105, %v7192
    %v7239 = vadd.f32 %v7106, %v7192
    %v7240 = vadd.f32 %v7107, %v7192
    %v7241 = vadd.f32 %v7108, %v7192
    %v7242 = vadd.f32 %v7109, %v7192
    %v7243 = vadd.f32 %v7110, %v7192
    %v7244 = vadd.f32 %v7111, %v7192
    %v7245 = vadd.f32 %v7112, %v7192
    %v7246 = vadd.f32 %v7113, %v7192
    %v7247 = vadd.f32 %v7114, %v7192
    %v7248 = vadd.f32 %v7115, %v7192
    %v7249 = vadd.f32 %v7116, %v7192
    %v7250 = vadd.f32 %v7117, %v7192
    %v7251 = vadd.f32 %v7118, %v7192
    %v7252 = vadd.f32 %v7119, %v7192
    %v7253 = vadd.f32 %v7120, %v7192
    %v7254 = vadd.f32 %v7121, %v7192
    %v7255 = vadd.f32 %v7122, %v7192
    %v7256 = vadd.f32 %v7123, %v7192
    %v7257 = vadd.f32 %v7124, %v7192
    %v7258 = vadd.f32 %v7125, %v7192
    %v7259 = vadd.f32 %v7126, %v7192
    %v7260 = vadd.f32 %v7127, %v7192
    %v7261 = vadd.f32 %v7128, %v7192
    %v7262 = vadd.f32 %v7129, %v7192
    %v7263 = vadd.f32 %v7130, %v7192
    %v7264 = vadd.f32 %v7131, %v7192
    %v7265 = vadd.f32 %v7132, %v7192
    %v7266 = vadd.f32 %v7133, %v7192
    %v7267 = vadd.f32 %v7134, %v7192
    %v7268 = vadd.f32 %v7135, %v7192
    %v7269 = vadd.f32 %v7136, %v7192
    %v7270 = vadd.f32 %v7137, %v7192
    %v7271 = vadd.f32 %v7138, %v7192
    %v7272 = vadd.f32 %v7139, %v7192
    %v7273 = vadd.f32 %v7140, %v7192
    %v7274 = vadd.f32 %v7141, %v7192
    %v7275 = vadd.f32 %v7142, %v7192
    %v7276 = vadd.f32 %v7143, %v7192
    %v7277 = vadd.f32 %v7144, %v7192
    %v7278 = vadd.f32 %v7145, %v7192
    %v7279 = vadd.f32 %v7146, %v7192
    %v7280 = vadd.f32 %v7147, %v7192
    %v7281 = vadd.f32 %v7148, %v7192
    %v7282 = vadd.f32 %v7149, %v7192
    %v7283 = vadd.f32 %v7150, %v7192
    %v7284 = vadd.f32 %v7151, %v7192
    %v7285 = vadd.f32 %v7152, %v7192
    %v7286 = vadd.f32 %v7153, %v7192
    %v7287 = vadd.f32 %v7154, %v7192
    %v7288 = vadd.f32 %v7155, %v7192
    %v7289 = vadd.f32 %v7156, %v7192
    %v7290 = vadd.f32 %v7157, %v7192
    %v7291 = vadd.f32 %v7158, %v7192
    %v7292 = vadd.f32 %v7159, %v7192
    %v7293 = vadd.f32 %v7160, %v7192
    %v7294 = vadd.f32 %v7161, %v7192
    %v7295 = vadd.f32 %v7162, %v7192
    %v7296 = vadd.f32 %v7163, %v7192
    %v7297 = vadd.f32 %v7164, %v7192
    %v7298 = vadd.f32 %v7165, %v7192
    %v7299 = vadd.f32 %v7166, %v7192
    %v7300 = vadd.f32 %v7167, %v7192
    %v7301 = vadd.f32 %v7168, %v7192
    %v7302 = vadd.f32 %v7169, %v7192
    %v7303 = vadd.f32 %v7170, %v7192
    %v7304 = vadd.f32 %v7171, %v7192
    %v7305 = vadd.f32 %v7172, %v7192
    %v7306 = vadd.f32 %v7173, %v7192
    %v7307 = vadd.f32 %v7174, %v7192
    %v7308 = vadd.f32 %v7175, %v7192
    %v7309 = vadd.f32 %v7176, %v7192
    %v7310 = vadd.f32 %v7177, %v7192
    %v7311 = vadd.f32 %v7178, %v7192
    %v7312 = vadd.f32 %v7179, %v7192
    %v7313 = vadd.f32 %v7180, %v7192
    %v7314 = vadd.f32 %v7181, %v7192
    %v7315 = vadd.f32 %v7182, %v7192
    %v7316 = vadd.f32 %v7183, %v7192
    %v7317 = vadd.f32 %v7184, %v7192
    %v7318 = vadd.f32 %v7185, %v7192
    %v7319 = vadd.f32 %v7186, %v7192
    %v7320 = vadd.f32 %v7187, %v7192
    %v7321 = vadd.f32 %v7188, %v7192
    %v7322 = vmax.f32 %v7194, 0.0
    %v7323 = vmax.f32 %v7195, 0.0
    %v7324 = vmax.f32 %v7196, 0.0
    %v7325 = vmax.f32 %v7197, 0.0
    %v7326 = vmax.f32 %v7198, 0.0
    %v7327 = vmax.f32 %v7199, 0.0
    %v7328 = vmax.f32 %v7200, 0.0
    %v7329 = vmax.f32 %v7201, 0.0
    %v7330 = vmax.f32 %v7202, 0.0
    %v7331 = vmax.f32 %v7203, 0.0
    %v7332 = vmax.f32 %v7204, 0.0
    %v7333 = vmax.f32 %v7205, 0.0
    %v7334 = vmax.f32 %v7206, 0.0
    %v7335 = vmax.f32 %v7207, 0.0
    %v7336 = vmax.f32 %v7208, 0.0
    %v7337 = vmax.f32 %v7209, 0.0
    %v7338 = vmax.f32 %v7210, 0.0
    %v7339 = vmax.f32 %v7211, 0.0
    %v7340 = vmax.f32 %v7212, 0.0
    %v7341 = vmax.f32 %v7213, 0.0
    %v7342 = vmax.f32 %v7214, 0.0
    %v7343 = vmax.f32 %v7215, 0.0
    %v7344 = vmax.f32 %v7216, 0.0
    %v7345 = vmax.f32 %v7217, 0.0
    %v7346 = vmax.f32 %v7218, 0.0
    %v7347 = vmax.f32 %v7219, 0.0
    %v7348 = vmax.f32 %v7220, 0.0
    %v7349 = vmax.f32 %v7221, 0.0
    %v7350 = vmax.f32 %v7222, 0.0
    %v7351 = vmax.f32 %v7223, 0.0
    %v7352 = vmax.f32 %v7224, 0.0
    %v7353 = vmax.f32 %v7225, 0.0
    %v7354 = vmax.f32 %v7226, 0.0
    %v7355 = vmax.f32 %v7227, 0.0
    %v7356 = vmax.f32 %v7228, 0.0
    %v7357 = vmax.f32 %v7229, 0.0
    %v7358 = vmax.f32 %v7230, 0.0
    %v7359 = vmax.f32 %v7231, 0.0
    %v7360 = vmax.f32 %v7232, 0.0
    %v7361 = vmax.f32 %v7233, 0.0
    %v7362 = vmax.f32 %v7234, 0.0
    %v7363 = vmax.f32 %v7235, 0.0
    %v7364 = vmax.f32 %v7236, 0.0
    %v7365 = vmax.f32 %v7237, 0.0
    %v7366 = vmax.f32 %v7238, 0.0
    %v7367 = vmax.f32 %v7239, 0.0
    %v7368 = vmax.f32 %v7240, 0.0
    %v7369 = vmax.f32 %v7241, 0.0
    %v7370 = vmax.f32 %v7242, 0.0
    %v7371 = vmax.f32 %v7243, 0.0
    %v7372 = vmax.f32 %v7244, 0.0
    %v7373 = vmax.f32 %v7245, 0.0
    %v7374 = vmax.f32 %v7246, 0.0
    %v7375 = vmax.f32 %v7247, 0.0
    %v7376 = vmax.f32 %v7248, 0.0
    %v7377 = vmax.f32 %v7249, 0.0
    %v7378 = vmax.f32 %v7250, 0.0
    %v7379 = vmax.f32 %v7251, 0.0
    %v7380 = vmax.f32 %v7252, 0.0
    %v7381 = vmax.f32 %v7253, 0.0
    %v7382 = vmax.f32 %v7254, 0.0
    %v7383 = vmax.f32 %v7255, 0.0
    %v7384 = vmax.f32 %v7256, 0.0
    %v7385 = vmax.f32 %v7257, 0.0
    %v7386 = vmax.f32 %v7258, 0.0
    %v7387 = vmax.f32 %v7259, 0.0
    %v7388 = vmax.f32 %v7260, 0.0
    %v7389 = vmax.f32 %v7261, 0.0
    %v7390 = vmax.f32 %v7262, 0.0
    %v7391 = vmax.f32 %v7263, 0.0
    %v7392 = vmax.f32 %v7264, 0.0
    %v7393 = vmax.f32 %v7265, 0.0
    %v7394 = vmax.f32 %v7266, 0.0
    %v7395 = vmax.f32 %v7267, 0.0
    %v7396 = vmax.f32 %v7268, 0.0
    %v7397 = vmax.f32 %v7269, 0.0
    %v7398 = vmax.f32 %v7270, 0.0
    %v7399 = vmax.f32 %v7271, 0.0
    %v7400 = vmax.f32 %v7272, 0.0
    %v7401 = vmax.f32 %v7273, 0.0
    %v7402 = vmax.f32 %v7274, 0.0
    %v7403 = vmax.f32 %v7275, 0.0
    %v7404 = vmax.f32 %v7276, 0.0
    %v7405 = vmax.f32 %v7277, 0.0
    %v7406 = vmax.f32 %v7278, 0.0
    %v7407 = vmax.f32 %v7279, 0.0
    %v7408 = vmax.f32 %v7280, 0.0
    %v7409 = vmax.f32 %v7281, 0.0
    %v7410 = vmax.f32 %v7282, 0.0
    %v7411 = vmax.f32 %v7283, 0.0
    %v7412 = vmax.f32 %v7284, 0.0
    %v7413 = vmax.f32 %v7285, 0.0
    %v7414 = vmax.f32 %v7286, 0.0
    %v7415 = vmax.f32 %v7287, 0.0
    %v7416 = vmax.f32 %v7288, 0.0
    %v7417 = vmax.f32 %v7289, 0.0
    %v7418 = vmax.f32 %v7290, 0.0
    %v7419 = vmax.f32 %v7291, 0.0
    %v7420 = vmax.f32 %v7292, 0.0
    %v7421 = vmax.f32 %v7293, 0.0
    %v7422 = vmax.f32 %v7294, 0.0
    %v7423 = vmax.f32 %v7295, 0.0
    %v7424 = vmax.f32 %v7296, 0.0
    %v7425 = vmax.f32 %v7297, 0.0
    %v7426 = vmax.f32 %v7298, 0.0
    %v7427 = vmax.f32 %v7299, 0.0
    %v7428 = vmax.f32 %v7300, 0.0
    %v7429 = vmax.f32 %v7301, 0.0
    %v7430 = vmax.f32 %v7302, 0.0
    %v7431 = vmax.f32 %v7303, 0.0
    %v7432 = vmax.f32 %v7304, 0.0
    %v7433 = vmax.f32 %v7305, 0.0
    %v7434 = vmax.f32 %v7306, 0.0
    %v7435 = vmax.f32 %v7307, 0.0
    %v7436 = vmax.f32 %v7308, 0.0
    %v7437 = vmax.f32 %v7309, 0.0
    %v7438 = vmax.f32 %v7310, 0.0
    %v7439 = vmax.f32 %v7311, 0.0
    %v7440 = vmax.f32 %v7312, 0.0
    %v7441 = vmax.f32 %v7313, 0.0
    %v7442 = vmax.f32 %v7314, 0.0
    %v7443 = vmax.f32 %v7315, 0.0
    %v7444 = vmax.f32 %v7316, 0.0
    %v7445 = vmax.f32 %v7317, 0.0
    %v7446 = vmax.f32 %v7318, 0.0
    %v7447 = vmax.f32 %v7319, 0.0
    %v7448 = vmax.f32 %v7320, 0.0
    %v7449 = vmax.f32 %v7321, 0.0
    %7450 = vst [vmem:[#allocation7] sm:$0xff] %v7322
    %7451 = vst [vmem:[#allocation7 + $0x8] sm:$0xff] %v7323
    %7452 = vst [vmem:[#allocation7 + $0x10] sm:$0xff] %v7324
    %7453 = vst [vmem:[#allocation7 + $0x18] sm:$0xff] %v7325
    %7454 = vst [vmem:[#allocation7 + $0x20] sm:$0xff] %v7326
    %7455 = vst [vmem:[#allocation7 + $0x28] sm:$0xff] %v7327
    %7456 = vst [vmem:[#allocation7 + $0x30] sm:$0xff] %v7328
    %7457 = vst [vmem:[#allocation7 + $0x38] sm:$0xff] %v7329
    %7458 = vst [vmem:[#allocation7 + $0x40] sm:$0xff] %v7330
    %7459 = vst [vmem:[#allocation7 + $0x48] sm:$0xff] %v7331
    %7460 = vst [vmem:[#allocation7 + $0x50] sm:$0xff] %v7332
    %7461 = vst [vmem:[#allocation7 + $0x58] sm:$0xff] %v7333
    %7462 = vst [vmem:[#allocation7 + $0x60] sm:$0xff] %v7334
    %7463 = vst [vmem:[#allocation7 + $0x68] sm:$0xff] %v7335
    %7464 = vst [vmem:[#allocation7 + $0x70] sm:$0xff] %v7336
    %7465 = vst [vmem:[#allocation7 + $0x78] sm:$0xff] %v7337
    %7466 = vst [vmem:[#allocation7 + $0x80] sm:$0xff] %v7338
    %7467 = vst [vmem:[#allocation7 + $0x88] sm:$0xff] %v7339
    %7468 = vst [vmem:[#allocation7 + $0x90] sm:$0xff] %v7340
    %7469 = vst [vmem:[#allocation7 + $0x98] sm:$0xff] %v7341
    %7470 = vst [vmem:[#allocation7 + $0xa0] sm:$0xff] %v7342
    %7471 = vst [vmem:[#allocation7 + $0xa8] sm:$0xff] %v7343
    %7472 = vst [vmem:[#allocation7 + $0xb0] sm:$0xff] %v7344
    %7473 = vst [vmem:[#allocation7 + $0xb8] sm:$0xff] %v7345
    %7474 = vst [vmem:[#allocation7 + $0xc0] sm:$0xff] %v7346
    %7475 = vst [vmem:[#allocation7 + $0xc8] sm:$0xff] %v7347
    %7476 = vst [vmem:[#allocation7 + $0xd0] sm:$0xff] %v7348
    %7477 = vst [vmem:[#allocation7 + $0xd8] sm:$0xff] %v7349
    %7478 = vst [vmem:[#allocation7 + $0xe0] sm:$0xff] %v7350
    %7479 = vst [vmem:[#allocation7 + $0xe8] sm:$0xff] %v7351
    %7480 = vst [vmem:[#allocation7 + $0xf0] sm:$0xff] %v7352
    %7481 = vst [vmem:[#allocation7 + $0xf8] sm:$0xff] %v7353
    %7482 = vst [vmem:[#allocation7 + $0x100] sm:$0xff] %v7354
    %7483 = vst [vmem:[#allocation7 + $0x108] sm:$0xff] %v7355
    %7484 = vst [vmem:[#allocation7 + $0x110] sm:$0xff] %v7356
    %7485 = vst [vmem:[#allocation7 + $0x118] sm:$0xff] %v7357
    %7486 = vst [vmem:[#allocation7 + $0x120] sm:$0xff] %v7358
    %7487 = vst [vmem:[#allocation7 + $0x128] sm:$0xff] %v7359
    %7488 = vst [vmem:[#allocation7 + $0x130] sm:$0xff] %v7360
    %7489 = vst [vmem:[#allocation7 + $0x138] sm:$0xff] %v7361
    %7490 = vst [vmem:[#allocation7 + $0x140] sm:$0xff] %v7362
    %7491 = vst [vmem:[#allocation7 + $0x148] sm:$0xff] %v7363
    %7492 = vst [vmem:[#allocation7 + $0x150] sm:$0xff] %v7364
    %7493 = vst [vmem:[#allocation7 + $0x158] sm:$0xff] %v7365
    %7494 = vst [vmem:[#allocation7 + $0x160] sm:$0xff] %v7366
    %7495 = vst [vmem:[#allocation7 + $0x168] sm:$0xff] %v7367
    %7496 = vst [vmem:[#allocation7 + $0x170] sm:$0xff] %v7368
    %7497 = vst [vmem:[#allocation7 + $0x178] sm:$0xff] %v7369
    %7498 = vst [vmem:[#allocation7 + $0x180] sm:$0xff] %v7370
    %7499 = vst [vmem:[#allocation7 + $0x188] sm:$0xff] %v7371
    %7500 = vst [vmem:[#allocation7 + $0x190] sm:$0xff] %v7372
    %7501 = vst [vmem:[#allocation7 + $0x198] sm:$0xff] %v7373
    %7502 = vst [vmem:[#allocation7 + $0x1a0] sm:$0xff] %v7374
    %7503 = vst [vmem:[#allocation7 + $0x1a8] sm:$0xff] %v7375
    %7504 = vst [vmem:[#allocation7 + $0x1b0] sm:$0xff] %v7376
    %7505 = vst [vmem:[#allocation7 + $0x1b8] sm:$0xff] %v7377
    %7506 = vst [vmem:[#allocation7 + $0x1c0] sm:$0xff] %v7378
    %7507 = vst [vmem:[#allocation7 + $0x1c8] sm:$0xff] %v7379
    %7508 = vst [vmem:[#allocation7 + $0x1d0] sm:$0xff] %v7380
    %7509 = vst [vmem:[#allocation7 + $0x1d8] sm:$0xff] %v7381
    %7510 = vst [vmem:[#allocation7 + $0x1e0] sm:$0xff] %v7382
    %7511 = vst [vmem:[#allocation7 + $0x1e8] sm:$0xff] %v7383
    %7512 = vst [vmem:[#allocation7 + $0x1f0] sm:$0xff] %v7384
    %7513 = vst [vmem:[#allocation7 + $0x1f8] sm:$0xff] %v7385
    %7514 = vst [vmem:[#allocation7 + $0x200] sm:$0xff] %v7386
    %7515 = vst [vmem:[#allocation7 + $0x208] sm:$0xff] %v7387
    %7516 = vst [vmem:[#allocation7 + $0x210] sm:$0xff] %v7388
    %7517 = vst [vmem:[#allocation7 + $0x218] sm:$0xff] %v7389
    %7518 = vst [vmem:[#allocation7 + $0x220] sm:$0xff] %v7390
    %7519 = vst [vmem:[#allocation7 + $0x228] sm:$0xff] %v7391
    %7520 = vst [vmem:[#allocation7 + $0x230] sm:$0xff] %v7392
    %7521 = vst [vmem:[#allocation7 + $0x238] sm:$0xff] %v7393
    %7522 = vst [vmem:[#allocation7 + $0x240] sm:$0xff] %v7394
    %7523 = vst [vmem:[#allocation7 + $0x248] sm:$0xff] %v7395
    %7524 = vst [vmem:[#allocation7 + $0x250] sm:$0xff] %v7396
    %7525 = vst [vmem:[#allocation7 + $0x258] sm:$0xff] %v7397
    %7526 = vst [vmem:[#allocation7 + $0x260] sm:$0xff] %v7398
    %7527 = vst [vmem:[#allocation7 + $0x268] sm:$0xff] %v7399
    %7528 = vst [vmem:[#allocation7 + $0x270] sm:$0xff] %v7400
    %7529 = vst [vmem:[#allocation7 + $0x278] sm:$0xff] %v7401
    %7530 = vst [vmem:[#allocation7 + $0x280] sm:$0xff] %v7402
    %7531 = vst [vmem:[#allocation7 + $0x288] sm:$0xff] %v7403
    %7532 = vst [vmem:[#allocation7 + $0x290] sm:$0xff] %v7404
    %7533 = vst [vmem:[#allocation7 + $0x298] sm:$0xff] %v7405
    %7534 = vst [vmem:[#allocation7 + $0x2a0] sm:$0xff] %v7406
    %7535 = vst [vmem:[#allocation7 + $0x2a8] sm:$0xff] %v7407
    %7536 = vst [vmem:[#allocation7 + $0x2b0] sm:$0xff] %v7408
    %7537 = vst [vmem:[#allocation7 + $0x2b8] sm:$0xff] %v7409
    %7538 = vst [vmem:[#allocation7 + $0x2c0] sm:$0xff] %v7410
    %7539 = vst [vmem:[#allocation7 + $0x2c8] sm:$0xff] %v7411
    %7540 = vst [vmem:[#allocation7 + $0x2d0] sm:$0xff] %v7412
    %7541 = vst [vmem:[#allocation7 + $0x2d8] sm:$0xff] %v7413
    %7542 = vst [vmem:[#allocation7 + $0x2e0] sm:$0xff] %v7414
    %7543 = vst [vmem:[#allocation7 + $0x2e8] sm:$0xff] %v7415
    %7544 = vst [vmem:[#allocation7 + $0x2f0] sm:$0xff] %v7416
    %7545 = vst [vmem:[#allocation7 + $0x2f8] sm:$0xff] %v7417
    %7546 = vst [vmem:[#allocation7 + $0x300] sm:$0xff] %v7418
    %7547 = vst [vmem:[#allocation7 + $0x308] sm:$0xff] %v7419
    %7548 = vst [vmem:[#allocation7 + $0x310] sm:$0xff] %v7420
    %7549 = vst [vmem:[#allocation7 + $0x318] sm:$0xff] %v7421
    %7550 = vst [vmem:[#allocation7 + $0x320] sm:$0xff] %v7422
    %7551 = vst [vmem:[#allocation7 + $0x328] sm:$0xff] %v7423
    %7552 = vst [vmem:[#allocation7 + $0x330] sm:$0xff] %v7424
    %7553 = vst [vmem:[#allocation7 + $0x338] sm:$0xff] %v7425
    %7554 = vst [vmem:[#allocation7 + $0x340] sm:$0xff] %v7426
    %7555 = vst [vmem:[#allocation7 + $0x348] sm:$0xff] %v7427
    %7556 = vst [vmem:[#allocation7 + $0x350] sm:$0xff] %v7428
    %7557 = vst [vmem:[#allocation7 + $0x358] sm:$0xff] %v7429
    %7558 = vst [vmem:[#allocation7 + $0x360] sm:$0xff] %v7430
    %7559 = vst [vmem:[#allocation7 + $0x368] sm:$0xff] %v7431
    %7560 = vst [vmem:[#allocation7 + $0x370] sm:$0xff] %v7432
    %7561 = vst [vmem:[#allocation7 + $0x378] sm:$0xff] %v7433
    %7562 = vst [vmem:[#allocation7 + $0x380] sm:$0xff] %v7434
    %7563 = vst [vmem:[#allocation7 + $0x388] sm:$0xff] %v7435
    %7564 = vst [vmem:[#allocation7 + $0x390] sm:$0xff] %v7436
    %7565 = vst [vmem:[#allocation7 + $0x398] sm:$0xff] %v7437
    %7566 = vst [vmem:[#allocation7 + $0x3a0] sm:$0xff] %v7438
    %7567 = vst [vmem:[#allocation7 + $0x3a8] sm:$0xff] %v7439
    %7568 = vst [vmem:[#allocation7 + $0x3b0] sm:$0xff] %v7440
    %7569 = vst [vmem:[#allocation7 + $0x3b8] sm:$0xff] %v7441
    %7570 = vst [vmem:[#allocation7 + $0x3c0] sm:$0xff] %v7442
    %7571 = vst [vmem:[#allocation7 + $0x3c8] sm:$0xff] %v7443
    %7572 = vst [vmem:[#allocation7 + $0x3d0] sm:$0xff] %v7444
    %7573 = vst [vmem:[#allocation7 + $0x3d8] sm:$0xff] %v7445
    %7574 = vst [vmem:[#allocation7 + $0x3e0] sm:$0xff] %v7446
    %7575 = vst [vmem:[#allocation7 + $0x3e8] sm:$0xff] %v7447
    %7576 = vst [vmem:[#allocation7 + $0x3f0] sm:$0xff] %v7448
    %7577 = vst [vmem:[#allocation7 + $0x3f8] sm:$0xff] %v7449
    // Predicated region
    $region22: #{tpu_custom_call.1} parent=1 // pred_check
      _
    $region23: #{tpu_custom_call.1} parent=1 // pred_check_branch
      %7579 = sbr.rel (0) target = $region25
    $region24: #{tpu_custom_call.1} parent=1 // pred_region
      %7581 = vsyncadd [#allocation4], 0
      %s7582 = sshll.u32 [#allocation7], 4
      %s7583 = int_to_ptr.vmem [resolvable:$true] %s7582
      %s7584 = sshll.u32 %s3, 4
      %s7585 = int_to_ptr.hbm [resolvable:$true] %s7584
      %7590 = dma.vmem_to_hbm [thread:$0]  %s7583, 16384, %s7585, [#allocation4], 128, 128, 8
    $region25: #{tpu_custom_call.1} parent=1 // pred_fallthru
      _
    // Predicated region
    $region26: #{tpu_custom_call.1} parent=1 // pred_check
      _
    $region27: #{tpu_custom_call.1} parent=1 // pred_check_branch
      %7592 = sbr.rel (0) target = $region29
    $region28: #{tpu_custom_call.1} parent=1 // pred_region
      %7594 = dma.done [#allocation4], 16384
    $region29: #{tpu_custom_call.1} parent=1 // pred_fallthru
      _
    %7595 = vsyncpa [#allocation3], 1
    %7596 = vsyncpa [#allocation6], 1
    %7597 = vsyncpa [#allocation4], 1

</llo_original>
